<compile_context>
chip_gen: v7x
topology: tpu7x:2x2x1
jax: 0.10.0
libtpu: 0.0.40
codegen_flags: <defaults>
</compile_context>

<pallas_src>
import math

import jax
import jax.numpy as jnp
from jax.experimental import pallas as pl
from jax.experimental.pallas import tpu as pltpu

_SQRT_2_OVER_PI = math.sqrt(2.0 / math.pi)


def _round_up(a, b):
    return (a + b - 1) // b * b


def _pad2d(a, rows, cols):
    pr, pc = rows - a.shape[0], cols - a.shape[1]
    if pr == 0 and pc == 0:
        return a
    return jnp.pad(a, ((0, pr), (0, pc)))


def mlp_kernel(x_ref, w1_ref, b1_ref, w2_ref, b2_ref, o_ref):
    # x_ref : (tm, in_pad)        w1_ref: (in_pad, hid_pad)   b1_ref: (1, hid_pad)
    # w2_ref: (hid_pad, in_pad)   b2_ref: (1, in_pad)         o_ref : (tm, in_pad)

    # linear1: operands in their native dtype, f32 accumulation on the MXU.
    h = jnp.dot(x_ref[...], w1_ref[...], preferred_element_type=jnp.float32)
    h = h + b1_ref[...].astype(jnp.float32)

    # GELU(approximate='tanh') in f32: 0.5*x*(1 + tanh(sqrt(2/pi)*(x + 0.044715*x^3)))
    c = jnp.float32(_SQRT_2_OVER_PI)
    h = 0.5 * h * (1.0 + jnp.tanh(c * (h + jnp.float32(0.044715) * (h * h * h))))

    # Dropout(p=0) / eval mode -> identity.
    # TODO(synk): dropout with p>0 (training) would need pltpu.prng_* based masking.

    # linear2: cast activation back to the weight dtype for a native MXU dot.
    h = h.astype(w2_ref.dtype)
    o = jnp.dot(h, w2_ref[...], preferred_element_type=jnp.float32)
    o = o + b2_ref[...].astype(jnp.float32)
    o_ref[...] = o.astype(o_ref.dtype)


def mlp_pallas(x, w1, b1, w2, b2, *, tm=256):
    """x: [..., in_features]; w1: [hidden, in], b1: [hidden],
    w2: [in, hidden], b2: [in]  (PyTorch nn.Linear conventions)."""
    orig_shape = x.shape
    in_features = x.shape[-1]
    hidden = w1.shape[0]
    out_dtype = x.dtype

    # ---- glue (plain JAX): flatten rows, pre-transpose weights, pad to lane-dense,
    # ---- tile-aligned shapes.  Zero padding is exact for this MLP.
    x2d = x.reshape(-1, in_features)
    n = x2d.shape[0]

    in_pad = _round_up(in_features, 128)          # lane-dense feature dims
    hid_pad = _round_up(hidden, 128)

    pack = 32 // x2d.dtype.itemsize               # sublane packing: 8 f32 / 16 bf16
    tm_eff = min(tm, _round_up(n, pack))          # clamp tile for tiny inputs
    n_pad = _round_up(n, tm_eff)                  # pad rows instead of asserting n % tm

    x2d = _pad2d(x2d, n_pad, in_pad)
    w1t = _pad2d(jnp.transpose(w1), in_pad, hid_pad)          # (in, hidden)
    w2t = _pad2d(jnp.transpose(w2), hid_pad, in_pad)          # (hidden, in)
    b1r = _pad2d(b1.reshape(1, hidden), 1, hid_pad)
    b2r = _pad2d(b2.reshape(1, in_features), 1, in_pad)

    grid = (n_pad // tm_eff,)
    cost = pl.CostEstimate(
        flops=4 * n_pad * in_pad * hid_pad,       # two matmuls (2*M*K*N each)
        transcendentals=n_pad * hid_pad,          # one tanh per hidden activation
        bytes_accessed=int(
            x2d.size * x2d.dtype.itemsize
            + n_pad * in_pad * x2d.dtype.itemsize
            + w1t.size * w1t.dtype.itemsize
            + w2t.size * w2t.dtype.itemsize
            + b1r.size * b1r.dtype.itemsize
            + b2r.size * b2r.dtype.itemsize
        ),
    )

    def build(resident_mode):
        def resident(shape):
            # Constant index_map -> block is resident; single-buffer it when supported.
            if resident_mode is None:
                return pl.BlockSpec(shape, lambda i: (0, 0))
            return pl.BlockSpec(shape, lambda i: (0, 0), pipeline_mode=resident_mode)

        return pl.pallas_call(
            mlp_kernel,
            out_shape=jax.ShapeDtypeStruct((n_pad, in_pad), out_dtype),
            grid_spec=pltpu.PrefetchScalarGridSpec(
                num_scalar_prefetch=0,
                grid=grid,
                in_specs=[
                    pl.BlockSpec((tm_eff, in_pad), lambda i: (i, 0)),
                    resident((in_pad, hid_pad)),
                    resident((1, hid_pad)),
                    resident((hid_pad, in_pad)),
                    resident((1, in_pad)),
                ],
                out_specs=pl.BlockSpec((tm_eff, in_pad), lambda i: (i, 0)),
            ),
            compiler_params=pltpu.CompilerParams(
                dimension_semantics=("parallel",)),
            cost_estimate=cost,
        )

    args = (x2d, w1t, b1r, w2t, b2r)
    try:
        out = build(pl.Buffered(1))(*args)        # single-buffer resident weights
    except Exception:
        # Fallback for jax builds that reject pipeline_mode on pallas_call BlockSpecs.
        out = build(None)(*args)

    out = out[:n, :in_features]
    return out.reshape(orig_shape)


def mlp_reference(x, w1, b1, w2, b2):
    h = x @ w1.T + b1
    c = _SQRT_2_OVER_PI
    h = 0.5 * h * (1.0 + jnp.tanh(c * (h + 0.044715 * h ** 3)))
    return h @ w2.T + b2


def _init_params(key, in_features, hidden):
    k_w1, k_b1, k_w2, k_b2 = jax.random.split(key, 4)
    bound1 = 1.0 / math.sqrt(in_features)
    bound2 = 1.0 / math.sqrt(hidden)
    w1 = jax.random.uniform(k_w1, (hidden, in_features), jnp.float32, -bound1, bound1)
    b1 = jax.random.uniform(k_b1, (hidden,), jnp.float32, -bound1, bound1)
    w2 = jax.random.uniform(k_w2, (in_features, hidden), jnp.float32, -bound2, bound2)
    b2 = jax.random.uniform(k_b2, (in_features,), jnp.float32, -bound2, bound2)
    return w1, b1, w2, b2


if __name__ == "__main__":
    key = jax.random.PRNGKey(0)
    k1, k2, kx1, kx2 = jax.random.split(key, 4)

    # Tolerance note: both the kernel and the reference run their matmuls at the TPU's
    # default MXU precision; residual differences come from the Pallas-vs-XLA tanh
    # lowerings and MXU rounding, so the check is deliberately a bit looser than f32 eps.
    ATOL = RTOL = 2e-3

    # Case 1: lane-dense feature dims; row count (400) not a multiple of the 256 tile.
    batch, seq, in_features, hidden = 2, 200, 128, 256
    w1, b1, w2, b2 = _init_params(k1, in_features, hidden)
    x = jax.random.normal(kx1, (batch, seq, in_features), jnp.float32)
    out = jax.block_until_ready(mlp_pallas(x, w1, b1, w2, b2))
    ref = mlp_reference(x, w1, b1, w2, b2)
    assert out.shape == x.shape
    assert jnp.allclose(out, ref, atol=ATOL, rtol=RTOL), "case1 mismatch vs reference"

    # Case 2: ragged feature dims (exercise zero-padding to 128 lanes) + tiny row count.
    batch, seq, in_features, hidden = 2, 8, 96, 160
    w1, b1, w2, b2 = _init_params(k2, in_features, hidden)
    x = jax.random.normal(kx2, (batch, seq, in_features), jnp.float32)
    out = jax.block_until_ready(mlp_pallas(x, w1, b1, w2, b2))
    ref = mlp_reference(x, w1, b1, w2, b2)
    assert out.shape == x.shape
    assert jnp.allclose(out, ref, atol=ATOL, rtol=RTOL), "case2 mismatch vs reference"

    print("KERNEL_OK")
</pallas_src>

<mosaic_0001>
module attributes {stable_mosaic.version = 11 : i64} {
  func.func @mlp_kernel(%arg0: i32, %arg1: memref<256x128xf32, #tpu.memory_space<vmem>>, %arg2: memref<128x256xf32, #tpu.memory_space<vmem>>, %arg3: memref<1x256xf32, #tpu.memory_space<vmem>>, %arg4: memref<256x128xf32, #tpu.memory_space<vmem>>, %arg5: memref<1x128xf32, #tpu.memory_space<vmem>>, %arg6: memref<256x128xf32, #tpu.memory_space<vmem>>) attributes {dimension_semantics = [#tpu.dimension_semantics<parallel>], iteration_bounds = array<i64: 2>, scalar_prefetch = 0 : i64, scratch_operands = 0 : i64, tpu.core_type = #tpu.core_type<tc>, window_params = [{transform_indices = @transform_0, window_bounds = array<i64: 256, 128>}, {pipeline_mode = #tpu.pipeline_mode<synchronous>, transform_indices = @transform_1, window_bounds = array<i64: 128, 256>}, {pipeline_mode = #tpu.pipeline_mode<synchronous>, transform_indices = @transform_2, window_bounds = array<i64: 1, 256>}, {pipeline_mode = #tpu.pipeline_mode<synchronous>, transform_indices = @transform_3, window_bounds = array<i64: 256, 128>}, {pipeline_mode = #tpu.pipeline_mode<synchronous>, transform_indices = @transform_4, window_bounds = array<i64: 1, 128>}, {transform_indices = @transform_5, window_bounds = array<i64: 256, 128>}]} {
    %c0 = arith.constant 0 : index
    %c0_0 = arith.constant 0 : index
    %0 = vector.load %arg1[%c0, %c0_0] : memref<256x128xf32, #tpu.memory_space<vmem>>, vector<256x128xf32>
    %c0_1 = arith.constant 0 : index
    %c0_2 = arith.constant 0 : index
    %1 = vector.load %arg2[%c0_1, %c0_2] : memref<128x256xf32, #tpu.memory_space<vmem>>, vector<128x256xf32>
    %cst = arith.constant dense<0.000000e+00> : vector<256x256xf32>
    %2 = tpu.matmul %0, %1, %cst {dimension_numbers = #tpu.dot_dimension_numbers<[1], [0], [0], [1], [0, 0, 1, 1], [], []>} : vector<256x128xf32>, vector<128x256xf32>, vector<256x256xf32> -> vector<256x256xf32>
    %c0_3 = arith.constant 0 : index
    %c0_4 = arith.constant 0 : index
    %3 = vector.load %arg3[%c0_3, %c0_4] : memref<1x256xf32, #tpu.memory_space<vmem>>, vector<1x256xf32>
    %4 = vector.broadcast %3 : vector<1x256xf32> to vector<256x256xf32>
    %5 = arith.addf %2, %4 : vector<256x256xf32>
    %cst_5 = arith.constant 5.000000e-01 : f32
    %6 = vector.broadcast %cst_5 : f32 to vector<256x256xf32>
    %7 = arith.mulf %6, %5 : vector<256x256xf32>
    %8 = arith.mulf %5, %5 : vector<256x256xf32>
    %9 = arith.mulf %8, %5 : vector<256x256xf32>
    %cst_6 = arith.constant 4.471500e-02 : f32
    %10 = vector.broadcast %cst_6 : f32 to vector<256x256xf32>
    %11 = arith.mulf %10, %9 : vector<256x256xf32>
    %12 = arith.addf %5, %11 : vector<256x256xf32>
    %cst_7 = arith.constant 0.797884583 : f32
    %13 = vector.broadcast %cst_7 : f32 to vector<256x256xf32>
    %14 = arith.mulf %13, %12 : vector<256x256xf32>
    %15 = math.tanh %14 : vector<256x256xf32>
    %cst_8 = arith.constant 1.000000e+00 : f32
    %16 = vector.broadcast %cst_8 : f32 to vector<256x256xf32>
    %17 = arith.addf %16, %15 : vector<256x256xf32>
    %18 = arith.mulf %7, %17 : vector<256x256xf32>
    %c0_9 = arith.constant 0 : index
    %c0_10 = arith.constant 0 : index
    %19 = vector.load %arg4[%c0_9, %c0_10] : memref<256x128xf32, #tpu.memory_space<vmem>>, vector<256x128xf32>
    %cst_11 = arith.constant dense<0.000000e+00> : vector<256x128xf32>
    %20 = tpu.matmul %18, %19, %cst_11 {dimension_numbers = #tpu.dot_dimension_numbers<[1], [0], [0], [1], [0, 0, 1, 1], [], []>} : vector<256x256xf32>, vector<256x128xf32>, vector<256x128xf32> -> vector<256x128xf32>
    %c0_12 = arith.constant 0 : index
    %c0_13 = arith.constant 0 : index
    %21 = vector.load %arg5[%c0_12, %c0_13] : memref<1x128xf32, #tpu.memory_space<vmem>>, vector<1x128xf32>
    %22 = vector.broadcast %21 : vector<1x128xf32> to vector<256x128xf32>
    %23 = arith.addf %20, %22 : vector<256x128xf32>
    %c0_14 = arith.constant 0 : index
    %c0_15 = arith.constant 0 : index
    %24 = vector.load %arg6[%c0_14, %c0_15] : memref<256x128xf32, #tpu.memory_space<vmem>>, vector<256x128xf32>
    tpu.vector_store %arg6[%c0_14, %c0_15], %23 {strides = array<i32>} : memref<256x128xf32, #tpu.memory_space<vmem>>, vector<256x128xf32>,
    return
  }
  func.func @transform_0(%arg0: i32) -> (i32, i32) {
    %c0_i32 = arith.constant 0 : i32
    %c0_i32_0 = arith.constant 0 : i32
    return %arg0, %c0_i32 : i32, i32
  }
  func.func @transform_1(%arg0: i32) -> (i32, i32) {
    %c0_i32 = arith.constant 0 : i32
    %c0_i32_0 = arith.constant 0 : i32
    %c0_i32_1 = arith.constant 0 : i32
    return %c0_i32, %c0_i32_0 : i32, i32
  }
  func.func @transform_2(%arg0: i32) -> (i32, i32) {
    %c0_i32 = arith.constant 0 : i32
    %c0_i32_0 = arith.constant 0 : i32
    %c0_i32_1 = arith.constant 0 : i32
    return %c0_i32, %c0_i32_0 : i32, i32
  }
  func.func @transform_3(%arg0: i32) -> (i32, i32) {
    %c0_i32 = arith.constant 0 : i32
    %c0_i32_0 = arith.constant 0 : i32
    %c0_i32_1 = arith.constant 0 : i32
    return %c0_i32, %c0_i32_0 : i32, i32
  }
  func.func @transform_4(%arg0: i32) -> (i32, i32) {
    %c0_i32 = arith.constant 0 : i32
    %c0_i32_0 = arith.constant 0 : i32
    %c0_i32_1 = arith.constant 0 : i32
    return %c0_i32, %c0_i32_0 : i32, i32
  }
  func.func @transform_5(%arg0: i32) -> (i32, i32) {
    %c0_i32 = arith.constant 0 : i32
    %c0_i32_0 = arith.constant 0 : i32
    return %arg0, %c0_i32 : i32, i32
  }
}

module attributes {stable_mosaic.version = 11 : i64} {
  func.func @mlp_kernel(%arg0: i32, %arg1: memref<256x128xf32, #tpu.memory_space<vmem>>, %arg2: memref<128x256xf32, #tpu.memory_space<vmem>>, %arg3: memref<1x256xf32, #tpu.memory_space<vmem>>, %arg4: memref<256x128xf32, #tpu.memory_space<vmem>>, %arg5: memref<1x128xf32, #tpu.memory_space<vmem>>, %arg6: memref<256x128xf32, #tpu.memory_space<vmem>>) attributes {dimension_semantics = [#tpu.dimension_semantics<parallel>], iteration_bounds = array<i64: 2>, scalar_prefetch = 0 : i64, scratch_operands = 0 : i64, tpu.core_type = #tpu.core_type<tc>, window_params = [{transform_indices = @transform_0, window_bounds = array<i64: 256, 128>}, {pipeline_mode = #tpu.pipeline_mode<synchronous>, transform_indices = @transform_1, window_bounds = array<i64: 128, 256>}, {pipeline_mode = #tpu.pipeline_mode<synchronous>, transform_indices = @transform_2, window_bounds = array<i64: 1, 256>}, {pipeline_mode = #tpu.pipeline_mode<synchronous>, transform_indices = @transform_3, window_bounds = array<i64: 256, 128>}, {pipeline_mode = #tpu.pipeline_mode<synchronous>, transform_indices = @transform_4, window_bounds = array<i64: 1, 128>}, {transform_indices = @transform_5, window_bounds = array<i64: 256, 128>}]} {
    %c0 = arith.constant 0 : index
    %c0_0 = arith.constant 0 : index
    %0 = vector.load %arg1[%c0, %c0_0] : memref<256x128xf32, #tpu.memory_space<vmem>>, vector<256x128xf32>
    %c0_1 = arith.constant 0 : index
    %c0_2 = arith.constant 0 : index
    %1 = vector.load %arg2[%c0_1, %c0_2] : memref<128x256xf32, #tpu.memory_space<vmem>>, vector<128x256xf32>
    %cst = arith.constant dense<0.000000e+00> : vector<256x256xf32>
    %2 = tpu.matmul %0, %1, %cst {dimension_numbers = #tpu.dot_dimension_numbers<[1], [0], [0], [1], [0, 0, 1, 1], [], []>} : vector<256x128xf32>, vector<128x256xf32>, vector<256x256xf32> -> vector<256x256xf32>
    %c0_3 = arith.constant 0 : index
    %c0_4 = arith.constant 0 : index
    %3 = vector.load %arg3[%c0_3, %c0_4] : memref<1x256xf32, #tpu.memory_space<vmem>>, vector<1x256xf32>
    %4 = vector.broadcast %3 : vector<1x256xf32> to vector<256x256xf32>
    %5 = arith.addf %2, %4 : vector<256x256xf32>
    %cst_5 = arith.constant 5.000000e-01 : f32
    %6 = vector.broadcast %cst_5 : f32 to vector<256x256xf32>
    %7 = arith.mulf %6, %5 : vector<256x256xf32>
    %8 = arith.mulf %5, %5 : vector<256x256xf32>
    %9 = arith.mulf %8, %5 : vector<256x256xf32>
    %cst_6 = arith.constant 4.471500e-02 : f32
    %10 = vector.broadcast %cst_6 : f32 to vector<256x256xf32>
    %11 = arith.mulf %10, %9 : vector<256x256xf32>
    %12 = arith.addf %5, %11 : vector<256x256xf32>
    %cst_7 = arith.constant 0.797884583 : f32
    %13 = vector.broadcast %cst_7 : f32 to vector<256x256xf32>
    %14 = arith.mulf %13, %12 : vector<256x256xf32>
    %15 = math.tanh %14 : vector<256x256xf32>
    %cst_8 = arith.constant 1.000000e+00 : f32
    %16 = vector.broadcast %cst_8 : f32 to vector<256x256xf32>
    %17 = arith.addf %16, %15 : vector<256x256xf32>
    %18 = arith.mulf %7, %17 : vector<256x256xf32>
    %c0_9 = arith.constant 0 : index
    %c0_10 = arith.constant 0 : index
    %19 = vector.load %arg4[%c0_9, %c0_10] : memref<256x128xf32, #tpu.memory_space<vmem>>, vector<256x128xf32>
    %cst_11 = arith.constant dense<0.000000e+00> : vector<256x128xf32>
    %20 = tpu.matmul %18, %19, %cst_11 {dimension_numbers = #tpu.dot_dimension_numbers<[1], [0], [0], [1], [0, 0, 1, 1], [], []>} : vector<256x256xf32>, vector<256x128xf32>, vector<256x128xf32> -> vector<256x128xf32>
    %c0_12 = arith.constant 0 : index
    %c0_13 = arith.constant 0 : index
    %21 = vector.load %arg5[%c0_12, %c0_13] : memref<1x128xf32, #tpu.memory_space<vmem>>, vector<1x128xf32>
    %22 = vector.broadcast %21 : vector<1x128xf32> to vector<256x128xf32>
    %23 = arith.addf %20, %22 : vector<256x128xf32>
    %c0_14 = arith.constant 0 : index
    %c0_15 = arith.constant 0 : index
    %24 = vector.load %arg6[%c0_14, %c0_15] : memref<256x128xf32, #tpu.memory_space<vmem>>, vector<256x128xf32>
    tpu.vector_store %arg6[%c0_14, %c0_15], %23 {strides = array<i32>} : memref<256x128xf32, #tpu.memory_space<vmem>>, vector<256x128xf32>,
    return
  }
  func.func @transform_0(%arg0: i32) -> (i32, i32) {
    %c0_i32 = arith.constant 0 : i32
    %c0_i32_0 = arith.constant 0 : i32
    return %arg0, %c0_i32 : i32, i32
  }
  func.func @transform_1(%arg0: i32) -> (i32, i32) {
    %c0_i32 = arith.constant 0 : i32
    %c0_i32_0 = arith.constant 0 : i32
    %c0_i32_1 = arith.constant 0 : i32
    return %c0_i32, %c0_i32_0 : i32, i32
  }
  func.func @transform_2(%arg0: i32) -> (i32, i32) {
    %c0_i32 = arith.constant 0 : i32
    %c0_i32_0 = arith.constant 0 : i32
    %c0_i32_1 = arith.constant 0 : i32
    return %c0_i32, %c0_i32_0 : i32, i32
  }
  func.func @transform_3(%arg0: i32) -> (i32, i32) {
    %c0_i32 = arith.constant 0 : i32
    %c0_i32_0 = arith.constant 0 : i32
    %c0_i32_1 = arith.constant 0 : i32
    return %c0_i32, %c0_i32_0 : i32, i32
  }
  func.func @transform_4(%arg0: i32) -> (i32, i32) {
    %c0_i32 = arith.constant 0 : i32
    %c0_i32_0 = arith.constant 0 : i32
    %c0_i32_1 = arith.constant 0 : i32
    return %c0_i32, %c0_i32_0 : i32, i32
  }
  func.func @transform_5(%arg0: i32) -> (i32, i32) {
    %c0_i32 = arith.constant 0 : i32
    %c0_i32_0 = arith.constant 0 : i32
    return %arg0, %c0_i32 : i32, i32
  }
}

</mosaic_0001>

<llo_original>
// kernel: tpu_custom_call.1
$region0: #{tpu_custom_call.1}
  #allocation0 [shape = 'u32[]', space=smem, size = 0x4, offset = 0x4, fixed_abs, tag = 'smem constant byte address 0x4 - core index']
  #allocation1 [shape = 'u32[144,128]{1,0:T(1,128)}', space=vmem, size = 0x12000, scoped, tag = 'internal scratch']
  %s0 = inlined_call_operand.hbm [shape: f32[512,128], index: 0, kind: input, shape index: {}]
  %s1 = inlined_call_operand.hbm [shape: f32[128,256], index: 1, kind: input, shape index: {}]
  %s2 = inlined_call_operand.vmem [shape: f32[1,256], index: 2, kind: input, shape index: {}]
  %s3 = inlined_call_operand.hbm [shape: f32[256,128], index: 3, kind: input, shape index: {}]
  %s4 = inlined_call_operand.vmem [shape: f32[1,128], index: 4, kind: input, shape index: {}]
  %s5 = inlined_call_operand.hbm [shape: f32[512,128], index: 5, kind: output, shape index: {}]
  %s6 = sld [smem:[#allocation0]]
  $region65: #{tpu_custom_call.1} parent=0
    _
  %s8 = ssub.s32 1, %s6
  %s9 = scalar_select 0, %s8, %s6
  $region1: #{tpu_custom_call.1} parent=0
    #allocation2 [shape = 'u8[262144]{0}', space=vmem, size = 0x40000, scoped, tag = 'input window, operand 0']
    #allocation3 [shape = 's32[2]{0}', space=sflag, size = 0x8, scoped, tag = 'scoped memory for tpu_custom_call.1']
    #allocation4 [shape = 's32[2]{0}', space=sflag, size = 0x8, scoped, tag = 'scoped memory for tpu_custom_call.1']
    #allocation5 [shape = 'u8[131072]{0}', space=vmem, size = 0x20000, scoped, tag = 'input window, operand 1, single buffered']
    #allocation6 [shape = 's32[1]{0}', space=sflag, size = 0x4, scoped, tag = 'scoped memory for tpu_custom_call.1']
    #allocation7 [shape = 'u8[131072]{0}', space=vmem, size = 0x20000, scoped, tag = 'input window, operand 3, single buffered']
    #allocation8 [shape = 'u8[262144]{0}', space=vmem, size = 0x40000, scoped, tag = 'output window, operand 0']
    %10 = vsyncpa [#allocation3], 0
    %s11 = scalar_lea.sflag [#allocation3], 1
    %12 = vsyncpa %s11, 0
    %13 = vsyncpa [#allocation6], 0
    %14 = vsyncpa [#allocation4], 0
    %s15 = scalar_lea.sflag [#allocation4], 1
    %16 = vsyncpa %s15, 0
    loop: start=0, step=1, limit=4
    $region2: #{tpu_custom_call.1} parent=1 // loop_pre_header
      _
    $region3: #{tpu_custom_call.1} parent=1 // loop_header
      %s18 = sphi 0, %s22
      %p19 = scmp.ge.s32.totalorder %s18, 4
      %s28 = sphi 0, %s30
      %s31 = sphi 0, %s28
      %s32 = sphi 0, %s31
      %s48 = sphi 0, %s32
      %s52 = sphi 0, %s52
      %s54 = sphi 0, %s52
      %s55 = sphi 0, %s54
      %s69 = sphi 0, %s55
      %s73 = sphi 0, %s73
      %s75 = sphi 0, %s73
      %s76 = sphi 0, %s75
      %s90 = sphi 0, %s76
      %s94 = sphi 0, %s94
      %s96 = sphi 0, %s94
      %s97 = sphi 0, %s96
      %s111 = sphi 0, %s97
      %s115 = sphi 0, %s115
      %s117 = sphi 0, %s115
      %s118 = sphi 0, %s117
      %s132 = sphi 0, %s118
      %s138 = sphi 0, %s140
      %s141 = sphi 0, %s138
      %s142 = sphi 0, %s141
      %s158 = sphi 0, %s142
    $region4: #{tpu_custom_call.1} parent=1 // loop_header_branch
      %21 = sbr.rel (%p19) target = $region8
    $region5: #{tpu_custom_call.1} parent=1 // loop_body
      %s23 = ssub.s32 %s18, 1
      %s24 = ssub.s32 %s18, 2
      %s25 = sadd.s32 %s18, 1
      %s26 = ssub.s32 %s18, %s25
      %p27 = scmp.eq.s32.totalorder %s26, 0
      %s29 = sadd.s32 %s28, 1
      %s30 = scalar_select %p27, %s28, %s29
      %p33 = pneg %p27
      %p34 = scmp.eq.s32.totalorder %s18, 1
      %p35 = por %p33, %p34
      %p36 = scmp.ne.s32.totalorder %s28, %s31
      %p37 = scmp.eq.s32.totalorder %s18, 0
      %p38 = por %p36, %p37
      %p39 = scmp.ne.s32.totalorder %s28, %s31
      %p40 = scmp.eq.s32.totalorder %s23, 1
      %p41 = por %p39, %p40
      %p42 = scmp.ne.s32.totalorder %s31, %s32
      %p43 = scmp.eq.s32.totalorder %s23, 0
      %p44 = por %p42, %p43
      %p45 = scmp.ne.s32.totalorder %s31, %s32
      %p46 = scmp.eq.s32.totalorder %s24, 1
      %p47 = por %p45, %p46
      %p49 = scmp.ne.s32.totalorder %s32, %s48
      %p50 = scmp.eq.s32.totalorder %s24, 0
      %p51 = por %p49, %p50
      %s53 = sadd.s32 %s52, 1
      %p56 = scmp.eq.s32.totalorder %s18, 1
      %p57 = scmp.ne.s32.totalorder %s52, %s54
      %p58 = scmp.eq.s32.totalorder %s18, 0
      %p59 = por %p57, %p58
      %p60 = scmp.ne.s32.totalorder %s52, %s54
      %p61 = scmp.eq.s32.totalorder %s23, 1
      %p62 = por %p60, %p61
      %p63 = scmp.ne.s32.totalorder %s54, %s55
      %p64 = scmp.eq.s32.totalorder %s23, 0
      %p65 = por %p63, %p64
      %p66 = scmp.ne.s32.totalorder %s54, %s55
      %p67 = scmp.eq.s32.totalorder %s24, 1
      %p68 = por %p66, %p67
      %p70 = scmp.ne.s32.totalorder %s55, %s69
      %p71 = scmp.eq.s32.totalorder %s24, 0
      %p72 = por %p70, %p71
      %s74 = sadd.s32 %s73, 1
      %p77 = scmp.eq.s32.totalorder %s18, 1
      %p78 = scmp.ne.s32.totalorder %s73, %s75
      %p79 = scmp.eq.s32.totalorder %s18, 0
      %p80 = por %p78, %p79
      %p81 = scmp.ne.s32.totalorder %s73, %s75
      %p82 = scmp.eq.s32.totalorder %s23, 1
      %p83 = por %p81, %p82
      %p84 = scmp.ne.s32.totalorder %s75, %s76
      %p85 = scmp.eq.s32.totalorder %s23, 0
      %p86 = por %p84, %p85
      %p87 = scmp.ne.s32.totalorder %s75, %s76
      %p88 = scmp.eq.s32.totalorder %s24, 1
      %p89 = por %p87, %p88
      %p91 = scmp.ne.s32.totalorder %s76, %s90
      %p92 = scmp.eq.s32.totalorder %s24, 0
      %p93 = por %p91, %p92
      %s95 = sadd.s32 %s94, 1
      %p98 = scmp.eq.s32.totalorder %s18, 1
      %p99 = scmp.ne.s32.totalorder %s94, %s96
      %p100 = scmp.eq.s32.totalorder %s18, 0
      %p101 = por %p99, %p100
      %p102 = scmp.ne.s32.totalorder %s94, %s96
      %p103 = scmp.eq.s32.totalorder %s23, 1
      %p104 = por %p102, %p103
      %p105 = scmp.ne.s32.totalorder %s96, %s97
      %p106 = scmp.eq.s32.totalorder %s23, 0
      %p107 = por %p105, %p106
      %p108 = scmp.ne.s32.totalorder %s96, %s97
      %p109 = scmp.eq.s32.totalorder %s24, 1
      %p110 = por %p108, %p109
      %p112 = scmp.ne.s32.totalorder %s97, %s111
      %p113 = scmp.eq.s32.totalorder %s24, 0
      %p114 = por %p112, %p113
      %s116 = sadd.s32 %s115, 1
      %p119 = scmp.eq.s32.totalorder %s18, 1
      %p120 = scmp.ne.s32.totalorder %s115, %s117
      %p121 = scmp.eq.s32.totalorder %s18, 0
      %p122 = por %p120, %p121
      %p123 = scmp.ne.s32.totalorder %s115, %s117
      %p124 = scmp.eq.s32.totalorder %s23, 1
      %p125 = por %p123, %p124
      %p126 = scmp.ne.s32.totalorder %s117, %s118
      %p127 = scmp.eq.s32.totalorder %s23, 0
      %p128 = por %p126, %p127
      %p129 = scmp.ne.s32.totalorder %s117, %s118
      %p130 = scmp.eq.s32.totalorder %s24, 1
      %p131 = por %p129, %p130
      %p133 = scmp.ne.s32.totalorder %s118, %s132
      %p134 = scmp.eq.s32.totalorder %s24, 0
      %p135 = por %p133, %p134
      %s136 = ssub.s32 %s18, %s25
      %p137 = scmp.eq.s32.totalorder %s136, 0
      %s139 = sadd.s32 %s138, 1
      %s140 = scalar_select %p137, %s138, %s139
      %p143 = pneg %p137
      %p144 = scmp.eq.s32.totalorder %s18, 1
      %p145 = por %p143, %p144
      %p146 = scmp.ne.s32.totalorder %s138, %s141
      %p147 = scmp.eq.s32.totalorder %s18, 0
      %p148 = por %p146, %p147
      %p149 = scmp.ne.s32.totalorder %s138, %s141
      %p150 = scmp.eq.s32.totalorder %s23, 1
      %p151 = por %p149, %p150
      %p152 = scmp.ne.s32.totalorder %s141, %s142
      %p153 = scmp.eq.s32.totalorder %s23, 0
      %p154 = por %p152, %p153
      %p155 = scmp.ne.s32.totalorder %s141, %s142
      %p156 = scmp.eq.s32.totalorder %s24, 1
      %p157 = por %p155, %p156
      %p159 = scmp.ne.s32.totalorder %s142, %s158
      %p160 = scmp.eq.s32.totalorder %s24, 0
      %p161 = por %p159, %p160
      %p162 = scmp.le.s32.totalorder 1, %s18
      %p163 = scmp.lt.s32.totalorder %s18, 3
      %p164 = pnand %p162, %p163
      %p165 = pneg %p164
      // Predicated region
      $region9: #{tpu_custom_call.1} parent=5 // pred_check
        _
      $region10: #{tpu_custom_call.1} parent=5 // pred_check_branch
        %167 = sbr.rel (%p164) target = $region12
      $region11: #{tpu_custom_call.1} parent=5 // pred_region
        %s168 = ssub.s32 %s18, 1
        // Predicated region
        $region13: #{tpu_custom_call.1} parent=11 // pred_check
          %p169 = pneg %p65
        $region14: #{tpu_custom_call.1} parent=11 // pred_check_branch
          %171 = sbr.rel (%p169) target = $region16
        $region15: #{tpu_custom_call.1} parent=11 // pred_region
          %s173 = ssub.s32 4096, 4096
          %174 = vsyncadd [#allocation6], %s173
          %s175 = sshll.u32 [#allocation5], 4
          %s176 = int_to_ptr.vmem [resolvable:$true] %s175
          %181 = dma.hbm_to_vmem [thread:$0]  %s1, 4096, %s176, [#allocation6], 256, 256, 16
        $region16: #{tpu_custom_call.1} parent=11 // pred_fallthru
          _
        // Predicated region
        $region17: #{tpu_custom_call.1} parent=11 // pred_check
          %p182 = pneg %p86
        $region18: #{tpu_custom_call.1} parent=11 // pred_check_branch
          %184 = sbr.rel (%p182) target = $region20
        $region19: #{tpu_custom_call.1} parent=11 // pred_region
          _
        $region20: #{tpu_custom_call.1} parent=11 // pred_fallthru
          _
        // Predicated region
        $region21: #{tpu_custom_call.1} parent=11 // pred_check
          %p185 = pneg %p107
        $region22: #{tpu_custom_call.1} parent=11 // pred_check_branch
          %187 = sbr.rel (%p185) target = $region24
        $region23: #{tpu_custom_call.1} parent=11 // pred_region
          %s189 = ssub.s32 4096, 4096
          %190 = vsyncadd [#allocation6], %s189
          %s191 = sshll.u32 [#allocation7], 4
          %s192 = int_to_ptr.vmem [resolvable:$true] %s191
          %197 = dma.hbm_to_vmem [thread:$0]  %s3, 4096, %s192, [#allocation6], 128, 128, 8
        $region24: #{tpu_custom_call.1} parent=11 // pred_fallthru
          _
        // Predicated region
        $region25: #{tpu_custom_call.1} parent=11 // pred_check
          %p198 = pneg %p128
        $region26: #{tpu_custom_call.1} parent=11 // pred_check_branch
          %200 = sbr.rel (%p198) target = $region28
        $region27: #{tpu_custom_call.1} parent=11 // pred_region
          _
        $region28: #{tpu_custom_call.1} parent=11 // pred_fallthru
          _
      $region12: #{tpu_custom_call.1} parent=5 // pred_fallthru
        _
      %p201 = scmp.lt.s32.totalorder %s18, 2
      // Predicated region
      $region29: #{tpu_custom_call.1} parent=5 // pred_check
        %p202 = pneg %p201
      $region30: #{tpu_custom_call.1} parent=5 // pred_check_branch
        %204 = sbr.rel (%p202) target = $region32
      $region31: #{tpu_custom_call.1} parent=5 // pred_region
        // Predicated region
        $region33: #{tpu_custom_call.1} parent=31 // pred_check
          %p205 = pneg %p38
        $region34: #{tpu_custom_call.1} parent=31 // pred_check_branch
          %207 = sbr.rel (%p205) target = $region36
        $region35: #{tpu_custom_call.1} parent=31 // pred_region
          %s208 = sand.u32 %s28, 1
          %s209 = scalar_lea.sflag [#allocation3], %s208
          %s210 = sand.u32 %s28, 1
          %s211 = smul.addr %s210, 256
          %s212 = scalar_lea.vmem [#allocation2], %s211
          %s213 = smul.u32 32, %s18
          %s215 = ssub.s32 4096, 4096
          %216 = vsyncadd %s209, %s215
          %s217 = smul.addr %s213, 128
          %s218 = scalar_lea.hbm %s0, %s217
          %s219 = sshll.u32 %s212, 4
          %s220 = int_to_ptr.vmem [resolvable:$true] %s219
          %225 = dma.hbm_to_vmem [thread:$0]  %s218, 4096, %s220, %s209, 128, 128, 8
        $region36: #{tpu_custom_call.1} parent=31 // pred_fallthru
          _
      $region32: #{tpu_custom_call.1} parent=5 // pred_fallthru
        _
      %p226 = scmp.le.s32.totalorder 1, %s18
      %p227 = scmp.lt.s32.totalorder %s18, 3
      %p228 = pnand %p226, %p227
      %p229 = pneg %p228
      // Predicated region
      $region37: #{tpu_custom_call.1} parent=5 // pred_check
        _
      $region38: #{tpu_custom_call.1} parent=5 // pred_check_branch
        %231 = sbr.rel (%p228) target = $region40
      $region39: #{tpu_custom_call.1} parent=5 // pred_region
        %s232 = ssub.s32 %s18, 1
        %s233 = sand.u32 %s31, 1
        %s234 = scalar_lea.sflag [#allocation3], %s233
        %s235 = sand.u32 %s31, 1
        %s236 = smul.addr %s235, 256
        %s237 = scalar_lea.vmem [#allocation2], %s236
        // Predicated region
        $region41: #{tpu_custom_call.1} parent=39 // pred_check
          %p238 = pneg %p44
        $region42: #{tpu_custom_call.1} parent=39 // pred_check_branch
          %240 = sbr.rel (%p238) target = $region44
        $region43: #{tpu_custom_call.1} parent=39 // pred_region
          %241 = dma.done %s234, 4096
        $region44: #{tpu_custom_call.1} parent=39 // pred_fallthru
          _
        // Predicated region
        $region45: #{tpu_custom_call.1} parent=39 // pred_check
          %p242 = pneg %p65
        $region46: #{tpu_custom_call.1} parent=39 // pred_check_branch
          %244 = sbr.rel (%p242) target = $region48
        $region47: #{tpu_custom_call.1} parent=39 // pred_region
          %245 = dma.done [#allocation6], 4096
        $region48: #{tpu_custom_call.1} parent=39 // pred_fallthru
          _
        // Predicated region
        $region49: #{tpu_custom_call.1} parent=39 // pred_check
          %p246 = pneg %p107
        $region50: #{tpu_custom_call.1} parent=39 // pred_check_branch
          %248 = sbr.rel (%p246) target = $region52
        $region51: #{tpu_custom_call.1} parent=39 // pred_region
          %249 = dma.done [#allocation6], 4096
        $region52: #{tpu_custom_call.1} parent=39 // pred_fallthru
          _
        %s250 = sand.u32 %s31, 1
        %s251 = scalar_lea.sflag [#allocation3], %s250
        %s252 = sand.u32 %s31, 1
        %s253 = smul.addr %s252, 256
        %s254 = scalar_lea.vmem [#allocation2], %s253
        %p255 = pneg %p44
        %p256 = pneg %p41
        %p257 = pneg %p65
        %p258 = pneg %p62
        %p259 = pneg %p86
        %p260 = pneg %p83
        %p261 = pneg %p107
        %p262 = pneg %p104
        %p263 = pneg %p128
        %p264 = pneg %p125
        %p265 = pneg %p154
        %p266 = pneg %p151
        %s267 = sand.u32 %s141, 1
        %s268 = scalar_lea.sflag [#allocation4], %s267
        %s269 = sand.u32 %s141, 1
        %s270 = smul.addr %s269, 256
        %s271 = scalar_lea.vmem [#allocation8], %s270
        %s272 = smul.u32 32, %s23
        %s273 = smul.u32 32, %s23
        %v274 = vld [vmem:[%s237] sm:$0xff]
        %v275 = vld [vmem:[%s237 + $0x8] sm:$0xff]
        %v276 = vld [vmem:[%s237 + $0x10] sm:$0xff]
        %v277 = vld [vmem:[%s237 + $0x18] sm:$0xff]
        %v278 = vld [vmem:[%s237 + $0x20] sm:$0xff]
        %v279 = vld [vmem:[%s237 + $0x28] sm:$0xff]
        %v280 = vld [vmem:[%s237 + $0x30] sm:$0xff]
        %v281 = vld [vmem:[%s237 + $0x38] sm:$0xff]
        %v282 = vld [vmem:[%s237 + $0x40] sm:$0xff]
        %v283 = vld [vmem:[%s237 + $0x48] sm:$0xff]
        %v284 = vld [vmem:[%s237 + $0x50] sm:$0xff]
        %v285 = vld [vmem:[%s237 + $0x58] sm:$0xff]
        %v286 = vld [vmem:[%s237 + $0x60] sm:$0xff]
        %v287 = vld [vmem:[%s237 + $0x68] sm:$0xff]
        %v288 = vld [vmem:[%s237 + $0x70] sm:$0xff]
        %v289 = vld [vmem:[%s237 + $0x78] sm:$0xff]
        %v290 = vld [vmem:[%s237 + $0x80] sm:$0xff]
        %v291 = vld [vmem:[%s237 + $0x88] sm:$0xff]
        %v292 = vld [vmem:[%s237 + $0x90] sm:$0xff]
        %v293 = vld [vmem:[%s237 + $0x98] sm:$0xff]
        %v294 = vld [vmem:[%s237 + $0xa0] sm:$0xff]
        %v295 = vld [vmem:[%s237 + $0xa8] sm:$0xff]
        %v296 = vld [vmem:[%s237 + $0xb0] sm:$0xff]
        %v297 = vld [vmem:[%s237 + $0xb8] sm:$0xff]
        %v298 = vld [vmem:[%s237 + $0xc0] sm:$0xff]
        %v299 = vld [vmem:[%s237 + $0xc8] sm:$0xff]
        %v300 = vld [vmem:[%s237 + $0xd0] sm:$0xff]
        %v301 = vld [vmem:[%s237 + $0xd8] sm:$0xff]
        %v302 = vld [vmem:[%s237 + $0xe0] sm:$0xff]
        %v303 = vld [vmem:[%s237 + $0xe8] sm:$0xff]
        %v304 = vld [vmem:[%s237 + $0xf0] sm:$0xff]
        %v305 = vld [vmem:[%s237 + $0xf8] sm:$0xff]
        %v306 = vld [vmem:[#allocation5] sm:$0xff]
        %v307 = vld [vmem:[#allocation5 + $0x8] sm:$0xff]
        %v308 = vld [vmem:[#allocation5 + $0x10] sm:$0xff]
        %v309 = vld [vmem:[#allocation5 + $0x18] sm:$0xff]
        %v310 = vld [vmem:[#allocation5 + $0x20] sm:$0xff]
        %v311 = vld [vmem:[#allocation5 + $0x28] sm:$0xff]
        %v312 = vld [vmem:[#allocation5 + $0x30] sm:$0xff]
        %v313 = vld [vmem:[#allocation5 + $0x38] sm:$0xff]
        %v314 = vld [vmem:[#allocation5 + $0x40] sm:$0xff]
        %v315 = vld [vmem:[#allocation5 + $0x48] sm:$0xff]
        %v316 = vld [vmem:[#allocation5 + $0x50] sm:$0xff]
        %v317 = vld [vmem:[#allocation5 + $0x58] sm:$0xff]
        %v318 = vld [vmem:[#allocation5 + $0x60] sm:$0xff]
        %v319 = vld [vmem:[#allocation5 + $0x68] sm:$0xff]
        %v320 = vld [vmem:[#allocation5 + $0x70] sm:$0xff]
        %v321 = vld [vmem:[#allocation5 + $0x78] sm:$0xff]
        %v322 = vld [vmem:[#allocation5 + $0x80] sm:$0xff]
        %v323 = vld [vmem:[#allocation5 + $0x88] sm:$0xff]
        %v324 = vld [vmem:[#allocation5 + $0x90] sm:$0xff]
        %v325 = vld [vmem:[#allocation5 + $0x98] sm:$0xff]
        %v326 = vld [vmem:[#allocation5 + $0xa0] sm:$0xff]
        %v327 = vld [vmem:[#allocation5 + $0xa8] sm:$0xff]
        %v328 = vld [vmem:[#allocation5 + $0xb0] sm:$0xff]
        %v329 = vld [vmem:[#allocation5 + $0xb8] sm:$0xff]
        %v330 = vld [vmem:[#allocation5 + $0xc0] sm:$0xff]
        %v331 = vld [vmem:[#allocation5 + $0xc8] sm:$0xff]
        %v332 = vld [vmem:[#allocation5 + $0xd0] sm:$0xff]
        %v333 = vld [vmem:[#allocation5 + $0xd8] sm:$0xff]
        %v334 = vld [vmem:[#allocation5 + $0xe0] sm:$0xff]
        %v335 = vld [vmem:[#allocation5 + $0xe8] sm:$0xff]
        %v336 = vld [vmem:[#allocation5 + $0xf0] sm:$0xff]
        %v337 = vld [vmem:[#allocation5 + $0xf8] sm:$0xff]
        %v338 = vld [vmem:[%s2] sm:$0x3]
        %v340 = vlaneseq
        %v341 = vshrl.u32 %v340, 7
        %v342 = vsub.s32 0, %v341
        %v343 = vrot.slane %v338, %v342
        %v344 = vlaneseq
        %v345 = vshrl.u32 %v344, 7
        %v346 = vsub.s32 1, %v345
        %v347 = vrot.slane %v338, %v346
        %350 = vmatprep.subr.mxu0 %v307
        %351 = vmatpush1.msra.mxu0 %v306
        %352 = vmatprep.subr.mxu0 %v309
        %353 = vmatpush1.msra.mxu0 %v308
        %354 = vmatprep.subr.mxu0 %v311
        %355 = vmatpush1.msra.mxu0 %v310
        %356 = vmatprep.subr.mxu0 %v313
        %357 = vmatpush1.msra.mxu0 %v312
        %358 = vmatprep.subr.mxu0 %v315
        %359 = vmatpush1.msra.mxu0 %v314
        %360 = vmatprep.subr.mxu0 %v317
        %361 = vmatpush1.msra.mxu0 %v316
        %362 = vmatprep.subr.mxu0 %v319
        %363 = vmatpush1.msra.mxu0 %v318
        %364 = vmatprep.subr.mxu0 %v321
        %365 = vmatpush1.msra.mxu0 %v320
        %366 = vmatprep.subr.mxu0 %v323
        %367 = vmatpush1.msra.mxu0 %v322
        %368 = vmatprep.subr.mxu0 %v325
        %369 = vmatpush1.msra.mxu0 %v324
        %370 = vmatprep.subr.mxu0 %v327
        %371 = vmatpush1.msra.mxu0 %v326
        %372 = vmatprep.subr.mxu0 %v329
        %373 = vmatpush1.msra.mxu0 %v328
        %374 = vmatprep.subr.mxu0 %v331
        %375 = vmatpush1.msra.mxu0 %v330
        %376 = vmatprep.subr.mxu0 %v333
        %377 = vmatpush1.msra.mxu0 %v332
        %378 = vmatprep.subr.mxu0 %v335
        %379 = vmatpush1.msra.mxu0 %v334
        %380 = vmatprep.subr.mxu0 %v337
        %381 = vmatpush1.msra.mxu0 %v336
        %382 = vmatprep.subr.mxu0 0.0
        %383 = vmatpush1.msra.mxu0 0.0
        %384 = vmatprep.subr.mxu0 0.0
        %385 = vmatpush1.msra.mxu0 0.0
        %386 = vmatprep.subr.mxu0 0.0
        %387 = vmatpush1.msra.mxu0 0.0
        %388 = vmatprep.subr.mxu0 0.0
        %389 = vmatpush1.msra.mxu0 0.0
        %390 = vmatprep.subr.mxu0 0.0
        %391 = vmatpush1.msra.mxu0 0.0
        %392 = vmatprep.subr.mxu0 0.0
        %393 = vmatpush1.msra.mxu0 0.0
        %394 = vmatprep.subr.mxu0 0.0
        %395 = vmatpush1.msra.mxu0 0.0
        %396 = vmatprep.subr.mxu0 0.0
        %397 = vmatpush1.msra.mxu0 0.0
        %398 = vmatprep.subr.mxu0 0.0
        %399 = vmatpush1.msra.mxu0 0.0
        %400 = vmatprep.subr.mxu0 0.0
        %401 = vmatpush1.msra.mxu0 0.0
        %402 = vmatprep.subr.mxu0 0.0
        %403 = vmatpush1.msra.mxu0 0.0
        %404 = vmatprep.subr.mxu0 0.0
        %405 = vmatpush1.msra.mxu0 0.0
        %406 = vmatprep.subr.mxu0 0.0
        %407 = vmatpush1.msra.mxu0 0.0
        %408 = vmatprep.subr.mxu0 0.0
        %409 = vmatpush1.msra.mxu0 0.0
        %410 = vmatprep.subr.mxu0 0.0
        %411 = vmatpush1.msra.mxu0 0.0
        %412 = vmatprep.subr.mxu0 0.0
        %413 = vmatpush1.msra.mxu0 0.0
        %414 = vmatprep.mubr.f32.mxu0 0.0
        %415 = vmatmul.mubr.f32.gmra.mrb[0].mxu0 %v274
        %v416 = vpop.f32.mrb[0].mxu0
        %v417 = vadd.f32 %v343, %v416
        %v418 = vpop.f32.mrb[0].mxu0
        %v419 = vadd.f32 %v347, %v418
        %420 = vmatprep.mubr.f32.mxu0 0.0
        %421 = vmatmul.mubr.f32.gmra.mrb[0].mxu0 %v275
        %v422 = vpop.f32.mrb[0].mxu0
        %v423 = vadd.f32 %v343, %v422
        %v424 = vpop.f32.mrb[0].mxu0
        %v425 = vadd.f32 %v347, %v424
        %426 = vmatprep.mubr.f32.mxu0 0.0
        %427 = vmatmul.mubr.f32.gmra.mrb[0].mxu0 %v276
        %v428 = vpop.f32.mrb[0].mxu0
        %v429 = vadd.f32 %v343, %v428
        %v430 = vpop.f32.mrb[0].mxu0
        %v431 = vadd.f32 %v347, %v430
        %432 = vmatprep.mubr.f32.mxu0 0.0
        %433 = vmatmul.mubr.f32.gmra.mrb[0].mxu0 %v277
        %v434 = vpop.f32.mrb[0].mxu0
        %v435 = vadd.f32 %v343, %v434
        %v436 = vpop.f32.mrb[0].mxu0
        %v437 = vadd.f32 %v347, %v436
        %438 = vmatprep.mubr.f32.mxu0 0.0
        %439 = vmatmul.mubr.f32.gmra.mrb[0].mxu0 %v278
        %v440 = vpop.f32.mrb[0].mxu0
        %v441 = vadd.f32 %v343, %v440
        %v442 = vpop.f32.mrb[0].mxu0
        %v443 = vadd.f32 %v347, %v442
        %444 = vmatprep.mubr.f32.mxu0 0.0
        %445 = vmatmul.mubr.f32.gmra.mrb[0].mxu0 %v279
        %v446 = vpop.f32.mrb[0].mxu0
        %v447 = vadd.f32 %v343, %v446
        %v448 = vpop.f32.mrb[0].mxu0
        %v449 = vadd.f32 %v347, %v448
        %450 = vmatprep.mubr.f32.mxu0 0.0
        %451 = vmatmul.mubr.f32.gmra.mrb[0].mxu0 %v280
        %v452 = vpop.f32.mrb[0].mxu0
        %v453 = vadd.f32 %v343, %v452
        %v454 = vpop.f32.mrb[0].mxu0
        %v455 = vadd.f32 %v347, %v454
        %456 = vmatprep.mubr.f32.mxu0 0.0
        %457 = vmatmul.mubr.f32.gmra.mrb[0].mxu0 %v281
        %v458 = vpop.f32.mrb[0].mxu0
        %v459 = vadd.f32 %v343, %v458
        %v460 = vpop.f32.mrb[0].mxu0
        %v461 = vadd.f32 %v347, %v460
        %462 = vmatprep.mubr.f32.mxu0 0.0
        %463 = vmatmul.mubr.f32.gmra.mrb[0].mxu0 %v282
        %v464 = vpop.f32.mrb[0].mxu0
        %v465 = vadd.f32 %v343, %v464
        %v466 = vpop.f32.mrb[0].mxu0
        %v467 = vadd.f32 %v347, %v466
        %468 = vmatprep.mubr.f32.mxu0 0.0
        %469 = vmatmul.mubr.f32.gmra.mrb[0].mxu0 %v283
        %v470 = vpop.f32.mrb[0].mxu0
        %v471 = vadd.f32 %v343, %v470
        %v472 = vpop.f32.mrb[0].mxu0
        %v473 = vadd.f32 %v347, %v472
        %474 = vmatprep.mubr.f32.mxu0 0.0
        %475 = vmatmul.mubr.f32.gmra.mrb[0].mxu0 %v284
        %v476 = vpop.f32.mrb[0].mxu0
        %v477 = vadd.f32 %v343, %v476
        %v478 = vpop.f32.mrb[0].mxu0
        %v479 = vadd.f32 %v347, %v478
        %480 = vmatprep.mubr.f32.mxu0 0.0
        %481 = vmatmul.mubr.f32.gmra.mrb[0].mxu0 %v285
        %v482 = vpop.f32.mrb[0].mxu0
        %v483 = vadd.f32 %v343, %v482
        %v484 = vpop.f32.mrb[0].mxu0
        %v485 = vadd.f32 %v347, %v484
        %486 = vmatprep.mubr.f32.mxu0 0.0
        %487 = vmatmul.mubr.f32.gmra.mrb[0].mxu0 %v286
        %v488 = vpop.f32.mrb[0].mxu0
        %v489 = vadd.f32 %v343, %v488
        %v490 = vpop.f32.mrb[0].mxu0
        %v491 = vadd.f32 %v347, %v490
        %492 = vmatprep.mubr.f32.mxu0 0.0
        %493 = vmatmul.mubr.f32.gmra.mrb[0].mxu0 %v287
        %v494 = vpop.f32.mrb[0].mxu0
        %v495 = vadd.f32 %v343, %v494
        %v496 = vpop.f32.mrb[0].mxu0
        %v497 = vadd.f32 %v347, %v496
        %498 = vmatprep.mubr.f32.mxu0 0.0
        %499 = vmatmul.mubr.f32.gmra.mrb[0].mxu0 %v288
        %v500 = vpop.f32.mrb[0].mxu0
        %v501 = vadd.f32 %v343, %v500
        %v502 = vpop.f32.mrb[0].mxu0
        %v503 = vadd.f32 %v347, %v502
        %504 = vmatprep.mubr.f32.mxu0 0.0
        %505 = vmatmul.mubr.f32.gmra.mrb[0].mxu0 %v289
        %v506 = vpop.f32.mrb[0].mxu0
        %v507 = vadd.f32 %v343, %v506
        %v508 = vpop.f32.mrb[0].mxu0
        %v509 = vadd.f32 %v347, %v508
        %510 = vmatprep.mubr.f32.mxu0 0.0
        %511 = vmatmul.mubr.f32.gmra.mrb[0].mxu0 %v290
        %v512 = vpop.f32.mrb[0].mxu0
        %v513 = vadd.f32 %v343, %v512
        %v514 = vpop.f32.mrb[0].mxu0
        %v515 = vadd.f32 %v347, %v514
        %516 = vmatprep.mubr.f32.mxu0 0.0
        %517 = vmatmul.mubr.f32.gmra.mrb[0].mxu0 %v291
        %v518 = vpop.f32.mrb[0].mxu0
        %v519 = vadd.f32 %v343, %v518
        %v520 = vpop.f32.mrb[0].mxu0
        %v521 = vadd.f32 %v347, %v520
        %522 = vmatprep.mubr.f32.mxu0 0.0
        %523 = vmatmul.mubr.f32.gmra.mrb[0].mxu0 %v292
        %v524 = vpop.f32.mrb[0].mxu0
        %v525 = vadd.f32 %v343, %v524
        %v526 = vpop.f32.mrb[0].mxu0
        %v527 = vadd.f32 %v347, %v526
        %528 = vmatprep.mubr.f32.mxu0 0.0
        %529 = vmatmul.mubr.f32.gmra.mrb[0].mxu0 %v293
        %v530 = vpop.f32.mrb[0].mxu0
        %v531 = vadd.f32 %v343, %v530
        %v532 = vpop.f32.mrb[0].mxu0
        %v533 = vadd.f32 %v347, %v532
        %534 = vmatprep.mubr.f32.mxu0 0.0
        %535 = vmatmul.mubr.f32.gmra.mrb[0].mxu0 %v294
        %v536 = vpop.f32.mrb[0].mxu0
        %v537 = vadd.f32 %v343, %v536
        %v538 = vpop.f32.mrb[0].mxu0
        %v539 = vadd.f32 %v347, %v538
        %540 = vmatprep.mubr.f32.mxu0 0.0
        %541 = vmatmul.mubr.f32.gmra.mrb[0].mxu0 %v295
        %v542 = vpop.f32.mrb[0].mxu0
        %v543 = vadd.f32 %v343, %v542
        %v544 = vpop.f32.mrb[0].mxu0
        %v545 = vadd.f32 %v347, %v544
        %546 = vmatprep.mubr.f32.mxu0 0.0
        %547 = vmatmul.mubr.f32.gmra.mrb[0].mxu0 %v296
        %v548 = vpop.f32.mrb[0].mxu0
        %v549 = vadd.f32 %v343, %v548
        %v550 = vpop.f32.mrb[0].mxu0
        %v551 = vadd.f32 %v347, %v550
        %552 = vmatprep.mubr.f32.mxu0 0.0
        %553 = vmatmul.mubr.f32.gmra.mrb[0].mxu0 %v297
        %v554 = vpop.f32.mrb[0].mxu0
        %v555 = vadd.f32 %v343, %v554
        %v556 = vpop.f32.mrb[0].mxu0
        %v557 = vadd.f32 %v347, %v556
        %558 = vmatprep.mubr.f32.mxu0 0.0
        %559 = vmatmul.mubr.f32.gmra.mrb[0].mxu0 %v298
        %v560 = vpop.f32.mrb[0].mxu0
        %v561 = vadd.f32 %v343, %v560
        %v562 = vpop.f32.mrb[0].mxu0
        %v563 = vadd.f32 %v347, %v562
        %564 = vmatprep.mubr.f32.mxu0 0.0
        %565 = vmatmul.mubr.f32.gmra.mrb[0].mxu0 %v299
        %v566 = vpop.f32.mrb[0].mxu0
        %v567 = vadd.f32 %v343, %v566
        %v568 = vpop.f32.mrb[0].mxu0
        %v569 = vadd.f32 %v347, %v568
        %570 = vmatprep.mubr.f32.mxu0 0.0
        %571 = vmatmul.mubr.f32.gmra.mrb[0].mxu0 %v300
        %v572 = vpop.f32.mrb[0].mxu0
        %v573 = vadd.f32 %v343, %v572
        %v574 = vpop.f32.mrb[0].mxu0
        %v575 = vadd.f32 %v347, %v574
        %576 = vmatprep.mubr.f32.mxu0 0.0
        %577 = vmatmul.mubr.f32.gmra.mrb[0].mxu0 %v301
        %v578 = vpop.f32.mrb[0].mxu0
        %v579 = vadd.f32 %v343, %v578
        %v580 = vpop.f32.mrb[0].mxu0
        %v581 = vadd.f32 %v347, %v580
        %582 = vmatprep.mubr.f32.mxu0 0.0
        %583 = vmatmul.mubr.f32.gmra.mrb[0].mxu0 %v302
        %v584 = vpop.f32.mrb[0].mxu0
        %v585 = vadd.f32 %v343, %v584
        %v586 = vpop.f32.mrb[0].mxu0
        %v587 = vadd.f32 %v347, %v586
        %588 = vmatprep.mubr.f32.mxu0 0.0
        %589 = vmatmul.mubr.f32.gmra.mrb[0].mxu0 %v303
        %v590 = vpop.f32.mrb[0].mxu0
        %v591 = vadd.f32 %v343, %v590
        %v592 = vpop.f32.mrb[0].mxu0
        %v593 = vadd.f32 %v347, %v592
        %594 = vmatprep.mubr.f32.mxu0 0.0
        %595 = vmatmul.mubr.f32.gmra.mrb[0].mxu0 %v304
        %v596 = vpop.f32.mrb[0].mxu0
        %v597 = vadd.f32 %v343, %v596
        %v598 = vpop.f32.mrb[0].mxu0
        %v599 = vadd.f32 %v347, %v598
        %600 = vmatprep.mubr.f32.mxu0 0.0
        %601 = vmatmul.mubr.f32.gmra.mrb[0].mxu0 %v305
        %v602 = vpop.f32.mrb[0].mxu0
        %v603 = vadd.f32 %v343, %v602
        %v604 = vpop.f32.mrb[0].mxu0
        %v605 = vadd.f32 %v347, %v604
        %606 = vdwg.mxu0
        %v607 = vmul.f32 %v417, 0.5
        %v608 = vmul.f32 %v419, 0.5
        %v609 = vmul.f32 %v423, 0.5
        %v610 = vmul.f32 %v425, 0.5
        %v611 = vmul.f32 %v429, 0.5
        %v612 = vmul.f32 %v431, 0.5
        %v613 = vmul.f32 %v435, 0.5
        %v614 = vmul.f32 %v437, 0.5
        %v615 = vmul.f32 %v441, 0.5
        %v616 = vmul.f32 %v443, 0.5
        %v617 = vmul.f32 %v447, 0.5
        %v618 = vmul.f32 %v449, 0.5
        %v619 = vmul.f32 %v453, 0.5
        %v620 = vmul.f32 %v455, 0.5
        %v621 = vmul.f32 %v459, 0.5
        %v622 = vmul.f32 %v461, 0.5
        %v623 = vmul.f32 %v465, 0.5
        %v624 = vmul.f32 %v467, 0.5
        %v625 = vmul.f32 %v471, 0.5
        %v626 = vmul.f32 %v473, 0.5
        %v627 = vmul.f32 %v477, 0.5
        %v628 = vmul.f32 %v479, 0.5
        %v629 = vmul.f32 %v483, 0.5
        %v630 = vmul.f32 %v485, 0.5
        %v631 = vmul.f32 %v489, 0.5
        %v632 = vmul.f32 %v491, 0.5
        %v633 = vmul.f32 %v495, 0.5
        %v634 = vmul.f32 %v497, 0.5
        %v635 = vmul.f32 %v501, 0.5
        %v636 = vmul.f32 %v503, 0.5
        %v637 = vmul.f32 %v507, 0.5
        %v638 = vmul.f32 %v509, 0.5
        %v639 = vmul.f32 %v513, 0.5
        %v640 = vmul.f32 %v515, 0.5
        %v641 = vmul.f32 %v519, 0.5
        %v642 = vmul.f32 %v521, 0.5
        %v643 = vmul.f32 %v525, 0.5
        %v644 = vmul.f32 %v527, 0.5
        %v645 = vmul.f32 %v531, 0.5
        %v646 = vmul.f32 %v533, 0.5
        %v647 = vmul.f32 %v537, 0.5
        %v648 = vmul.f32 %v539, 0.5
        %v649 = vmul.f32 %v543, 0.5
        %v650 = vmul.f32 %v545, 0.5
        %v651 = vmul.f32 %v549, 0.5
        %v652 = vmul.f32 %v551, 0.5
        %v653 = vmul.f32 %v555, 0.5
        %v654 = vmul.f32 %v557, 0.5
        %v655 = vmul.f32 %v561, 0.5
        %v656 = vmul.f32 %v563, 0.5
        %v657 = vmul.f32 %v567, 0.5
        %v658 = vmul.f32 %v569, 0.5
        %v659 = vmul.f32 %v573, 0.5
        %v660 = vmul.f32 %v575, 0.5
        %v661 = vmul.f32 %v579, 0.5
        %v662 = vmul.f32 %v581, 0.5
        %v663 = vmul.f32 %v585, 0.5
        %v664 = vmul.f32 %v587, 0.5
        %v665 = vmul.f32 %v591, 0.5
        %v666 = vmul.f32 %v593, 0.5
        %v667 = vmul.f32 %v597, 0.5
        %v668 = vmul.f32 %v599, 0.5
        %v669 = vmul.f32 %v603, 0.5
        %v670 = vmul.f32 %v605, 0.5
        %v671 = vmul.f32 %v417, %v417
        %v672 = vmul.f32 %v419, %v419
        %v673 = vmul.f32 %v423, %v423
        %v674 = vmul.f32 %v425, %v425
        %v675 = vmul.f32 %v429, %v429
        %v676 = vmul.f32 %v431, %v431
        %v677 = vmul.f32 %v435, %v435
        %v678 = vmul.f32 %v437, %v437
        %v679 = vmul.f32 %v441, %v441
        %v680 = vmul.f32 %v443, %v443
        %v681 = vmul.f32 %v447, %v447
        %v682 = vmul.f32 %v449, %v449
        %v683 = vmul.f32 %v453, %v453
        %v684 = vmul.f32 %v455, %v455
        %v685 = vmul.f32 %v459, %v459
        %v686 = vmul.f32 %v461, %v461
        %v687 = vmul.f32 %v465, %v465
        %v688 = vmul.f32 %v467, %v467
        %v689 = vmul.f32 %v471, %v471
        %v690 = vmul.f32 %v473, %v473
        %v691 = vmul.f32 %v477, %v477
        %v692 = vmul.f32 %v479, %v479
        %v693 = vmul.f32 %v483, %v483
        %v694 = vmul.f32 %v485, %v485
        %v695 = vmul.f32 %v489, %v489
        %v696 = vmul.f32 %v491, %v491
        %v697 = vmul.f32 %v495, %v495
        %v698 = vmul.f32 %v497, %v497
        %v699 = vmul.f32 %v501, %v501
        %v700 = vmul.f32 %v503, %v503
        %v701 = vmul.f32 %v507, %v507
        %v702 = vmul.f32 %v509, %v509
        %v703 = vmul.f32 %v513, %v513
        %v704 = vmul.f32 %v515, %v515
        %v705 = vmul.f32 %v519, %v519
        %v706 = vmul.f32 %v521, %v521
        %v707 = vmul.f32 %v525, %v525
        %v708 = vmul.f32 %v527, %v527
        %v709 = vmul.f32 %v531, %v531
        %v710 = vmul.f32 %v533, %v533
        %v711 = vmul.f32 %v537, %v537
        %v712 = vmul.f32 %v539, %v539
        %v713 = vmul.f32 %v543, %v543
        %v714 = vmul.f32 %v545, %v545
        %v715 = vmul.f32 %v549, %v549
        %v716 = vmul.f32 %v551, %v551
        %v717 = vmul.f32 %v555, %v555
        %v718 = vmul.f32 %v557, %v557
        %v719 = vmul.f32 %v561, %v561
        %v720 = vmul.f32 %v563, %v563
        %v721 = vmul.f32 %v567, %v567
        %v722 = vmul.f32 %v569, %v569
        %v723 = vmul.f32 %v573, %v573
        %v724 = vmul.f32 %v575, %v575
        %v725 = vmul.f32 %v579, %v579
        %v726 = vmul.f32 %v581, %v581
        %v727 = vmul.f32 %v585, %v585
        %v728 = vmul.f32 %v587, %v587
        %v729 = vmul.f32 %v591, %v591
        %v730 = vmul.f32 %v593, %v593
        %v731 = vmul.f32 %v597, %v597
        %v732 = vmul.f32 %v599, %v599
        %v733 = vmul.f32 %v603, %v603
        %v734 = vmul.f32 %v605, %v605
        %v735 = vmul.f32 %v671, %v417
        %v736 = vmul.f32 %v672, %v419
        %v737 = vmul.f32 %v673, %v423
        %v738 = vmul.f32 %v674, %v425
        %v739 = vmul.f32 %v675, %v429
        %v740 = vmul.f32 %v676, %v431
        %v741 = vmul.f32 %v677, %v435
        %v742 = vmul.f32 %v678, %v437
        %v743 = vmul.f32 %v679, %v441
        %v744 = vmul.f32 %v680, %v443
        %v745 = vmul.f32 %v681, %v447
        %v746 = vmul.f32 %v682, %v449
        %v747 = vmul.f32 %v683, %v453
        %v748 = vmul.f32 %v684, %v455
        %v749 = vmul.f32 %v685, %v459
        %v750 = vmul.f32 %v686, %v461
        %v751 = vmul.f32 %v687, %v465
        %v752 = vmul.f32 %v688, %v467
        %v753 = vmul.f32 %v689, %v471
        %v754 = vmul.f32 %v690, %v473
        %v755 = vmul.f32 %v691, %v477
        %v756 = vmul.f32 %v692, %v479
        %v757 = vmul.f32 %v693, %v483
        %v758 = vmul.f32 %v694, %v485
        %v759 = vmul.f32 %v695, %v489
        %v760 = vmul.f32 %v696, %v491
        %v761 = vmul.f32 %v697, %v495
        %v762 = vmul.f32 %v698, %v497
        %v763 = vmul.f32 %v699, %v501
        %v764 = vmul.f32 %v700, %v503
        %v765 = vmul.f32 %v701, %v507
        %v766 = vmul.f32 %v702, %v509
        %v767 = vmul.f32 %v703, %v513
        %v768 = vmul.f32 %v704, %v515
        %v769 = vmul.f32 %v705, %v519
        %v770 = vmul.f32 %v706, %v521
        %v771 = vmul.f32 %v707, %v525
        %v772 = vmul.f32 %v708, %v527
        %v773 = vmul.f32 %v709, %v531
        %v774 = vmul.f32 %v710, %v533
        %v775 = vmul.f32 %v711, %v537
        %v776 = vmul.f32 %v712, %v539
        %v777 = vmul.f32 %v713, %v543
        %v778 = vmul.f32 %v714, %v545
        %v779 = vmul.f32 %v715, %v549
        %v780 = vmul.f32 %v716, %v551
        %v781 = vmul.f32 %v717, %v555
        %v782 = vmul.f32 %v718, %v557
        %v783 = vmul.f32 %v719, %v561
        %v784 = vmul.f32 %v720, %v563
        %v785 = vmul.f32 %v721, %v567
        %v786 = vmul.f32 %v722, %v569
        %v787 = vmul.f32 %v723, %v573
        %v788 = vmul.f32 %v724, %v575
        %v789 = vmul.f32 %v725, %v579
        %v790 = vmul.f32 %v726, %v581
        %v791 = vmul.f32 %v727, %v585
        %v792 = vmul.f32 %v728, %v587
        %v793 = vmul.f32 %v729, %v591
        %v794 = vmul.f32 %v730, %v593
        %v795 = vmul.f32 %v731, %v597
        %v796 = vmul.f32 %v732, %v599
        %v797 = vmul.f32 %v733, %v603
        %v798 = vmul.f32 %v734, %v605
        %v799 = vmul.f32 %v735, 0.044715
        %v800 = vmul.f32 %v736, 0.044715
        %v801 = vmul.f32 %v737, 0.044715
        %v802 = vmul.f32 %v738, 0.044715
        %v803 = vmul.f32 %v739, 0.044715
        %v804 = vmul.f32 %v740, 0.044715
        %v805 = vmul.f32 %v741, 0.044715
        %v806 = vmul.f32 %v742, 0.044715
        %v807 = vmul.f32 %v743, 0.044715
        %v808 = vmul.f32 %v744, 0.044715
        %v809 = vmul.f32 %v745, 0.044715
        %v810 = vmul.f32 %v746, 0.044715
        %v811 = vmul.f32 %v747, 0.044715
        %v812 = vmul.f32 %v748, 0.044715
        %v813 = vmul.f32 %v749, 0.044715
        %v814 = vmul.f32 %v750, 0.044715
        %v815 = vmul.f32 %v751, 0.044715
        %v816 = vmul.f32 %v752, 0.044715
        %v817 = vmul.f32 %v753, 0.044715
        %v818 = vmul.f32 %v754, 0.044715
        %v819 = vmul.f32 %v755, 0.044715
        %v820 = vmul.f32 %v756, 0.044715
        %v821 = vmul.f32 %v757, 0.044715
        %v822 = vmul.f32 %v758, 0.044715
        %v823 = vmul.f32 %v759, 0.044715
        %v824 = vmul.f32 %v760, 0.044715
        %v825 = vmul.f32 %v761, 0.044715
        %v826 = vmul.f32 %v762, 0.044715
        %v827 = vmul.f32 %v763, 0.044715
        %v828 = vmul.f32 %v764, 0.044715
        %v829 = vmul.f32 %v765, 0.044715
        %v830 = vmul.f32 %v766, 0.044715
        %v831 = vmul.f32 %v767, 0.044715
        %v832 = vmul.f32 %v768, 0.044715
        %v833 = vmul.f32 %v769, 0.044715
        %v834 = vmul.f32 %v770, 0.044715
        %v835 = vmul.f32 %v771, 0.044715
        %v836 = vmul.f32 %v772, 0.044715
        %v837 = vmul.f32 %v773, 0.044715
        %v838 = vmul.f32 %v774, 0.044715
        %v839 = vmul.f32 %v775, 0.044715
        %v840 = vmul.f32 %v776, 0.044715
        %v841 = vmul.f32 %v777, 0.044715
        %v842 = vmul.f32 %v778, 0.044715
        %v843 = vmul.f32 %v779, 0.044715
        %v844 = vmul.f32 %v780, 0.044715
        %v845 = vmul.f32 %v781, 0.044715
        %v846 = vmul.f32 %v782, 0.044715
        %v847 = vmul.f32 %v783, 0.044715
        %v848 = vmul.f32 %v784, 0.044715
        %v849 = vmul.f32 %v785, 0.044715
        %v850 = vmul.f32 %v786, 0.044715
        %v851 = vmul.f32 %v787, 0.044715
        %v852 = vmul.f32 %v788, 0.044715
        %v853 = vmul.f32 %v789, 0.044715
        %v854 = vmul.f32 %v790, 0.044715
        %v855 = vmul.f32 %v791, 0.044715
        %v856 = vmul.f32 %v792, 0.044715
        %v857 = vmul.f32 %v793, 0.044715
        %v858 = vmul.f32 %v794, 0.044715
        %v859 = vmul.f32 %v795, 0.044715
        %v860 = vmul.f32 %v796, 0.044715
        %v861 = vmul.f32 %v797, 0.044715
        %v862 = vmul.f32 %v798, 0.044715
        %v863 = vadd.f32 %v417, %v799
        %v864 = vadd.f32 %v419, %v800
        %v865 = vadd.f32 %v423, %v801
        %v866 = vadd.f32 %v425, %v802
        %v867 = vadd.f32 %v429, %v803
        %v868 = vadd.f32 %v431, %v804
        %v869 = vadd.f32 %v435, %v805
        %v870 = vadd.f32 %v437, %v806
        %v871 = vadd.f32 %v441, %v807
        %v872 = vadd.f32 %v443, %v808
        %v873 = vadd.f32 %v447, %v809
        %v874 = vadd.f32 %v449, %v810
        %v875 = vadd.f32 %v453, %v811
        %v876 = vadd.f32 %v455, %v812
        %v877 = vadd.f32 %v459, %v813
        %v878 = vadd.f32 %v461, %v814
        %v879 = vadd.f32 %v465, %v815
        %v880 = vadd.f32 %v467, %v816
        %v881 = vadd.f32 %v471, %v817
        %v882 = vadd.f32 %v473, %v818
        %v883 = vadd.f32 %v477, %v819
        %v884 = vadd.f32 %v479, %v820
        %v885 = vadd.f32 %v483, %v821
        %v886 = vadd.f32 %v485, %v822
        %v887 = vadd.f32 %v489, %v823
        %v888 = vadd.f32 %v491, %v824
        %v889 = vadd.f32 %v495, %v825
        %v890 = vadd.f32 %v497, %v826
        %v891 = vadd.f32 %v501, %v827
        %v892 = vadd.f32 %v503, %v828
        %v893 = vadd.f32 %v507, %v829
        %v894 = vadd.f32 %v509, %v830
        %v895 = vadd.f32 %v513, %v831
        %v896 = vadd.f32 %v515, %v832
        %v897 = vadd.f32 %v519, %v833
        %v898 = vadd.f32 %v521, %v834
        %v899 = vadd.f32 %v525, %v835
        %v900 = vadd.f32 %v527, %v836
        %v901 = vadd.f32 %v531, %v837
        %v902 = vadd.f32 %v533, %v838
        %v903 = vadd.f32 %v537, %v839
        %v904 = vadd.f32 %v539, %v840
        %v905 = vadd.f32 %v543, %v841
        %v906 = vadd.f32 %v545, %v842
        %v907 = vadd.f32 %v549, %v843
        %v908 = vadd.f32 %v551, %v844
        %v909 = vadd.f32 %v555, %v845
        %v910 = vadd.f32 %v557, %v846
        %v911 = vadd.f32 %v561, %v847
        %v912 = vadd.f32 %v563, %v848
        %v913 = vadd.f32 %v567, %v849
        %v914 = vadd.f32 %v569, %v850
        %v915 = vadd.f32 %v573, %v851
        %v916 = vadd.f32 %v575, %v852
        %v917 = vadd.f32 %v579, %v853
        %v918 = vadd.f32 %v581, %v854
        %v919 = vadd.f32 %v585, %v855
        %v920 = vadd.f32 %v587, %v856
        %v921 = vadd.f32 %v591, %v857
        %v922 = vadd.f32 %v593, %v858
        %v923 = vadd.f32 %v597, %v859
        %v924 = vadd.f32 %v599, %v860
        %v925 = vadd.f32 %v603, %v861
        %v926 = vadd.f32 %v605, %v862
        %v927 = vmul.f32 %v863, 0.7978846
        %v928 = vmul.f32 %v864, 0.7978846
        %v929 = vmul.f32 %v865, 0.7978846
        %v930 = vmul.f32 %v866, 0.7978846
        %v931 = vmul.f32 %v867, 0.7978846
        %v932 = vmul.f32 %v868, 0.7978846
        %v933 = vmul.f32 %v869, 0.7978846
        %v934 = vmul.f32 %v870, 0.7978846
        %v935 = vmul.f32 %v871, 0.7978846
        %v936 = vmul.f32 %v872, 0.7978846
        %v937 = vmul.f32 %v873, 0.7978846
        %v938 = vmul.f32 %v874, 0.7978846
        %v939 = vmul.f32 %v875, 0.7978846
        %v940 = vmul.f32 %v876, 0.7978846
        %v941 = vmul.f32 %v877, 0.7978846
        %v942 = vmul.f32 %v878, 0.7978846
        %v943 = vmul.f32 %v879, 0.7978846
        %v944 = vmul.f32 %v880, 0.7978846
        %v945 = vmul.f32 %v881, 0.7978846
        %v946 = vmul.f32 %v882, 0.7978846
        %v947 = vmul.f32 %v883, 0.7978846
        %v948 = vmul.f32 %v884, 0.7978846
        %v949 = vmul.f32 %v885, 0.7978846
        %v950 = vmul.f32 %v886, 0.7978846
        %v951 = vmul.f32 %v887, 0.7978846
        %v952 = vmul.f32 %v888, 0.7978846
        %v953 = vmul.f32 %v889, 0.7978846
        %v954 = vmul.f32 %v890, 0.7978846
        %v955 = vmul.f32 %v891, 0.7978846
        %v956 = vmul.f32 %v892, 0.7978846
        %v957 = vmul.f32 %v893, 0.7978846
        %v958 = vmul.f32 %v894, 0.7978846
        %v959 = vmul.f32 %v895, 0.7978846
        %v960 = vmul.f32 %v896, 0.7978846
        %v961 = vmul.f32 %v897, 0.7978846
        %v962 = vmul.f32 %v898, 0.7978846
        %v963 = vmul.f32 %v899, 0.7978846
        %v964 = vmul.f32 %v900, 0.7978846
        %v965 = vmul.f32 %v901, 0.7978846
        %v966 = vmul.f32 %v902, 0.7978846
        %v967 = vmul.f32 %v903, 0.7978846
        %v968 = vmul.f32 %v904, 0.7978846
        %v969 = vmul.f32 %v905, 0.7978846
        %v970 = vmul.f32 %v906, 0.7978846
        %v971 = vmul.f32 %v907, 0.7978846
        %v972 = vmul.f32 %v908, 0.7978846
        %v973 = vmul.f32 %v909, 0.7978846
        %v974 = vmul.f32 %v910, 0.7978846
        %v975 = vmul.f32 %v911, 0.7978846
        %v976 = vmul.f32 %v912, 0.7978846
        %v977 = vmul.f32 %v913, 0.7978846
        %v978 = vmul.f32 %v914, 0.7978846
        %v979 = vmul.f32 %v915, 0.7978846
        %v980 = vmul.f32 %v916, 0.7978846
        %v981 = vmul.f32 %v917, 0.7978846
        %v982 = vmul.f32 %v918, 0.7978846
        %v983 = vmul.f32 %v919, 0.7978846
        %v984 = vmul.f32 %v920, 0.7978846
        %v985 = vmul.f32 %v921, 0.7978846
        %v986 = vmul.f32 %v922, 0.7978846
        %v987 = vmul.f32 %v923, 0.7978846
        %v988 = vmul.f32 %v924, 0.7978846
        %v989 = vmul.f32 %v925, 0.7978846
        %v990 = vmul.f32 %v926, 0.7978846
        %v991 = vtanh.pop %v927
        %v992 = vtanh.pop %v928
        %v993 = vtanh.pop %v929
        %v994 = vtanh.pop %v930
        %v995 = vtanh.pop %v931
        %v996 = vtanh.pop %v932
        %v997 = vtanh.pop %v933
        %v998 = vtanh.pop %v934
        %v999 = vtanh.pop %v935
        %v1000 = vtanh.pop %v936
        %v1001 = vtanh.pop %v937
        %v1002 = vtanh.pop %v938
        %v1003 = vtanh.pop %v939
        %v1004 = vtanh.pop %v940
        %v1005 = vtanh.pop %v941
        %v1006 = vtanh.pop %v942
        %v1007 = vtanh.pop %v943
        %v1008 = vtanh.pop %v944
        %v1009 = vtanh.pop %v945
        %v1010 = vtanh.pop %v946
        %v1011 = vtanh.pop %v947
        %v1012 = vtanh.pop %v948
        %v1013 = vtanh.pop %v949
        %v1014 = vtanh.pop %v950
        %v1015 = vtanh.pop %v951
        %v1016 = vtanh.pop %v952
        %v1017 = vtanh.pop %v953
        %v1018 = vtanh.pop %v954
        %v1019 = vtanh.pop %v955
        %v1020 = vtanh.pop %v956
        %v1021 = vtanh.pop %v957
        %v1022 = vtanh.pop %v958
        %v1023 = vtanh.pop %v959
        %v1024 = vtanh.pop %v960
        %v1025 = vtanh.pop %v961
        %v1026 = vtanh.pop %v962
        %v1027 = vtanh.pop %v963
        %v1028 = vtanh.pop %v964
        %v1029 = vtanh.pop %v965
        %v1030 = vtanh.pop %v966
        %v1031 = vtanh.pop %v967
        %v1032 = vtanh.pop %v968
        %v1033 = vtanh.pop %v969
        %v1034 = vtanh.pop %v970
        %v1035 = vtanh.pop %v971
        %v1036 = vtanh.pop %v972
        %v1037 = vtanh.pop %v973
        %v1038 = vtanh.pop %v974
        %v1039 = vtanh.pop %v975
        %v1040 = vtanh.pop %v976
        %v1041 = vtanh.pop %v977
        %v1042 = vtanh.pop %v978
        %v1043 = vtanh.pop %v979
        %v1044 = vtanh.pop %v980
        %v1045 = vtanh.pop %v981
        %v1046 = vtanh.pop %v982
        %v1047 = vtanh.pop %v983
        %v1048 = vtanh.pop %v984
        %v1049 = vtanh.pop %v985
        %v1050 = vtanh.pop %v986
        %v1051 = vtanh.pop %v987
        %v1052 = vtanh.pop %v988
        %v1053 = vtanh.pop %v989
        %v1054 = vtanh.pop %v990
        %v1055 = vadd.f32 %v991, 1.0
        %v1056 = vadd.f32 %v992, 1.0
        %v1057 = vadd.f32 %v993, 1.0
        %v1058 = vadd.f32 %v994, 1.0
        %v1059 = vadd.f32 %v995, 1.0
        %v1060 = vadd.f32 %v996, 1.0
        %v1061 = vadd.f32 %v997, 1.0
        %v1062 = vadd.f32 %v998, 1.0
        %v1063 = vadd.f32 %v999, 1.0
        %v1064 = vadd.f32 %v1000, 1.0
        %v1065 = vadd.f32 %v1001, 1.0
        %v1066 = vadd.f32 %v1002, 1.0
        %v1067 = vadd.f32 %v1003, 1.0
        %v1068 = vadd.f32 %v1004, 1.0
        %v1069 = vadd.f32 %v1005, 1.0
        %v1070 = vadd.f32 %v1006, 1.0
        %v1071 = vadd.f32 %v1007, 1.0
        %v1072 = vadd.f32 %v1008, 1.0
        %v1073 = vadd.f32 %v1009, 1.0
        %v1074 = vadd.f32 %v1010, 1.0
        %v1075 = vadd.f32 %v1011, 1.0
        %v1076 = vadd.f32 %v1012, 1.0
        %v1077 = vadd.f32 %v1013, 1.0
        %v1078 = vadd.f32 %v1014, 1.0
        %v1079 = vadd.f32 %v1015, 1.0
        %v1080 = vadd.f32 %v1016, 1.0
        %v1081 = vadd.f32 %v1017, 1.0
        %v1082 = vadd.f32 %v1018, 1.0
        %v1083 = vadd.f32 %v1019, 1.0
        %v1084 = vadd.f32 %v1020, 1.0
        %v1085 = vadd.f32 %v1021, 1.0
        %v1086 = vadd.f32 %v1022, 1.0
        %v1087 = vadd.f32 %v1023, 1.0
        %v1088 = vadd.f32 %v1024, 1.0
        %v1089 = vadd.f32 %v1025, 1.0
        %v1090 = vadd.f32 %v1026, 1.0
        %v1091 = vadd.f32 %v1027, 1.0
        %v1092 = vadd.f32 %v1028, 1.0
        %v1093 = vadd.f32 %v1029, 1.0
        %v1094 = vadd.f32 %v1030, 1.0
        %v1095 = vadd.f32 %v1031, 1.0
        %v1096 = vadd.f32 %v1032, 1.0
        %v1097 = vadd.f32 %v1033, 1.0
        %v1098 = vadd.f32 %v1034, 1.0
        %v1099 = vadd.f32 %v1035, 1.0
        %v1100 = vadd.f32 %v1036, 1.0
        %v1101 = vadd.f32 %v1037, 1.0
        %v1102 = vadd.f32 %v1038, 1.0
        %v1103 = vadd.f32 %v1039, 1.0
        %v1104 = vadd.f32 %v1040, 1.0
        %v1105 = vadd.f32 %v1041, 1.0
        %v1106 = vadd.f32 %v1042, 1.0
        %v1107 = vadd.f32 %v1043, 1.0
        %v1108 = vadd.f32 %v1044, 1.0
        %v1109 = vadd.f32 %v1045, 1.0
        %v1110 = vadd.f32 %v1046, 1.0
        %v1111 = vadd.f32 %v1047, 1.0
        %v1112 = vadd.f32 %v1048, 1.0
        %v1113 = vadd.f32 %v1049, 1.0
        %v1114 = vadd.f32 %v1050, 1.0
        %v1115 = vadd.f32 %v1051, 1.0
        %v1116 = vadd.f32 %v1052, 1.0
        %v1117 = vadd.f32 %v1053, 1.0
        %v1118 = vadd.f32 %v1054, 1.0
        %v1119 = vmul.f32 %v607, %v1055
        %v1120 = vmul.f32 %v608, %v1056
        %v1121 = vmul.f32 %v609, %v1057
        %v1122 = vmul.f32 %v610, %v1058
        %v1123 = vmul.f32 %v611, %v1059
        %v1124 = vmul.f32 %v612, %v1060
        %v1125 = vmul.f32 %v613, %v1061
        %v1126 = vmul.f32 %v614, %v1062
        %v1127 = vmul.f32 %v615, %v1063
        %v1128 = vmul.f32 %v616, %v1064
        %v1129 = vmul.f32 %v617, %v1065
        %v1130 = vmul.f32 %v618, %v1066
        %v1131 = vmul.f32 %v619, %v1067
        %v1132 = vmul.f32 %v620, %v1068
        %v1133 = vmul.f32 %v621, %v1069
        %v1134 = vmul.f32 %v622, %v1070
        %v1135 = vmul.f32 %v623, %v1071
        %v1136 = vmul.f32 %v624, %v1072
        %v1137 = vmul.f32 %v625, %v1073
        %v1138 = vmul.f32 %v626, %v1074
        %v1139 = vmul.f32 %v627, %v1075
        %v1140 = vmul.f32 %v628, %v1076
        %v1141 = vmul.f32 %v629, %v1077
        %v1142 = vmul.f32 %v630, %v1078
        %v1143 = vmul.f32 %v631, %v1079
        %v1144 = vmul.f32 %v632, %v1080
        %v1145 = vmul.f32 %v633, %v1081
        %v1146 = vmul.f32 %v634, %v1082
        %v1147 = vmul.f32 %v635, %v1083
        %v1148 = vmul.f32 %v636, %v1084
        %v1149 = vmul.f32 %v637, %v1085
        %v1150 = vmul.f32 %v638, %v1086
        %v1151 = vmul.f32 %v639, %v1087
        %v1152 = vmul.f32 %v640, %v1088
        %v1153 = vmul.f32 %v641, %v1089
        %v1154 = vmul.f32 %v642, %v1090
        %v1155 = vmul.f32 %v643, %v1091
        %v1156 = vmul.f32 %v644, %v1092
        %v1157 = vmul.f32 %v645, %v1093
        %v1158 = vmul.f32 %v646, %v1094
        %v1159 = vmul.f32 %v647, %v1095
        %v1160 = vmul.f32 %v648, %v1096
        %v1161 = vmul.f32 %v649, %v1097
        %v1162 = vmul.f32 %v650, %v1098
        %v1163 = vmul.f32 %v651, %v1099
        %v1164 = vmul.f32 %v652, %v1100
        %v1165 = vmul.f32 %v653, %v1101
        %v1166 = vmul.f32 %v654, %v1102
        %v1167 = vmul.f32 %v655, %v1103
        %v1168 = vmul.f32 %v656, %v1104
        %v1169 = vmul.f32 %v657, %v1105
        %v1170 = vmul.f32 %v658, %v1106
        %v1171 = vmul.f32 %v659, %v1107
        %v1172 = vmul.f32 %v660, %v1108
        %v1173 = vmul.f32 %v661, %v1109
        %v1174 = vmul.f32 %v662, %v1110
        %v1175 = vmul.f32 %v663, %v1111
        %v1176 = vmul.f32 %v664, %v1112
        %v1177 = vmul.f32 %v665, %v1113
        %v1178 = vmul.f32 %v666, %v1114
        %v1179 = vmul.f32 %v667, %v1115
        %v1180 = vmul.f32 %v668, %v1116
        %v1181 = vmul.f32 %v669, %v1117
        %v1182 = vmul.f32 %v670, %v1118
        %v1183 = vld [vmem:[#allocation7] sm:$0xff]
        %v1184 = vld [vmem:[#allocation7 + $0x8] sm:$0xff]
        %v1185 = vld [vmem:[#allocation7 + $0x10] sm:$0xff]
        %v1186 = vld [vmem:[#allocation7 + $0x18] sm:$0xff]
        %v1187 = vld [vmem:[#allocation7 + $0x20] sm:$0xff]
        %v1188 = vld [vmem:[#allocation7 + $0x28] sm:$0xff]
        %v1189 = vld [vmem:[#allocation7 + $0x30] sm:$0xff]
        %v1190 = vld [vmem:[#allocation7 + $0x38] sm:$0xff]
        %v1191 = vld [vmem:[#allocation7 + $0x40] sm:$0xff]
        %v1192 = vld [vmem:[#allocation7 + $0x48] sm:$0xff]
        %v1193 = vld [vmem:[#allocation7 + $0x50] sm:$0xff]
        %v1194 = vld [vmem:[#allocation7 + $0x58] sm:$0xff]
        %v1195 = vld [vmem:[#allocation7 + $0x60] sm:$0xff]
        %v1196 = vld [vmem:[#allocation7 + $0x68] sm:$0xff]
        %v1197 = vld [vmem:[#allocation7 + $0x70] sm:$0xff]
        %v1198 = vld [vmem:[#allocation7 + $0x78] sm:$0xff]
        %v1199 = vld [vmem:[#allocation7 + $0x80] sm:$0xff]
        %v1200 = vld [vmem:[#allocation7 + $0x88] sm:$0xff]
        %v1201 = vld [vmem:[#allocation7 + $0x90] sm:$0xff]
        %v1202 = vld [vmem:[#allocation7 + $0x98] sm:$0xff]
        %v1203 = vld [vmem:[#allocation7 + $0xa0] sm:$0xff]
        %v1204 = vld [vmem:[#allocation7 + $0xa8] sm:$0xff]
        %v1205 = vld [vmem:[#allocation7 + $0xb0] sm:$0xff]
        %v1206 = vld [vmem:[#allocation7 + $0xb8] sm:$0xff]
        %v1207 = vld [vmem:[#allocation7 + $0xc0] sm:$0xff]
        %v1208 = vld [vmem:[#allocation7 + $0xc8] sm:$0xff]
        %v1209 = vld [vmem:[#allocation7 + $0xd0] sm:$0xff]
        %v1210 = vld [vmem:[#allocation7 + $0xd8] sm:$0xff]
        %v1211 = vld [vmem:[#allocation7 + $0xe0] sm:$0xff]
        %v1212 = vld [vmem:[#allocation7 + $0xe8] sm:$0xff]
        %v1213 = vld [vmem:[#allocation7 + $0xf0] sm:$0xff]
        %v1214 = vld [vmem:[#allocation7 + $0xf8] sm:$0xff]
        %v1215 = vld [vmem:[%s4] sm:$0x1]
        %v1217 = vlaneseq
        %v1218 = vshrl.u32 %v1217, 7
        %v1219 = vsub.s32 0, %v1218
        %v1220 = vrot.slane %v1215, %v1219
        %1222 = vmatprep.subr.mxu0 0.0
        %1223 = vmatpush1.msra.mxu0 %v1183
        %1224 = vmatprep.subr.mxu0 0.0
        %1225 = vmatpush1.msra.mxu0 %v1184
        %1226 = vmatprep.subr.mxu0 0.0
        %1227 = vmatpush1.msra.mxu0 %v1185
        %1228 = vmatprep.subr.mxu0 0.0
        %1229 = vmatpush1.msra.mxu0 %v1186
        %1230 = vmatprep.subr.mxu0 0.0
        %1231 = vmatpush1.msra.mxu0 %v1187
        %1232 = vmatprep.subr.mxu0 0.0
        %1233 = vmatpush1.msra.mxu0 %v1188
        %1234 = vmatprep.subr.mxu0 0.0
        %1235 = vmatpush1.msra.mxu0 %v1189
        %1236 = vmatprep.subr.mxu0 0.0
        %1237 = vmatpush1.msra.mxu0 %v1190
        %1238 = vmatprep.subr.mxu0 0.0
        %1239 = vmatpush1.msra.mxu0 %v1191
        %1240 = vmatprep.subr.mxu0 0.0
        %1241 = vmatpush1.msra.mxu0 %v1192
        %1242 = vmatprep.subr.mxu0 0.0
        %1243 = vmatpush1.msra.mxu0 %v1193
        %1244 = vmatprep.subr.mxu0 0.0
        %1245 = vmatpush1.msra.mxu0 %v1194
        %1246 = vmatprep.subr.mxu0 0.0
        %1247 = vmatpush1.msra.mxu0 %v1195
        %1248 = vmatprep.subr.mxu0 0.0
        %1249 = vmatpush1.msra.mxu0 %v1196
        %1250 = vmatprep.subr.mxu0 0.0
        %1251 = vmatpush1.msra.mxu0 %v1197
        %1252 = vmatprep.subr.mxu0 0.0
        %1253 = vmatpush1.msra.mxu0 %v1198
        %1254 = vmatprep.subr.mxu0 0.0
        %1255 = vmatpush1.msra.mxu0 %v1199
        %1256 = vmatprep.subr.mxu0 0.0
        %1257 = vmatpush1.msra.mxu0 %v1200
        %1258 = vmatprep.subr.mxu0 0.0
        %1259 = vmatpush1.msra.mxu0 %v1201
        %1260 = vmatprep.subr.mxu0 0.0
        %1261 = vmatpush1.msra.mxu0 %v1202
        %1262 = vmatprep.subr.mxu0 0.0
        %1263 = vmatpush1.msra.mxu0 %v1203
        %1264 = vmatprep.subr.mxu0 0.0
        %1265 = vmatpush1.msra.mxu0 %v1204
        %1266 = vmatprep.subr.mxu0 0.0
        %1267 = vmatpush1.msra.mxu0 %v1205
        %1268 = vmatprep.subr.mxu0 0.0
        %1269 = vmatpush1.msra.mxu0 %v1206
        %1270 = vmatprep.subr.mxu0 0.0
        %1271 = vmatpush1.msra.mxu0 %v1207
        %1272 = vmatprep.subr.mxu0 0.0
        %1273 = vmatpush1.msra.mxu0 %v1208
        %1274 = vmatprep.subr.mxu0 0.0
        %1275 = vmatpush1.msra.mxu0 %v1209
        %1276 = vmatprep.subr.mxu0 0.0
        %1277 = vmatpush1.msra.mxu0 %v1210
        %1278 = vmatprep.subr.mxu0 0.0
        %1279 = vmatpush1.msra.mxu0 %v1211
        %1280 = vmatprep.subr.mxu0 0.0
        %1281 = vmatpush1.msra.mxu0 %v1212
        %1282 = vmatprep.subr.mxu0 0.0
        %1283 = vmatpush1.msra.mxu0 %v1213
        %1284 = vmatprep.subr.mxu0 0.0
        %1285 = vmatpush1.msra.mxu0 %v1214
        %1286 = vmatprep.mubr.f32.mxu0 %v1120
        %1287 = vmatmul.mubr.f32.gmra.mrb[0].mxu0 %v1119
        %v1288 = vpop.f32.mrb[0].mxu0
        %v1289 = vadd.f32 %v1220, %v1288
        %v1290 = vpop.f32.mrb[0].mxu0
        %1291 = vmatprep.mubr.f32.mxu0 %v1122
        %1292 = vmatmul.mubr.f32.gmra.mrb[0].mxu0 %v1121
        %v1293 = vpop.f32.mrb[0].mxu0
        %v1294 = vadd.f32 %v1220, %v1293
        %v1295 = vpop.f32.mrb[0].mxu0
        %1296 = vmatprep.mubr.f32.mxu0 %v1124
        %1297 = vmatmul.mubr.f32.gmra.mrb[0].mxu0 %v1123
        %v1298 = vpop.f32.mrb[0].mxu0
        %v1299 = vadd.f32 %v1220, %v1298
        %v1300 = vpop.f32.mrb[0].mxu0
        %1301 = vmatprep.mubr.f32.mxu0 %v1126
        %1302 = vmatmul.mubr.f32.gmra.mrb[0].mxu0 %v1125
        %v1303 = vpop.f32.mrb[0].mxu0
        %v1304 = vadd.f32 %v1220, %v1303
        %v1305 = vpop.f32.mrb[0].mxu0
        %1306 = vmatprep.mubr.f32.mxu0 %v1128
        %1307 = vmatmul.mubr.f32.gmra.mrb[0].mxu0 %v1127
        %v1308 = vpop.f32.mrb[0].mxu0
        %v1309 = vadd.f32 %v1220, %v1308
        %v1310 = vpop.f32.mrb[0].mxu0
        %1311 = vmatprep.mubr.f32.mxu0 %v1130
        %1312 = vmatmul.mubr.f32.gmra.mrb[0].mxu0 %v1129
        %v1313 = vpop.f32.mrb[0].mxu0
        %v1314 = vadd.f32 %v1220, %v1313
        %v1315 = vpop.f32.mrb[0].mxu0
        %1316 = vmatprep.mubr.f32.mxu0 %v1132
        %1317 = vmatmul.mubr.f32.gmra.mrb[0].mxu0 %v1131
        %v1318 = vpop.f32.mrb[0].mxu0
        %v1319 = vadd.f32 %v1220, %v1318
        %v1320 = vpop.f32.mrb[0].mxu0
        %1321 = vmatprep.mubr.f32.mxu0 %v1134
        %1322 = vmatmul.mubr.f32.gmra.mrb[0].mxu0 %v1133
        %v1323 = vpop.f32.mrb[0].mxu0
        %v1324 = vadd.f32 %v1220, %v1323
        %v1325 = vpop.f32.mrb[0].mxu0
        %1326 = vmatprep.mubr.f32.mxu0 %v1136
        %1327 = vmatmul.mubr.f32.gmra.mrb[0].mxu0 %v1135
        %v1328 = vpop.f32.mrb[0].mxu0
        %v1329 = vadd.f32 %v1220, %v1328
        %v1330 = vpop.f32.mrb[0].mxu0
        %1331 = vmatprep.mubr.f32.mxu0 %v1138
        %1332 = vmatmul.mubr.f32.gmra.mrb[0].mxu0 %v1137
        %v1333 = vpop.f32.mrb[0].mxu0
        %v1334 = vadd.f32 %v1220, %v1333
        %v1335 = vpop.f32.mrb[0].mxu0
        %1336 = vmatprep.mubr.f32.mxu0 %v1140
        %1337 = vmatmul.mubr.f32.gmra.mrb[0].mxu0 %v1139
        %v1338 = vpop.f32.mrb[0].mxu0
        %v1339 = vadd.f32 %v1220, %v1338
        %v1340 = vpop.f32.mrb[0].mxu0
        %1341 = vmatprep.mubr.f32.mxu0 %v1142
        %1342 = vmatmul.mubr.f32.gmra.mrb[0].mxu0 %v1141
        %v1343 = vpop.f32.mrb[0].mxu0
        %v1344 = vadd.f32 %v1220, %v1343
        %v1345 = vpop.f32.mrb[0].mxu0
        %1346 = vmatprep.mubr.f32.mxu0 %v1144
        %1347 = vmatmul.mubr.f32.gmra.mrb[0].mxu0 %v1143
        %v1348 = vpop.f32.mrb[0].mxu0
        %v1349 = vadd.f32 %v1220, %v1348
        %v1350 = vpop.f32.mrb[0].mxu0
        %1351 = vmatprep.mubr.f32.mxu0 %v1146
        %1352 = vmatmul.mubr.f32.gmra.mrb[0].mxu0 %v1145
        %v1353 = vpop.f32.mrb[0].mxu0
        %v1354 = vadd.f32 %v1220, %v1353
        %v1355 = vpop.f32.mrb[0].mxu0
        %1356 = vmatprep.mubr.f32.mxu0 %v1148
        %1357 = vmatmul.mubr.f32.gmra.mrb[0].mxu0 %v1147
        %v1358 = vpop.f32.mrb[0].mxu0
        %v1359 = vadd.f32 %v1220, %v1358
        %v1360 = vpop.f32.mrb[0].mxu0
        %1361 = vmatprep.mubr.f32.mxu0 %v1150
        %1362 = vmatmul.mubr.f32.gmra.mrb[0].mxu0 %v1149
        %v1363 = vpop.f32.mrb[0].mxu0
        %v1364 = vadd.f32 %v1220, %v1363
        %v1365 = vpop.f32.mrb[0].mxu0
        %1366 = vmatprep.mubr.f32.mxu0 %v1152
        %1367 = vmatmul.mubr.f32.gmra.mrb[0].mxu0 %v1151
        %v1368 = vpop.f32.mrb[0].mxu0
        %v1369 = vadd.f32 %v1220, %v1368
        %v1370 = vpop.f32.mrb[0].mxu0
        %1371 = vmatprep.mubr.f32.mxu0 %v1154
        %1372 = vmatmul.mubr.f32.gmra.mrb[0].mxu0 %v1153
        %v1373 = vpop.f32.mrb[0].mxu0
        %v1374 = vadd.f32 %v1220, %v1373
        %v1375 = vpop.f32.mrb[0].mxu0
        %1376 = vmatprep.mubr.f32.mxu0 %v1156
        %1377 = vmatmul.mubr.f32.gmra.mrb[0].mxu0 %v1155
        %v1378 = vpop.f32.mrb[0].mxu0
        %v1379 = vadd.f32 %v1220, %v1378
        %v1380 = vpop.f32.mrb[0].mxu0
        %1381 = vmatprep.mubr.f32.mxu0 %v1158
        %1382 = vmatmul.mubr.f32.gmra.mrb[0].mxu0 %v1157
        %v1383 = vpop.f32.mrb[0].mxu0
        %v1384 = vadd.f32 %v1220, %v1383
        %v1385 = vpop.f32.mrb[0].mxu0
        %1386 = vmatprep.mubr.f32.mxu0 %v1160
        %1387 = vmatmul.mubr.f32.gmra.mrb[0].mxu0 %v1159
        %v1388 = vpop.f32.mrb[0].mxu0
        %v1389 = vadd.f32 %v1220, %v1388
        %v1390 = vpop.f32.mrb[0].mxu0
        %1391 = vmatprep.mubr.f32.mxu0 %v1162
        %1392 = vmatmul.mubr.f32.gmra.mrb[0].mxu0 %v1161
        %v1393 = vpop.f32.mrb[0].mxu0
        %v1394 = vadd.f32 %v1220, %v1393
        %v1395 = vpop.f32.mrb[0].mxu0
        %1396 = vmatprep.mubr.f32.mxu0 %v1164
        %1397 = vmatmul.mubr.f32.gmra.mrb[0].mxu0 %v1163
        %v1398 = vpop.f32.mrb[0].mxu0
        %v1399 = vadd.f32 %v1220, %v1398
        %v1400 = vpop.f32.mrb[0].mxu0
        %1401 = vmatprep.mubr.f32.mxu0 %v1166
        %1402 = vmatmul.mubr.f32.gmra.mrb[0].mxu0 %v1165
        %v1403 = vpop.f32.mrb[0].mxu0
        %v1404 = vadd.f32 %v1220, %v1403
        %v1405 = vpop.f32.mrb[0].mxu0
        %1406 = vmatprep.mubr.f32.mxu0 %v1168
        %1407 = vmatmul.mubr.f32.gmra.mrb[0].mxu0 %v1167
        %v1408 = vpop.f32.mrb[0].mxu0
        %v1409 = vadd.f32 %v1220, %v1408
        %v1410 = vpop.f32.mrb[0].mxu0
        %1411 = vmatprep.mubr.f32.mxu0 %v1170
        %1412 = vmatmul.mubr.f32.gmra.mrb[0].mxu0 %v1169
        %v1413 = vpop.f32.mrb[0].mxu0
        %v1414 = vadd.f32 %v1220, %v1413
        %v1415 = vpop.f32.mrb[0].mxu0
        %1416 = vmatprep.mubr.f32.mxu0 %v1172
        %1417 = vmatmul.mubr.f32.gmra.mrb[0].mxu0 %v1171
        %v1418 = vpop.f32.mrb[0].mxu0
        %v1419 = vadd.f32 %v1220, %v1418
        %v1420 = vpop.f32.mrb[0].mxu0
        %1421 = vmatprep.mubr.f32.mxu0 %v1174
        %1422 = vmatmul.mubr.f32.gmra.mrb[0].mxu0 %v1173
        %v1423 = vpop.f32.mrb[0].mxu0
        %v1424 = vadd.f32 %v1220, %v1423
        %v1425 = vpop.f32.mrb[0].mxu0
        %1426 = vmatprep.mubr.f32.mxu0 %v1176
        %1427 = vmatmul.mubr.f32.gmra.mrb[0].mxu0 %v1175
        %v1428 = vpop.f32.mrb[0].mxu0
        %v1429 = vadd.f32 %v1220, %v1428
        %v1430 = vpop.f32.mrb[0].mxu0
        %1431 = vmatprep.mubr.f32.mxu0 %v1178
        %1432 = vmatmul.mubr.f32.gmra.mrb[0].mxu0 %v1177
        %v1433 = vpop.f32.mrb[0].mxu0
        %v1434 = vadd.f32 %v1220, %v1433
        %v1435 = vpop.f32.mrb[0].mxu0
        %1436 = vmatprep.mubr.f32.mxu0 %v1180
        %1437 = vmatmul.mubr.f32.gmra.mrb[0].mxu0 %v1179
        %v1438 = vpop.f32.mrb[0].mxu0
        %v1439 = vadd.f32 %v1220, %v1438
        %v1440 = vpop.f32.mrb[0].mxu0
        %1441 = vmatprep.mubr.f32.mxu0 %v1182
        %1442 = vmatmul.mubr.f32.gmra.mrb[0].mxu0 %v1181
        %v1443 = vpop.f32.mrb[0].mxu0
        %v1444 = vadd.f32 %v1220, %v1443
        %v1445 = vpop.f32.mrb[0].mxu0
        %1446 = vdwg.mxu0
        %1447 = vst [vmem:[%s271] sm:$0xff] %v1289
        %1448 = vst [vmem:[%s271 + $0x8] sm:$0xff] %v1294
        %1449 = vst [vmem:[%s271 + $0x10] sm:$0xff] %v1299
        %1450 = vst [vmem:[%s271 + $0x18] sm:$0xff] %v1304
        %1451 = vst [vmem:[%s271 + $0x20] sm:$0xff] %v1309
        %1452 = vst [vmem:[%s271 + $0x28] sm:$0xff] %v1314
        %1453 = vst [vmem:[%s271 + $0x30] sm:$0xff] %v1319
        %1454 = vst [vmem:[%s271 + $0x38] sm:$0xff] %v1324
        %1455 = vst [vmem:[%s271 + $0x40] sm:$0xff] %v1329
        %1456 = vst [vmem:[%s271 + $0x48] sm:$0xff] %v1334
        %1457 = vst [vmem:[%s271 + $0x50] sm:$0xff] %v1339
        %1458 = vst [vmem:[%s271 + $0x58] sm:$0xff] %v1344
        %1459 = vst [vmem:[%s271 + $0x60] sm:$0xff] %v1349
        %1460 = vst [vmem:[%s271 + $0x68] sm:$0xff] %v1354
        %1461 = vst [vmem:[%s271 + $0x70] sm:$0xff] %v1359
        %1462 = vst [vmem:[%s271 + $0x78] sm:$0xff] %v1364
        %1463 = vst [vmem:[%s271 + $0x80] sm:$0xff] %v1369
        %1464 = vst [vmem:[%s271 + $0x88] sm:$0xff] %v1374
        %1465 = vst [vmem:[%s271 + $0x90] sm:$0xff] %v1379
        %1466 = vst [vmem:[%s271 + $0x98] sm:$0xff] %v1384
        %1467 = vst [vmem:[%s271 + $0xa0] sm:$0xff] %v1389
        %1468 = vst [vmem:[%s271 + $0xa8] sm:$0xff] %v1394
        %1469 = vst [vmem:[%s271 + $0xb0] sm:$0xff] %v1399
        %1470 = vst [vmem:[%s271 + $0xb8] sm:$0xff] %v1404
        %1471 = vst [vmem:[%s271 + $0xc0] sm:$0xff] %v1409
        %1472 = vst [vmem:[%s271 + $0xc8] sm:$0xff] %v1414
        %1473 = vst [vmem:[%s271 + $0xd0] sm:$0xff] %v1419
        %1474 = vst [vmem:[%s271 + $0xd8] sm:$0xff] %v1424
        %1475 = vst [vmem:[%s271 + $0xe0] sm:$0xff] %v1429
        %1476 = vst [vmem:[%s271 + $0xe8] sm:$0xff] %v1434
        %1477 = vst [vmem:[%s271 + $0xf0] sm:$0xff] %v1439
        %1478 = vst [vmem:[%s271 + $0xf8] sm:$0xff] %v1444
        %s1479 = sand.u32 %s141, 1
        %s1480 = scalar_lea.sflag [#allocation4], %s1479
        %s1481 = sand.u32 %s141, 1
        %s1482 = smul.addr %s1481, 256
        %s1483 = scalar_lea.vmem [#allocation8], %s1482
        // Predicated region
        $region53: #{tpu_custom_call.1} parent=39 // pred_check
          %p1484 = pneg %p151
        $region54: #{tpu_custom_call.1} parent=39 // pred_check_branch
          %1486 = sbr.rel (%p1484) target = $region56
        $region55: #{tpu_custom_call.1} parent=39 // pred_region
          %s1487 = smul.u32 32, %s23
          %s1489 = ssub.s32 4096, 4096
          %1490 = vsyncadd %s1480, %s1489
          %s1491 = smul.addr %s1487, 128
          %s1492 = scalar_lea.hbm %s5, %s1491
          %s1493 = sshll.u32 %s1483, 4
          %s1494 = int_to_ptr.vmem [resolvable:$true] %s1493
          %1499 = dma.vmem_to_hbm [thread:$0]  %s1494, 4096, %s1492, %s1480, 128, 128, 8
        $region56: #{tpu_custom_call.1} parent=39 // pred_fallthru
          _
      $region40: #{tpu_custom_call.1} parent=5 // pred_fallthru
        _
      %p1500 = scmp.le.s32.totalorder 2, %s18
      // Predicated region
      $region57: #{tpu_custom_call.1} parent=5 // pred_check
        %p1501 = pneg %p1500
      $region58: #{tpu_custom_call.1} parent=5 // pred_check_branch
        %1503 = sbr.rel (%p1501) target = $region60
      $region59: #{tpu_custom_call.1} parent=5 // pred_region
        %s1504 = ssub.s32 %s18, 2
        // Predicated region
        $region61: #{tpu_custom_call.1} parent=59 // pred_check
          %p1505 = pneg %p157
        $region62: #{tpu_custom_call.1} parent=59 // pred_check_branch
          %1507 = sbr.rel (%p1505) target = $region64
        $region63: #{tpu_custom_call.1} parent=59 // pred_region
          %s1508 = sand.u32 %s142, 1
          %s1509 = scalar_lea.sflag [#allocation4], %s1508
          %s1510 = sand.u32 %s142, 1
          %s1511 = smul.addr %s1510, 256
          %s1512 = scalar_lea.vmem [#allocation8], %s1511
          %1513 = dma.done %s1509, 4096
        $region64: #{tpu_custom_call.1} parent=59 // pred_fallthru
          _
      $region60: #{tpu_custom_call.1} parent=5 // pred_fallthru
        _
    $region6: #{tpu_custom_call.1} parent=1 // loop_footer
      %s22 = sadd.s32 1, %s18
    $region7: #{tpu_custom_call.1} parent=1 // loop_footer_branch
      %17 = sbr.rel target = $region3
    $region8: #{tpu_custom_call.1} parent=1 // loop_exit
      _
    %1514 = vsyncpa [#allocation3], 1
    %s1515 = scalar_lea.sflag [#allocation3], 1
    %1516 = vsyncpa %s1515, 1
    %1517 = vsyncpa [#allocation6], 1
    %1518 = vsyncpa [#allocation4], 1
    %s1519 = scalar_lea.sflag [#allocation4], 1
    %1520 = vsyncpa %s1519, 1

// kernel: tpu_custom_call.1
$region0: #{tpu_custom_call.1}
  #allocation0 [shape = 'u32[]', space=smem, size = 0x4, offset = 0x4, fixed_abs, tag = 'smem constant byte address 0x4 - core index']
  #allocation1 [shape = 'u32[144,128]{1,0:T(1,128)}', space=vmem, size = 0x12000, scoped, tag = 'internal scratch']
  %s0 = inlined_call_operand.hbm [shape: f32[512,128], index: 0, kind: input, shape index: {}]
  %s1 = inlined_call_operand.hbm [shape: f32[128,256], index: 1, kind: input, shape index: {}]
  %s2 = inlined_call_operand.vmem [shape: f32[1,256], index: 2, kind: input, shape index: {}]
  %s3 = inlined_call_operand.hbm [shape: f32[256,128], index: 3, kind: input, shape index: {}]
  %s4 = inlined_call_operand.vmem [shape: f32[1,128], index: 4, kind: input, shape index: {}]
  %s5 = inlined_call_operand.hbm [shape: f32[512,128], index: 5, kind: output, shape index: {}]
  %s6 = sld [smem:[#allocation0]]
  $region65: #{tpu_custom_call.1} parent=0
    _
  %s8 = ssub.s32 1, %s6
  %s9 = scalar_select 0, %s8, %s6
  $region1: #{tpu_custom_call.1} parent=0
    #allocation2 [shape = 'u8[262144]{0}', space=vmem, size = 0x40000, scoped, tag = 'input window, operand 0']
    #allocation3 [shape = 's32[2]{0}', space=sflag, size = 0x8, scoped, tag = 'scoped memory for tpu_custom_call.1']
    #allocation4 [shape = 's32[2]{0}', space=sflag, size = 0x8, scoped, tag = 'scoped memory for tpu_custom_call.1']
    #allocation5 [shape = 'u8[131072]{0}', space=vmem, size = 0x20000, scoped, tag = 'input window, operand 1, single buffered']
    #allocation6 [shape = 's32[1]{0}', space=sflag, size = 0x4, scoped, tag = 'scoped memory for tpu_custom_call.1']
    #allocation7 [shape = 'u8[131072]{0}', space=vmem, size = 0x20000, scoped, tag = 'input window, operand 3, single buffered']
    #allocation8 [shape = 'u8[262144]{0}', space=vmem, size = 0x40000, scoped, tag = 'output window, operand 0']
    %10 = vsyncpa [#allocation3], 0
    %s11 = scalar_lea.sflag [#allocation3], 1
    %12 = vsyncpa %s11, 0
    %13 = vsyncpa [#allocation6], 0
    %14 = vsyncpa [#allocation4], 0
    %s15 = scalar_lea.sflag [#allocation4], 1
    %16 = vsyncpa %s15, 0
    loop: start=0, step=1, limit=4
    $region2: #{tpu_custom_call.1} parent=1 // loop_pre_header
      _
    $region3: #{tpu_custom_call.1} parent=1 // loop_header
      %s18 = sphi 0, %s22
      %p19 = scmp.ge.s32.totalorder %s18, 4
      %s28 = sphi 0, %s30
      %s31 = sphi 0, %s28
      %s32 = sphi 0, %s31
      %s48 = sphi 0, %s32
      %s52 = sphi 0, %s52
      %s54 = sphi 0, %s52
      %s55 = sphi 0, %s54
      %s69 = sphi 0, %s55
      %s73 = sphi 0, %s73
      %s75 = sphi 0, %s73
      %s76 = sphi 0, %s75
      %s90 = sphi 0, %s76
      %s94 = sphi 0, %s94
      %s96 = sphi 0, %s94
      %s97 = sphi 0, %s96
      %s111 = sphi 0, %s97
      %s115 = sphi 0, %s115
      %s117 = sphi 0, %s115
      %s118 = sphi 0, %s117
      %s132 = sphi 0, %s118
      %s138 = sphi 0, %s140
      %s141 = sphi 0, %s138
      %s142 = sphi 0, %s141
      %s158 = sphi 0, %s142
    $region4: #{tpu_custom_call.1} parent=1 // loop_header_branch
      %21 = sbr.rel (%p19) target = $region8
    $region5: #{tpu_custom_call.1} parent=1 // loop_body
      %s23 = ssub.s32 %s18, 1
      %s24 = ssub.s32 %s18, 2
      %s25 = sadd.s32 %s18, 1
      %s26 = ssub.s32 %s18, %s25
      %p27 = scmp.eq.s32.totalorder %s26, 0
      %s29 = sadd.s32 %s28, 1
      %s30 = scalar_select %p27, %s28, %s29
      %p33 = pneg %p27
      %p34 = scmp.eq.s32.totalorder %s18, 1
      %p35 = por %p33, %p34
      %p36 = scmp.ne.s32.totalorder %s28, %s31
      %p37 = scmp.eq.s32.totalorder %s18, 0
      %p38 = por %p36, %p37
      %p39 = scmp.ne.s32.totalorder %s28, %s31
      %p40 = scmp.eq.s32.totalorder %s23, 1
      %p41 = por %p39, %p40
      %p42 = scmp.ne.s32.totalorder %s31, %s32
      %p43 = scmp.eq.s32.totalorder %s23, 0
      %p44 = por %p42, %p43
      %p45 = scmp.ne.s32.totalorder %s31, %s32
      %p46 = scmp.eq.s32.totalorder %s24, 1
      %p47 = por %p45, %p46
      %p49 = scmp.ne.s32.totalorder %s32, %s48
      %p50 = scmp.eq.s32.totalorder %s24, 0
      %p51 = por %p49, %p50
      %s53 = sadd.s32 %s52, 1
      %p56 = scmp.eq.s32.totalorder %s18, 1
      %p57 = scmp.ne.s32.totalorder %s52, %s54
      %p58 = scmp.eq.s32.totalorder %s18, 0
      %p59 = por %p57, %p58
      %p60 = scmp.ne.s32.totalorder %s52, %s54
      %p61 = scmp.eq.s32.totalorder %s23, 1
      %p62 = por %p60, %p61
      %p63 = scmp.ne.s32.totalorder %s54, %s55
      %p64 = scmp.eq.s32.totalorder %s23, 0
      %p65 = por %p63, %p64
      %p66 = scmp.ne.s32.totalorder %s54, %s55
      %p67 = scmp.eq.s32.totalorder %s24, 1
      %p68 = por %p66, %p67
      %p70 = scmp.ne.s32.totalorder %s55, %s69
      %p71 = scmp.eq.s32.totalorder %s24, 0
      %p72 = por %p70, %p71
      %s74 = sadd.s32 %s73, 1
      %p77 = scmp.eq.s32.totalorder %s18, 1
      %p78 = scmp.ne.s32.totalorder %s73, %s75
      %p79 = scmp.eq.s32.totalorder %s18, 0
      %p80 = por %p78, %p79
      %p81 = scmp.ne.s32.totalorder %s73, %s75
      %p82 = scmp.eq.s32.totalorder %s23, 1
      %p83 = por %p81, %p82
      %p84 = scmp.ne.s32.totalorder %s75, %s76
      %p85 = scmp.eq.s32.totalorder %s23, 0
      %p86 = por %p84, %p85
      %p87 = scmp.ne.s32.totalorder %s75, %s76
      %p88 = scmp.eq.s32.totalorder %s24, 1
      %p89 = por %p87, %p88
      %p91 = scmp.ne.s32.totalorder %s76, %s90
      %p92 = scmp.eq.s32.totalorder %s24, 0
      %p93 = por %p91, %p92
      %s95 = sadd.s32 %s94, 1
      %p98 = scmp.eq.s32.totalorder %s18, 1
      %p99 = scmp.ne.s32.totalorder %s94, %s96
      %p100 = scmp.eq.s32.totalorder %s18, 0
      %p101 = por %p99, %p100
      %p102 = scmp.ne.s32.totalorder %s94, %s96
      %p103 = scmp.eq.s32.totalorder %s23, 1
      %p104 = por %p102, %p103
      %p105 = scmp.ne.s32.totalorder %s96, %s97
      %p106 = scmp.eq.s32.totalorder %s23, 0
      %p107 = por %p105, %p106
      %p108 = scmp.ne.s32.totalorder %s96, %s97
      %p109 = scmp.eq.s32.totalorder %s24, 1
      %p110 = por %p108, %p109
      %p112 = scmp.ne.s32.totalorder %s97, %s111
      %p113 = scmp.eq.s32.totalorder %s24, 0
      %p114 = por %p112, %p113
      %s116 = sadd.s32 %s115, 1
      %p119 = scmp.eq.s32.totalorder %s18, 1
      %p120 = scmp.ne.s32.totalorder %s115, %s117
      %p121 = scmp.eq.s32.totalorder %s18, 0
      %p122 = por %p120, %p121
      %p123 = scmp.ne.s32.totalorder %s115, %s117
      %p124 = scmp.eq.s32.totalorder %s23, 1
      %p125 = por %p123, %p124
      %p126 = scmp.ne.s32.totalorder %s117, %s118
      %p127 = scmp.eq.s32.totalorder %s23, 0
      %p128 = por %p126, %p127
      %p129 = scmp.ne.s32.totalorder %s117, %s118
      %p130 = scmp.eq.s32.totalorder %s24, 1
      %p131 = por %p129, %p130
      %p133 = scmp.ne.s32.totalorder %s118, %s132
      %p134 = scmp.eq.s32.totalorder %s24, 0
      %p135 = por %p133, %p134
      %s136 = ssub.s32 %s18, %s25
      %p137 = scmp.eq.s32.totalorder %s136, 0
      %s139 = sadd.s32 %s138, 1
      %s140 = scalar_select %p137, %s138, %s139
      %p143 = pneg %p137
      %p144 = scmp.eq.s32.totalorder %s18, 1
      %p145 = por %p143, %p144
      %p146 = scmp.ne.s32.totalorder %s138, %s141
      %p147 = scmp.eq.s32.totalorder %s18, 0
      %p148 = por %p146, %p147
      %p149 = scmp.ne.s32.totalorder %s138, %s141
      %p150 = scmp.eq.s32.totalorder %s23, 1
      %p151 = por %p149, %p150
      %p152 = scmp.ne.s32.totalorder %s141, %s142
      %p153 = scmp.eq.s32.totalorder %s23, 0
      %p154 = por %p152, %p153
      %p155 = scmp.ne.s32.totalorder %s141, %s142
      %p156 = scmp.eq.s32.totalorder %s24, 1
      %p157 = por %p155, %p156
      %p159 = scmp.ne.s32.totalorder %s142, %s158
      %p160 = scmp.eq.s32.totalorder %s24, 0
      %p161 = por %p159, %p160
      %p162 = scmp.le.s32.totalorder 1, %s18
      %p163 = scmp.lt.s32.totalorder %s18, 3
      %p164 = pnand %p162, %p163
      %p165 = pneg %p164
      // Predicated region
      $region9: #{tpu_custom_call.1} parent=5 // pred_check
        _
      $region10: #{tpu_custom_call.1} parent=5 // pred_check_branch
        %167 = sbr.rel (%p164) target = $region12
      $region11: #{tpu_custom_call.1} parent=5 // pred_region
        %s168 = ssub.s32 %s18, 1
        // Predicated region
        $region13: #{tpu_custom_call.1} parent=11 // pred_check
          %p169 = pneg %p65
        $region14: #{tpu_custom_call.1} parent=11 // pred_check_branch
          %171 = sbr.rel (%p169) target = $region16
        $region15: #{tpu_custom_call.1} parent=11 // pred_region
          %s173 = ssub.s32 4096, 4096
          %174 = vsyncadd [#allocation6], %s173
          %s175 = sshll.u32 [#allocation5], 4
          %s176 = int_to_ptr.vmem [resolvable:$true] %s175
          %181 = dma.hbm_to_vmem [thread:$0]  %s1, 4096, %s176, [#allocation6], 256, 256, 16
        $region16: #{tpu_custom_call.1} parent=11 // pred_fallthru
          _
        // Predicated region
        $region17: #{tpu_custom_call.1} parent=11 // pred_check
          %p182 = pneg %p86
        $region18: #{tpu_custom_call.1} parent=11 // pred_check_branch
          %184 = sbr.rel (%p182) target = $region20
        $region19: #{tpu_custom_call.1} parent=11 // pred_region
          _
        $region20: #{tpu_custom_call.1} parent=11 // pred_fallthru
          _
        // Predicated region
        $region21: #{tpu_custom_call.1} parent=11 // pred_check
          %p185 = pneg %p107
        $region22: #{tpu_custom_call.1} parent=11 // pred_check_branch
          %187 = sbr.rel (%p185) target = $region24
        $region23: #{tpu_custom_call.1} parent=11 // pred_region
          %s189 = ssub.s32 4096, 4096
          %190 = vsyncadd [#allocation6], %s189
          %s191 = sshll.u32 [#allocation7], 4
          %s192 = int_to_ptr.vmem [resolvable:$true] %s191
          %197 = dma.hbm_to_vmem [thread:$0]  %s3, 4096, %s192, [#allocation6], 128, 128, 8
        $region24: #{tpu_custom_call.1} parent=11 // pred_fallthru
          _
        // Predicated region
        $region25: #{tpu_custom_call.1} parent=11 // pred_check
          %p198 = pneg %p128
        $region26: #{tpu_custom_call.1} parent=11 // pred_check_branch
          %200 = sbr.rel (%p198) target = $region28
        $region27: #{tpu_custom_call.1} parent=11 // pred_region
          _
        $region28: #{tpu_custom_call.1} parent=11 // pred_fallthru
          _
      $region12: #{tpu_custom_call.1} parent=5 // pred_fallthru
        _
      %p201 = scmp.lt.s32.totalorder %s18, 2
      // Predicated region
      $region29: #{tpu_custom_call.1} parent=5 // pred_check
        %p202 = pneg %p201
      $region30: #{tpu_custom_call.1} parent=5 // pred_check_branch
        %204 = sbr.rel (%p202) target = $region32
      $region31: #{tpu_custom_call.1} parent=5 // pred_region
        // Predicated region
        $region33: #{tpu_custom_call.1} parent=31 // pred_check
          %p205 = pneg %p38
        $region34: #{tpu_custom_call.1} parent=31 // pred_check_branch
          %207 = sbr.rel (%p205) target = $region36
        $region35: #{tpu_custom_call.1} parent=31 // pred_region
          %s208 = sand.u32 %s28, 1
          %s209 = scalar_lea.sflag [#allocation3], %s208
          %s210 = sand.u32 %s28, 1
          %s211 = smul.addr %s210, 256
          %s212 = scalar_lea.vmem [#allocation2], %s211
          %s213 = smul.u32 32, %s18
          %s215 = ssub.s32 4096, 4096
          %216 = vsyncadd %s209, %s215
          %s217 = smul.addr %s213, 128
          %s218 = scalar_lea.hbm %s0, %s217
          %s219 = sshll.u32 %s212, 4
          %s220 = int_to_ptr.vmem [resolvable:$true] %s219
          %225 = dma.hbm_to_vmem [thread:$0]  %s218, 4096, %s220, %s209, 128, 128, 8
        $region36: #{tpu_custom_call.1} parent=31 // pred_fallthru
          _
      $region32: #{tpu_custom_call.1} parent=5 // pred_fallthru
        _
      %p226 = scmp.le.s32.totalorder 1, %s18
      %p227 = scmp.lt.s32.totalorder %s18, 3
      %p228 = pnand %p226, %p227
      %p229 = pneg %p228
      // Predicated region
      $region37: #{tpu_custom_call.1} parent=5 // pred_check
        _
      $region38: #{tpu_custom_call.1} parent=5 // pred_check_branch
        %231 = sbr.rel (%p228) target = $region40
      $region39: #{tpu_custom_call.1} parent=5 // pred_region
        %s232 = ssub.s32 %s18, 1
        %s233 = sand.u32 %s31, 1
        %s234 = scalar_lea.sflag [#allocation3], %s233
        %s235 = sand.u32 %s31, 1
        %s236 = smul.addr %s235, 256
        %s237 = scalar_lea.vmem [#allocation2], %s236
        // Predicated region
        $region41: #{tpu_custom_call.1} parent=39 // pred_check
          %p238 = pneg %p44
        $region42: #{tpu_custom_call.1} parent=39 // pred_check_branch
          %240 = sbr.rel (%p238) target = $region44
        $region43: #{tpu_custom_call.1} parent=39 // pred_region
          %241 = dma.done %s234, 4096
        $region44: #{tpu_custom_call.1} parent=39 // pred_fallthru
          _
        // Predicated region
        $region45: #{tpu_custom_call.1} parent=39 // pred_check
          %p242 = pneg %p65
        $region46: #{tpu_custom_call.1} parent=39 // pred_check_branch
          %244 = sbr.rel (%p242) target = $region48
        $region47: #{tpu_custom_call.1} parent=39 // pred_region
          %245 = dma.done [#allocation6], 4096
        $region48: #{tpu_custom_call.1} parent=39 // pred_fallthru
          _
        // Predicated region
        $region49: #{tpu_custom_call.1} parent=39 // pred_check
          %p246 = pneg %p107
        $region50: #{tpu_custom_call.1} parent=39 // pred_check_branch
          %248 = sbr.rel (%p246) target = $region52
        $region51: #{tpu_custom_call.1} parent=39 // pred_region
          %249 = dma.done [#allocation6], 4096
        $region52: #{tpu_custom_call.1} parent=39 // pred_fallthru
          _
        %s250 = sand.u32 %s31, 1
        %s251 = scalar_lea.sflag [#allocation3], %s250
        %s252 = sand.u32 %s31, 1
        %s253 = smul.addr %s252, 256
        %s254 = scalar_lea.vmem [#allocation2], %s253
        %p255 = pneg %p44
        %p256 = pneg %p41
        %p257 = pneg %p65
        %p258 = pneg %p62
        %p259 = pneg %p86
        %p260 = pneg %p83
        %p261 = pneg %p107
        %p262 = pneg %p104
        %p263 = pneg %p128
        %p264 = pneg %p125
        %p265 = pneg %p154
        %p266 = pneg %p151
        %s267 = sand.u32 %s141, 1
        %s268 = scalar_lea.sflag [#allocation4], %s267
        %s269 = sand.u32 %s141, 1
        %s270 = smul.addr %s269, 256
        %s271 = scalar_lea.vmem [#allocation8], %s270
        %s272 = smul.u32 32, %s23
        %s273 = smul.u32 32, %s23
        %v274 = vld [vmem:[%s237] sm:$0xff]
        %v275 = vld [vmem:[%s237 + $0x8] sm:$0xff]
        %v276 = vld [vmem:[%s237 + $0x10] sm:$0xff]
        %v277 = vld [vmem:[%s237 + $0x18] sm:$0xff]
        %v278 = vld [vmem:[%s237 + $0x20] sm:$0xff]
        %v279 = vld [vmem:[%s237 + $0x28] sm:$0xff]
        %v280 = vld [vmem:[%s237 + $0x30] sm:$0xff]
        %v281 = vld [vmem:[%s237 + $0x38] sm:$0xff]
        %v282 = vld [vmem:[%s237 + $0x40] sm:$0xff]
        %v283 = vld [vmem:[%s237 + $0x48] sm:$0xff]
        %v284 = vld [vmem:[%s237 + $0x50] sm:$0xff]
        %v285 = vld [vmem:[%s237 + $0x58] sm:$0xff]
        %v286 = vld [vmem:[%s237 + $0x60] sm:$0xff]
        %v287 = vld [vmem:[%s237 + $0x68] sm:$0xff]
        %v288 = vld [vmem:[%s237 + $0x70] sm:$0xff]
        %v289 = vld [vmem:[%s237 + $0x78] sm:$0xff]
        %v290 = vld [vmem:[%s237 + $0x80] sm:$0xff]
        %v291 = vld [vmem:[%s237 + $0x88] sm:$0xff]
        %v292 = vld [vmem:[%s237 + $0x90] sm:$0xff]
        %v293 = vld [vmem:[%s237 + $0x98] sm:$0xff]
        %v294 = vld [vmem:[%s237 + $0xa0] sm:$0xff]
        %v295 = vld [vmem:[%s237 + $0xa8] sm:$0xff]
        %v296 = vld [vmem:[%s237 + $0xb0] sm:$0xff]
        %v297 = vld [vmem:[%s237 + $0xb8] sm:$0xff]
        %v298 = vld [vmem:[%s237 + $0xc0] sm:$0xff]
        %v299 = vld [vmem:[%s237 + $0xc8] sm:$0xff]
        %v300 = vld [vmem:[%s237 + $0xd0] sm:$0xff]
        %v301 = vld [vmem:[%s237 + $0xd8] sm:$0xff]
        %v302 = vld [vmem:[%s237 + $0xe0] sm:$0xff]
        %v303 = vld [vmem:[%s237 + $0xe8] sm:$0xff]
        %v304 = vld [vmem:[%s237 + $0xf0] sm:$0xff]
        %v305 = vld [vmem:[%s237 + $0xf8] sm:$0xff]
        %v306 = vld [vmem:[#allocation5] sm:$0xff]
        %v307 = vld [vmem:[#allocation5 + $0x8] sm:$0xff]
        %v308 = vld [vmem:[#allocation5 + $0x10] sm:$0xff]
        %v309 = vld [vmem:[#allocation5 + $0x18] sm:$0xff]
        %v310 = vld [vmem:[#allocation5 + $0x20] sm:$0xff]
        %v311 = vld [vmem:[#allocation5 + $0x28] sm:$0xff]
        %v312 = vld [vmem:[#allocation5 + $0x30] sm:$0xff]
        %v313 = vld [vmem:[#allocation5 + $0x38] sm:$0xff]
        %v314 = vld [vmem:[#allocation5 + $0x40] sm:$0xff]
        %v315 = vld [vmem:[#allocation5 + $0x48] sm:$0xff]
        %v316 = vld [vmem:[#allocation5 + $0x50] sm:$0xff]
        %v317 = vld [vmem:[#allocation5 + $0x58] sm:$0xff]
        %v318 = vld [vmem:[#allocation5 + $0x60] sm:$0xff]
        %v319 = vld [vmem:[#allocation5 + $0x68] sm:$0xff]
        %v320 = vld [vmem:[#allocation5 + $0x70] sm:$0xff]
        %v321 = vld [vmem:[#allocation5 + $0x78] sm:$0xff]
        %v322 = vld [vmem:[#allocation5 + $0x80] sm:$0xff]
        %v323 = vld [vmem:[#allocation5 + $0x88] sm:$0xff]
        %v324 = vld [vmem:[#allocation5 + $0x90] sm:$0xff]
        %v325 = vld [vmem:[#allocation5 + $0x98] sm:$0xff]
        %v326 = vld [vmem:[#allocation5 + $0xa0] sm:$0xff]
        %v327 = vld [vmem:[#allocation5 + $0xa8] sm:$0xff]
        %v328 = vld [vmem:[#allocation5 + $0xb0] sm:$0xff]
        %v329 = vld [vmem:[#allocation5 + $0xb8] sm:$0xff]
        %v330 = vld [vmem:[#allocation5 + $0xc0] sm:$0xff]
        %v331 = vld [vmem:[#allocation5 + $0xc8] sm:$0xff]
        %v332 = vld [vmem:[#allocation5 + $0xd0] sm:$0xff]
        %v333 = vld [vmem:[#allocation5 + $0xd8] sm:$0xff]
        %v334 = vld [vmem:[#allocation5 + $0xe0] sm:$0xff]
        %v335 = vld [vmem:[#allocation5 + $0xe8] sm:$0xff]
        %v336 = vld [vmem:[#allocation5 + $0xf0] sm:$0xff]
        %v337 = vld [vmem:[#allocation5 + $0xf8] sm:$0xff]
        %v338 = vld [vmem:[%s2] sm:$0x3]
        %v340 = vlaneseq
        %v341 = vshrl.u32 %v340, 7
        %v342 = vsub.s32 0, %v341
        %v343 = vrot.slane %v338, %v342
        %v344 = vlaneseq
        %v345 = vshrl.u32 %v344, 7
        %v346 = vsub.s32 1, %v345
        %v347 = vrot.slane %v338, %v346
        %350 = vmatprep.subr.mxu0 %v307
        %351 = vmatpush1.msra.mxu0 %v306
        %352 = vmatprep.subr.mxu0 %v309
        %353 = vmatpush1.msra.mxu0 %v308
        %354 = vmatprep.subr.mxu0 %v311
        %355 = vmatpush1.msra.mxu0 %v310
        %356 = vmatprep.subr.mxu0 %v313
        %357 = vmatpush1.msra.mxu0 %v312
        %358 = vmatprep.subr.mxu0 %v315
        %359 = vmatpush1.msra.mxu0 %v314
        %360 = vmatprep.subr.mxu0 %v317
        %361 = vmatpush1.msra.mxu0 %v316
        %362 = vmatprep.subr.mxu0 %v319
        %363 = vmatpush1.msra.mxu0 %v318
        %364 = vmatprep.subr.mxu0 %v321
        %365 = vmatpush1.msra.mxu0 %v320
        %366 = vmatprep.subr.mxu0 %v323
        %367 = vmatpush1.msra.mxu0 %v322
        %368 = vmatprep.subr.mxu0 %v325
        %369 = vmatpush1.msra.mxu0 %v324
        %370 = vmatprep.subr.mxu0 %v327
        %371 = vmatpush1.msra.mxu0 %v326
        %372 = vmatprep.subr.mxu0 %v329
        %373 = vmatpush1.msra.mxu0 %v328
        %374 = vmatprep.subr.mxu0 %v331
        %375 = vmatpush1.msra.mxu0 %v330
        %376 = vmatprep.subr.mxu0 %v333
        %377 = vmatpush1.msra.mxu0 %v332
        %378 = vmatprep.subr.mxu0 %v335
        %379 = vmatpush1.msra.mxu0 %v334
        %380 = vmatprep.subr.mxu0 %v337
        %381 = vmatpush1.msra.mxu0 %v336
        %382 = vmatprep.subr.mxu0 0.0
        %383 = vmatpush1.msra.mxu0 0.0
        %384 = vmatprep.subr.mxu0 0.0
        %385 = vmatpush1.msra.mxu0 0.0
        %386 = vmatprep.subr.mxu0 0.0
        %387 = vmatpush1.msra.mxu0 0.0
        %388 = vmatprep.subr.mxu0 0.0
        %389 = vmatpush1.msra.mxu0 0.0
        %390 = vmatprep.subr.mxu0 0.0
        %391 = vmatpush1.msra.mxu0 0.0
        %392 = vmatprep.subr.mxu0 0.0
        %393 = vmatpush1.msra.mxu0 0.0
        %394 = vmatprep.subr.mxu0 0.0
        %395 = vmatpush1.msra.mxu0 0.0
        %396 = vmatprep.subr.mxu0 0.0
        %397 = vmatpush1.msra.mxu0 0.0
        %398 = vmatprep.subr.mxu0 0.0
        %399 = vmatpush1.msra.mxu0 0.0
        %400 = vmatprep.subr.mxu0 0.0
        %401 = vmatpush1.msra.mxu0 0.0
        %402 = vmatprep.subr.mxu0 0.0
        %403 = vmatpush1.msra.mxu0 0.0
        %404 = vmatprep.subr.mxu0 0.0
        %405 = vmatpush1.msra.mxu0 0.0
        %406 = vmatprep.subr.mxu0 0.0
        %407 = vmatpush1.msra.mxu0 0.0
        %408 = vmatprep.subr.mxu0 0.0
        %409 = vmatpush1.msra.mxu0 0.0
        %410 = vmatprep.subr.mxu0 0.0
        %411 = vmatpush1.msra.mxu0 0.0
        %412 = vmatprep.subr.mxu0 0.0
        %413 = vmatpush1.msra.mxu0 0.0
        %414 = vmatprep.mubr.f32.mxu0 0.0
        %415 = vmatmul.mubr.f32.gmra.mrb[0].mxu0 %v274
        %v416 = vpop.f32.mrb[0].mxu0
        %v417 = vadd.f32 %v343, %v416
        %v418 = vpop.f32.mrb[0].mxu0
        %v419 = vadd.f32 %v347, %v418
        %420 = vmatprep.mubr.f32.mxu0 0.0
        %421 = vmatmul.mubr.f32.gmra.mrb[0].mxu0 %v275
        %v422 = vpop.f32.mrb[0].mxu0
        %v423 = vadd.f32 %v343, %v422
        %v424 = vpop.f32.mrb[0].mxu0
        %v425 = vadd.f32 %v347, %v424
        %426 = vmatprep.mubr.f32.mxu0 0.0
        %427 = vmatmul.mubr.f32.gmra.mrb[0].mxu0 %v276
        %v428 = vpop.f32.mrb[0].mxu0
        %v429 = vadd.f32 %v343, %v428
        %v430 = vpop.f32.mrb[0].mxu0
        %v431 = vadd.f32 %v347, %v430
        %432 = vmatprep.mubr.f32.mxu0 0.0
        %433 = vmatmul.mubr.f32.gmra.mrb[0].mxu0 %v277
        %v434 = vpop.f32.mrb[0].mxu0
        %v435 = vadd.f32 %v343, %v434
        %v436 = vpop.f32.mrb[0].mxu0
        %v437 = vadd.f32 %v347, %v436
        %438 = vmatprep.mubr.f32.mxu0 0.0
        %439 = vmatmul.mubr.f32.gmra.mrb[0].mxu0 %v278
        %v440 = vpop.f32.mrb[0].mxu0
        %v441 = vadd.f32 %v343, %v440
        %v442 = vpop.f32.mrb[0].mxu0
        %v443 = vadd.f32 %v347, %v442
        %444 = vmatprep.mubr.f32.mxu0 0.0
        %445 = vmatmul.mubr.f32.gmra.mrb[0].mxu0 %v279
        %v446 = vpop.f32.mrb[0].mxu0
        %v447 = vadd.f32 %v343, %v446
        %v448 = vpop.f32.mrb[0].mxu0
        %v449 = vadd.f32 %v347, %v448
        %450 = vmatprep.mubr.f32.mxu0 0.0
        %451 = vmatmul.mubr.f32.gmra.mrb[0].mxu0 %v280
        %v452 = vpop.f32.mrb[0].mxu0
        %v453 = vadd.f32 %v343, %v452
        %v454 = vpop.f32.mrb[0].mxu0
        %v455 = vadd.f32 %v347, %v454
        %456 = vmatprep.mubr.f32.mxu0 0.0
        %457 = vmatmul.mubr.f32.gmra.mrb[0].mxu0 %v281
        %v458 = vpop.f32.mrb[0].mxu0
        %v459 = vadd.f32 %v343, %v458
        %v460 = vpop.f32.mrb[0].mxu0
        %v461 = vadd.f32 %v347, %v460
        %462 = vmatprep.mubr.f32.mxu0 0.0
        %463 = vmatmul.mubr.f32.gmra.mrb[0].mxu0 %v282
        %v464 = vpop.f32.mrb[0].mxu0
        %v465 = vadd.f32 %v343, %v464
        %v466 = vpop.f32.mrb[0].mxu0
        %v467 = vadd.f32 %v347, %v466
        %468 = vmatprep.mubr.f32.mxu0 0.0
        %469 = vmatmul.mubr.f32.gmra.mrb[0].mxu0 %v283
        %v470 = vpop.f32.mrb[0].mxu0
        %v471 = vadd.f32 %v343, %v470
        %v472 = vpop.f32.mrb[0].mxu0
        %v473 = vadd.f32 %v347, %v472
        %474 = vmatprep.mubr.f32.mxu0 0.0
        %475 = vmatmul.mubr.f32.gmra.mrb[0].mxu0 %v284
        %v476 = vpop.f32.mrb[0].mxu0
        %v477 = vadd.f32 %v343, %v476
        %v478 = vpop.f32.mrb[0].mxu0
        %v479 = vadd.f32 %v347, %v478
        %480 = vmatprep.mubr.f32.mxu0 0.0
        %481 = vmatmul.mubr.f32.gmra.mrb[0].mxu0 %v285
        %v482 = vpop.f32.mrb[0].mxu0
        %v483 = vadd.f32 %v343, %v482
        %v484 = vpop.f32.mrb[0].mxu0
        %v485 = vadd.f32 %v347, %v484
        %486 = vmatprep.mubr.f32.mxu0 0.0
        %487 = vmatmul.mubr.f32.gmra.mrb[0].mxu0 %v286
        %v488 = vpop.f32.mrb[0].mxu0
        %v489 = vadd.f32 %v343, %v488
        %v490 = vpop.f32.mrb[0].mxu0
        %v491 = vadd.f32 %v347, %v490
        %492 = vmatprep.mubr.f32.mxu0 0.0
        %493 = vmatmul.mubr.f32.gmra.mrb[0].mxu0 %v287
        %v494 = vpop.f32.mrb[0].mxu0
        %v495 = vadd.f32 %v343, %v494
        %v496 = vpop.f32.mrb[0].mxu0
        %v497 = vadd.f32 %v347, %v496
        %498 = vmatprep.mubr.f32.mxu0 0.0
        %499 = vmatmul.mubr.f32.gmra.mrb[0].mxu0 %v288
        %v500 = vpop.f32.mrb[0].mxu0
        %v501 = vadd.f32 %v343, %v500
        %v502 = vpop.f32.mrb[0].mxu0
        %v503 = vadd.f32 %v347, %v502
        %504 = vmatprep.mubr.f32.mxu0 0.0
        %505 = vmatmul.mubr.f32.gmra.mrb[0].mxu0 %v289
        %v506 = vpop.f32.mrb[0].mxu0
        %v507 = vadd.f32 %v343, %v506
        %v508 = vpop.f32.mrb[0].mxu0
        %v509 = vadd.f32 %v347, %v508
        %510 = vmatprep.mubr.f32.mxu0 0.0
        %511 = vmatmul.mubr.f32.gmra.mrb[0].mxu0 %v290
        %v512 = vpop.f32.mrb[0].mxu0
        %v513 = vadd.f32 %v343, %v512
        %v514 = vpop.f32.mrb[0].mxu0
        %v515 = vadd.f32 %v347, %v514
        %516 = vmatprep.mubr.f32.mxu0 0.0
        %517 = vmatmul.mubr.f32.gmra.mrb[0].mxu0 %v291
        %v518 = vpop.f32.mrb[0].mxu0
        %v519 = vadd.f32 %v343, %v518
        %v520 = vpop.f32.mrb[0].mxu0
        %v521 = vadd.f32 %v347, %v520
        %522 = vmatprep.mubr.f32.mxu0 0.0
        %523 = vmatmul.mubr.f32.gmra.mrb[0].mxu0 %v292
        %v524 = vpop.f32.mrb[0].mxu0
        %v525 = vadd.f32 %v343, %v524
        %v526 = vpop.f32.mrb[0].mxu0
        %v527 = vadd.f32 %v347, %v526
        %528 = vmatprep.mubr.f32.mxu0 0.0
        %529 = vmatmul.mubr.f32.gmra.mrb[0].mxu0 %v293
        %v530 = vpop.f32.mrb[0].mxu0
        %v531 = vadd.f32 %v343, %v530
        %v532 = vpop.f32.mrb[0].mxu0
        %v533 = vadd.f32 %v347, %v532
        %534 = vmatprep.mubr.f32.mxu0 0.0
        %535 = vmatmul.mubr.f32.gmra.mrb[0].mxu0 %v294
        %v536 = vpop.f32.mrb[0].mxu0
        %v537 = vadd.f32 %v343, %v536
        %v538 = vpop.f32.mrb[0].mxu0
        %v539 = vadd.f32 %v347, %v538
        %540 = vmatprep.mubr.f32.mxu0 0.0
        %541 = vmatmul.mubr.f32.gmra.mrb[0].mxu0 %v295
        %v542 = vpop.f32.mrb[0].mxu0
        %v543 = vadd.f32 %v343, %v542
        %v544 = vpop.f32.mrb[0].mxu0
        %v545 = vadd.f32 %v347, %v544
        %546 = vmatprep.mubr.f32.mxu0 0.0
        %547 = vmatmul.mubr.f32.gmra.mrb[0].mxu0 %v296
        %v548 = vpop.f32.mrb[0].mxu0
        %v549 = vadd.f32 %v343, %v548
        %v550 = vpop.f32.mrb[0].mxu0
        %v551 = vadd.f32 %v347, %v550
        %552 = vmatprep.mubr.f32.mxu0 0.0
        %553 = vmatmul.mubr.f32.gmra.mrb[0].mxu0 %v297
        %v554 = vpop.f32.mrb[0].mxu0
        %v555 = vadd.f32 %v343, %v554
        %v556 = vpop.f32.mrb[0].mxu0
        %v557 = vadd.f32 %v347, %v556
        %558 = vmatprep.mubr.f32.mxu0 0.0
        %559 = vmatmul.mubr.f32.gmra.mrb[0].mxu0 %v298
        %v560 = vpop.f32.mrb[0].mxu0
        %v561 = vadd.f32 %v343, %v560
        %v562 = vpop.f32.mrb[0].mxu0
        %v563 = vadd.f32 %v347, %v562
        %564 = vmatprep.mubr.f32.mxu0 0.0
        %565 = vmatmul.mubr.f32.gmra.mrb[0].mxu0 %v299
        %v566 = vpop.f32.mrb[0].mxu0
        %v567 = vadd.f32 %v343, %v566
        %v568 = vpop.f32.mrb[0].mxu0
        %v569 = vadd.f32 %v347, %v568
        %570 = vmatprep.mubr.f32.mxu0 0.0
        %571 = vmatmul.mubr.f32.gmra.mrb[0].mxu0 %v300
        %v572 = vpop.f32.mrb[0].mxu0
        %v573 = vadd.f32 %v343, %v572
        %v574 = vpop.f32.mrb[0].mxu0
        %v575 = vadd.f32 %v347, %v574
        %576 = vmatprep.mubr.f32.mxu0 0.0
        %577 = vmatmul.mubr.f32.gmra.mrb[0].mxu0 %v301
        %v578 = vpop.f32.mrb[0].mxu0
        %v579 = vadd.f32 %v343, %v578
        %v580 = vpop.f32.mrb[0].mxu0
        %v581 = vadd.f32 %v347, %v580
        %582 = vmatprep.mubr.f32.mxu0 0.0
        %583 = vmatmul.mubr.f32.gmra.mrb[0].mxu0 %v302
        %v584 = vpop.f32.mrb[0].mxu0
        %v585 = vadd.f32 %v343, %v584
        %v586 = vpop.f32.mrb[0].mxu0
        %v587 = vadd.f32 %v347, %v586
        %588 = vmatprep.mubr.f32.mxu0 0.0
        %589 = vmatmul.mubr.f32.gmra.mrb[0].mxu0 %v303
        %v590 = vpop.f32.mrb[0].mxu0
        %v591 = vadd.f32 %v343, %v590
        %v592 = vpop.f32.mrb[0].mxu0
        %v593 = vadd.f32 %v347, %v592
        %594 = vmatprep.mubr.f32.mxu0 0.0
        %595 = vmatmul.mubr.f32.gmra.mrb[0].mxu0 %v304
        %v596 = vpop.f32.mrb[0].mxu0
        %v597 = vadd.f32 %v343, %v596
        %v598 = vpop.f32.mrb[0].mxu0
        %v599 = vadd.f32 %v347, %v598
        %600 = vmatprep.mubr.f32.mxu0 0.0
        %601 = vmatmul.mubr.f32.gmra.mrb[0].mxu0 %v305
        %v602 = vpop.f32.mrb[0].mxu0
        %v603 = vadd.f32 %v343, %v602
        %v604 = vpop.f32.mrb[0].mxu0
        %v605 = vadd.f32 %v347, %v604
        %606 = vdwg.mxu0
        %v607 = vmul.f32 %v417, 0.5
        %v608 = vmul.f32 %v419, 0.5
        %v609 = vmul.f32 %v423, 0.5
        %v610 = vmul.f32 %v425, 0.5
        %v611 = vmul.f32 %v429, 0.5
        %v612 = vmul.f32 %v431, 0.5
        %v613 = vmul.f32 %v435, 0.5
        %v614 = vmul.f32 %v437, 0.5
        %v615 = vmul.f32 %v441, 0.5
        %v616 = vmul.f32 %v443, 0.5
        %v617 = vmul.f32 %v447, 0.5
        %v618 = vmul.f32 %v449, 0.5
        %v619 = vmul.f32 %v453, 0.5
        %v620 = vmul.f32 %v455, 0.5
        %v621 = vmul.f32 %v459, 0.5
        %v622 = vmul.f32 %v461, 0.5
        %v623 = vmul.f32 %v465, 0.5
        %v624 = vmul.f32 %v467, 0.5
        %v625 = vmul.f32 %v471, 0.5
        %v626 = vmul.f32 %v473, 0.5
        %v627 = vmul.f32 %v477, 0.5
        %v628 = vmul.f32 %v479, 0.5
        %v629 = vmul.f32 %v483, 0.5
        %v630 = vmul.f32 %v485, 0.5
        %v631 = vmul.f32 %v489, 0.5
        %v632 = vmul.f32 %v491, 0.5
        %v633 = vmul.f32 %v495, 0.5
        %v634 = vmul.f32 %v497, 0.5
        %v635 = vmul.f32 %v501, 0.5
        %v636 = vmul.f32 %v503, 0.5
        %v637 = vmul.f32 %v507, 0.5
        %v638 = vmul.f32 %v509, 0.5
        %v639 = vmul.f32 %v513, 0.5
        %v640 = vmul.f32 %v515, 0.5
        %v641 = vmul.f32 %v519, 0.5
        %v642 = vmul.f32 %v521, 0.5
        %v643 = vmul.f32 %v525, 0.5
        %v644 = vmul.f32 %v527, 0.5
        %v645 = vmul.f32 %v531, 0.5
        %v646 = vmul.f32 %v533, 0.5
        %v647 = vmul.f32 %v537, 0.5
        %v648 = vmul.f32 %v539, 0.5
        %v649 = vmul.f32 %v543, 0.5
        %v650 = vmul.f32 %v545, 0.5
        %v651 = vmul.f32 %v549, 0.5
        %v652 = vmul.f32 %v551, 0.5
        %v653 = vmul.f32 %v555, 0.5
        %v654 = vmul.f32 %v557, 0.5
        %v655 = vmul.f32 %v561, 0.5
        %v656 = vmul.f32 %v563, 0.5
        %v657 = vmul.f32 %v567, 0.5
        %v658 = vmul.f32 %v569, 0.5
        %v659 = vmul.f32 %v573, 0.5
        %v660 = vmul.f32 %v575, 0.5
        %v661 = vmul.f32 %v579, 0.5
        %v662 = vmul.f32 %v581, 0.5
        %v663 = vmul.f32 %v585, 0.5
        %v664 = vmul.f32 %v587, 0.5
        %v665 = vmul.f32 %v591, 0.5
        %v666 = vmul.f32 %v593, 0.5
        %v667 = vmul.f32 %v597, 0.5
        %v668 = vmul.f32 %v599, 0.5
        %v669 = vmul.f32 %v603, 0.5
        %v670 = vmul.f32 %v605, 0.5
        %v671 = vmul.f32 %v417, %v417
        %v672 = vmul.f32 %v419, %v419
        %v673 = vmul.f32 %v423, %v423
        %v674 = vmul.f32 %v425, %v425
        %v675 = vmul.f32 %v429, %v429
        %v676 = vmul.f32 %v431, %v431
        %v677 = vmul.f32 %v435, %v435
        %v678 = vmul.f32 %v437, %v437
        %v679 = vmul.f32 %v441, %v441
        %v680 = vmul.f32 %v443, %v443
        %v681 = vmul.f32 %v447, %v447
        %v682 = vmul.f32 %v449, %v449
        %v683 = vmul.f32 %v453, %v453
        %v684 = vmul.f32 %v455, %v455
        %v685 = vmul.f32 %v459, %v459
        %v686 = vmul.f32 %v461, %v461
        %v687 = vmul.f32 %v465, %v465
        %v688 = vmul.f32 %v467, %v467
        %v689 = vmul.f32 %v471, %v471
        %v690 = vmul.f32 %v473, %v473
        %v691 = vmul.f32 %v477, %v477
        %v692 = vmul.f32 %v479, %v479
        %v693 = vmul.f32 %v483, %v483
        %v694 = vmul.f32 %v485, %v485
        %v695 = vmul.f32 %v489, %v489
        %v696 = vmul.f32 %v491, %v491
        %v697 = vmul.f32 %v495, %v495
        %v698 = vmul.f32 %v497, %v497
        %v699 = vmul.f32 %v501, %v501
        %v700 = vmul.f32 %v503, %v503
        %v701 = vmul.f32 %v507, %v507
        %v702 = vmul.f32 %v509, %v509
        %v703 = vmul.f32 %v513, %v513
        %v704 = vmul.f32 %v515, %v515
        %v705 = vmul.f32 %v519, %v519
        %v706 = vmul.f32 %v521, %v521
        %v707 = vmul.f32 %v525, %v525
        %v708 = vmul.f32 %v527, %v527
        %v709 = vmul.f32 %v531, %v531
        %v710 = vmul.f32 %v533, %v533
        %v711 = vmul.f32 %v537, %v537
        %v712 = vmul.f32 %v539, %v539
        %v713 = vmul.f32 %v543, %v543
        %v714 = vmul.f32 %v545, %v545
        %v715 = vmul.f32 %v549, %v549
        %v716 = vmul.f32 %v551, %v551
        %v717 = vmul.f32 %v555, %v555
        %v718 = vmul.f32 %v557, %v557
        %v719 = vmul.f32 %v561, %v561
        %v720 = vmul.f32 %v563, %v563
        %v721 = vmul.f32 %v567, %v567
        %v722 = vmul.f32 %v569, %v569
        %v723 = vmul.f32 %v573, %v573
        %v724 = vmul.f32 %v575, %v575
        %v725 = vmul.f32 %v579, %v579
        %v726 = vmul.f32 %v581, %v581
        %v727 = vmul.f32 %v585, %v585
        %v728 = vmul.f32 %v587, %v587
        %v729 = vmul.f32 %v591, %v591
        %v730 = vmul.f32 %v593, %v593
        %v731 = vmul.f32 %v597, %v597
        %v732 = vmul.f32 %v599, %v599
        %v733 = vmul.f32 %v603, %v603
        %v734 = vmul.f32 %v605, %v605
        %v735 = vmul.f32 %v671, %v417
        %v736 = vmul.f32 %v672, %v419
        %v737 = vmul.f32 %v673, %v423
        %v738 = vmul.f32 %v674, %v425
        %v739 = vmul.f32 %v675, %v429
        %v740 = vmul.f32 %v676, %v431
        %v741 = vmul.f32 %v677, %v435
        %v742 = vmul.f32 %v678, %v437
        %v743 = vmul.f32 %v679, %v441
        %v744 = vmul.f32 %v680, %v443
        %v745 = vmul.f32 %v681, %v447
        %v746 = vmul.f32 %v682, %v449
        %v747 = vmul.f32 %v683, %v453
        %v748 = vmul.f32 %v684, %v455
        %v749 = vmul.f32 %v685, %v459
        %v750 = vmul.f32 %v686, %v461
        %v751 = vmul.f32 %v687, %v465
        %v752 = vmul.f32 %v688, %v467
        %v753 = vmul.f32 %v689, %v471
        %v754 = vmul.f32 %v690, %v473
        %v755 = vmul.f32 %v691, %v477
        %v756 = vmul.f32 %v692, %v479
        %v757 = vmul.f32 %v693, %v483
        %v758 = vmul.f32 %v694, %v485
        %v759 = vmul.f32 %v695, %v489
        %v760 = vmul.f32 %v696, %v491
        %v761 = vmul.f32 %v697, %v495
        %v762 = vmul.f32 %v698, %v497
        %v763 = vmul.f32 %v699, %v501
        %v764 = vmul.f32 %v700, %v503
        %v765 = vmul.f32 %v701, %v507
        %v766 = vmul.f32 %v702, %v509
        %v767 = vmul.f32 %v703, %v513
        %v768 = vmul.f32 %v704, %v515
        %v769 = vmul.f32 %v705, %v519
        %v770 = vmul.f32 %v706, %v521
        %v771 = vmul.f32 %v707, %v525
        %v772 = vmul.f32 %v708, %v527
        %v773 = vmul.f32 %v709, %v531
        %v774 = vmul.f32 %v710, %v533
        %v775 = vmul.f32 %v711, %v537
        %v776 = vmul.f32 %v712, %v539
        %v777 = vmul.f32 %v713, %v543
        %v778 = vmul.f32 %v714, %v545
        %v779 = vmul.f32 %v715, %v549
        %v780 = vmul.f32 %v716, %v551
        %v781 = vmul.f32 %v717, %v555
        %v782 = vmul.f32 %v718, %v557
        %v783 = vmul.f32 %v719, %v561
        %v784 = vmul.f32 %v720, %v563
        %v785 = vmul.f32 %v721, %v567
        %v786 = vmul.f32 %v722, %v569
        %v787 = vmul.f32 %v723, %v573
        %v788 = vmul.f32 %v724, %v575
        %v789 = vmul.f32 %v725, %v579
        %v790 = vmul.f32 %v726, %v581
        %v791 = vmul.f32 %v727, %v585
        %v792 = vmul.f32 %v728, %v587
        %v793 = vmul.f32 %v729, %v591
        %v794 = vmul.f32 %v730, %v593
        %v795 = vmul.f32 %v731, %v597
        %v796 = vmul.f32 %v732, %v599
        %v797 = vmul.f32 %v733, %v603
        %v798 = vmul.f32 %v734, %v605
        %v799 = vmul.f32 %v735, 0.044715
        %v800 = vmul.f32 %v736, 0.044715
        %v801 = vmul.f32 %v737, 0.044715
        %v802 = vmul.f32 %v738, 0.044715
        %v803 = vmul.f32 %v739, 0.044715
        %v804 = vmul.f32 %v740, 0.044715
        %v805 = vmul.f32 %v741, 0.044715
        %v806 = vmul.f32 %v742, 0.044715
        %v807 = vmul.f32 %v743, 0.044715
        %v808 = vmul.f32 %v744, 0.044715
        %v809 = vmul.f32 %v745, 0.044715
        %v810 = vmul.f32 %v746, 0.044715
        %v811 = vmul.f32 %v747, 0.044715
        %v812 = vmul.f32 %v748, 0.044715
        %v813 = vmul.f32 %v749, 0.044715
        %v814 = vmul.f32 %v750, 0.044715
        %v815 = vmul.f32 %v751, 0.044715
        %v816 = vmul.f32 %v752, 0.044715
        %v817 = vmul.f32 %v753, 0.044715
        %v818 = vmul.f32 %v754, 0.044715
        %v819 = vmul.f32 %v755, 0.044715
        %v820 = vmul.f32 %v756, 0.044715
        %v821 = vmul.f32 %v757, 0.044715
        %v822 = vmul.f32 %v758, 0.044715
        %v823 = vmul.f32 %v759, 0.044715
        %v824 = vmul.f32 %v760, 0.044715
        %v825 = vmul.f32 %v761, 0.044715
        %v826 = vmul.f32 %v762, 0.044715
        %v827 = vmul.f32 %v763, 0.044715
        %v828 = vmul.f32 %v764, 0.044715
        %v829 = vmul.f32 %v765, 0.044715
        %v830 = vmul.f32 %v766, 0.044715
        %v831 = vmul.f32 %v767, 0.044715
        %v832 = vmul.f32 %v768, 0.044715
        %v833 = vmul.f32 %v769, 0.044715
        %v834 = vmul.f32 %v770, 0.044715
        %v835 = vmul.f32 %v771, 0.044715
        %v836 = vmul.f32 %v772, 0.044715
        %v837 = vmul.f32 %v773, 0.044715
        %v838 = vmul.f32 %v774, 0.044715
        %v839 = vmul.f32 %v775, 0.044715
        %v840 = vmul.f32 %v776, 0.044715
        %v841 = vmul.f32 %v777, 0.044715
        %v842 = vmul.f32 %v778, 0.044715
        %v843 = vmul.f32 %v779, 0.044715
        %v844 = vmul.f32 %v780, 0.044715
        %v845 = vmul.f32 %v781, 0.044715
        %v846 = vmul.f32 %v782, 0.044715
        %v847 = vmul.f32 %v783, 0.044715
        %v848 = vmul.f32 %v784, 0.044715
        %v849 = vmul.f32 %v785, 0.044715
        %v850 = vmul.f32 %v786, 0.044715
        %v851 = vmul.f32 %v787, 0.044715
        %v852 = vmul.f32 %v788, 0.044715
        %v853 = vmul.f32 %v789, 0.044715
        %v854 = vmul.f32 %v790, 0.044715
        %v855 = vmul.f32 %v791, 0.044715
        %v856 = vmul.f32 %v792, 0.044715
        %v857 = vmul.f32 %v793, 0.044715
        %v858 = vmul.f32 %v794, 0.044715
        %v859 = vmul.f32 %v795, 0.044715
        %v860 = vmul.f32 %v796, 0.044715
        %v861 = vmul.f32 %v797, 0.044715
        %v862 = vmul.f32 %v798, 0.044715
        %v863 = vadd.f32 %v417, %v799
        %v864 = vadd.f32 %v419, %v800
        %v865 = vadd.f32 %v423, %v801
        %v866 = vadd.f32 %v425, %v802
        %v867 = vadd.f32 %v429, %v803
        %v868 = vadd.f32 %v431, %v804
        %v869 = vadd.f32 %v435, %v805
        %v870 = vadd.f32 %v437, %v806
        %v871 = vadd.f32 %v441, %v807
        %v872 = vadd.f32 %v443, %v808
        %v873 = vadd.f32 %v447, %v809
        %v874 = vadd.f32 %v449, %v810
        %v875 = vadd.f32 %v453, %v811
        %v876 = vadd.f32 %v455, %v812
        %v877 = vadd.f32 %v459, %v813
        %v878 = vadd.f32 %v461, %v814
        %v879 = vadd.f32 %v465, %v815
        %v880 = vadd.f32 %v467, %v816
        %v881 = vadd.f32 %v471, %v817
        %v882 = vadd.f32 %v473, %v818
        %v883 = vadd.f32 %v477, %v819
        %v884 = vadd.f32 %v479, %v820
        %v885 = vadd.f32 %v483, %v821
        %v886 = vadd.f32 %v485, %v822
        %v887 = vadd.f32 %v489, %v823
        %v888 = vadd.f32 %v491, %v824
        %v889 = vadd.f32 %v495, %v825
        %v890 = vadd.f32 %v497, %v826
        %v891 = vadd.f32 %v501, %v827
        %v892 = vadd.f32 %v503, %v828
        %v893 = vadd.f32 %v507, %v829
        %v894 = vadd.f32 %v509, %v830
        %v895 = vadd.f32 %v513, %v831
        %v896 = vadd.f32 %v515, %v832
        %v897 = vadd.f32 %v519, %v833
        %v898 = vadd.f32 %v521, %v834
        %v899 = vadd.f32 %v525, %v835
        %v900 = vadd.f32 %v527, %v836
        %v901 = vadd.f32 %v531, %v837
        %v902 = vadd.f32 %v533, %v838
        %v903 = vadd.f32 %v537, %v839
        %v904 = vadd.f32 %v539, %v840
        %v905 = vadd.f32 %v543, %v841
        %v906 = vadd.f32 %v545, %v842
        %v907 = vadd.f32 %v549, %v843
        %v908 = vadd.f32 %v551, %v844
        %v909 = vadd.f32 %v555, %v845
        %v910 = vadd.f32 %v557, %v846
        %v911 = vadd.f32 %v561, %v847
        %v912 = vadd.f32 %v563, %v848
        %v913 = vadd.f32 %v567, %v849
        %v914 = vadd.f32 %v569, %v850
        %v915 = vadd.f32 %v573, %v851
        %v916 = vadd.f32 %v575, %v852
        %v917 = vadd.f32 %v579, %v853
        %v918 = vadd.f32 %v581, %v854
        %v919 = vadd.f32 %v585, %v855
        %v920 = vadd.f32 %v587, %v856
        %v921 = vadd.f32 %v591, %v857
        %v922 = vadd.f32 %v593, %v858
        %v923 = vadd.f32 %v597, %v859
        %v924 = vadd.f32 %v599, %v860
        %v925 = vadd.f32 %v603, %v861
        %v926 = vadd.f32 %v605, %v862
        %v927 = vmul.f32 %v863, 0.7978846
        %v928 = vmul.f32 %v864, 0.7978846
        %v929 = vmul.f32 %v865, 0.7978846
        %v930 = vmul.f32 %v866, 0.7978846
        %v931 = vmul.f32 %v867, 0.7978846
        %v932 = vmul.f32 %v868, 0.7978846
        %v933 = vmul.f32 %v869, 0.7978846
        %v934 = vmul.f32 %v870, 0.7978846
        %v935 = vmul.f32 %v871, 0.7978846
        %v936 = vmul.f32 %v872, 0.7978846
        %v937 = vmul.f32 %v873, 0.7978846
        %v938 = vmul.f32 %v874, 0.7978846
        %v939 = vmul.f32 %v875, 0.7978846
        %v940 = vmul.f32 %v876, 0.7978846
        %v941 = vmul.f32 %v877, 0.7978846
        %v942 = vmul.f32 %v878, 0.7978846
        %v943 = vmul.f32 %v879, 0.7978846
        %v944 = vmul.f32 %v880, 0.7978846
        %v945 = vmul.f32 %v881, 0.7978846
        %v946 = vmul.f32 %v882, 0.7978846
        %v947 = vmul.f32 %v883, 0.7978846
        %v948 = vmul.f32 %v884, 0.7978846
        %v949 = vmul.f32 %v885, 0.7978846
        %v950 = vmul.f32 %v886, 0.7978846
        %v951 = vmul.f32 %v887, 0.7978846
        %v952 = vmul.f32 %v888, 0.7978846
        %v953 = vmul.f32 %v889, 0.7978846
        %v954 = vmul.f32 %v890, 0.7978846
        %v955 = vmul.f32 %v891, 0.7978846
        %v956 = vmul.f32 %v892, 0.7978846
        %v957 = vmul.f32 %v893, 0.7978846
        %v958 = vmul.f32 %v894, 0.7978846
        %v959 = vmul.f32 %v895, 0.7978846
        %v960 = vmul.f32 %v896, 0.7978846
        %v961 = vmul.f32 %v897, 0.7978846
        %v962 = vmul.f32 %v898, 0.7978846
        %v963 = vmul.f32 %v899, 0.7978846
        %v964 = vmul.f32 %v900, 0.7978846
        %v965 = vmul.f32 %v901, 0.7978846
        %v966 = vmul.f32 %v902, 0.7978846
        %v967 = vmul.f32 %v903, 0.7978846
        %v968 = vmul.f32 %v904, 0.7978846
        %v969 = vmul.f32 %v905, 0.7978846
        %v970 = vmul.f32 %v906, 0.7978846
        %v971 = vmul.f32 %v907, 0.7978846
        %v972 = vmul.f32 %v908, 0.7978846
        %v973 = vmul.f32 %v909, 0.7978846
        %v974 = vmul.f32 %v910, 0.7978846
        %v975 = vmul.f32 %v911, 0.7978846
        %v976 = vmul.f32 %v912, 0.7978846
        %v977 = vmul.f32 %v913, 0.7978846
        %v978 = vmul.f32 %v914, 0.7978846
        %v979 = vmul.f32 %v915, 0.7978846
        %v980 = vmul.f32 %v916, 0.7978846
        %v981 = vmul.f32 %v917, 0.7978846
        %v982 = vmul.f32 %v918, 0.7978846
        %v983 = vmul.f32 %v919, 0.7978846
        %v984 = vmul.f32 %v920, 0.7978846
        %v985 = vmul.f32 %v921, 0.7978846
        %v986 = vmul.f32 %v922, 0.7978846
        %v987 = vmul.f32 %v923, 0.7978846
        %v988 = vmul.f32 %v924, 0.7978846
        %v989 = vmul.f32 %v925, 0.7978846
        %v990 = vmul.f32 %v926, 0.7978846
        %v991 = vtanh.pop %v927
        %v992 = vtanh.pop %v928
        %v993 = vtanh.pop %v929
        %v994 = vtanh.pop %v930
        %v995 = vtanh.pop %v931
        %v996 = vtanh.pop %v932
        %v997 = vtanh.pop %v933
        %v998 = vtanh.pop %v934
        %v999 = vtanh.pop %v935
        %v1000 = vtanh.pop %v936
        %v1001 = vtanh.pop %v937
        %v1002 = vtanh.pop %v938
        %v1003 = vtanh.pop %v939
        %v1004 = vtanh.pop %v940
        %v1005 = vtanh.pop %v941
        %v1006 = vtanh.pop %v942
        %v1007 = vtanh.pop %v943
        %v1008 = vtanh.pop %v944
        %v1009 = vtanh.pop %v945
        %v1010 = vtanh.pop %v946
        %v1011 = vtanh.pop %v947
        %v1012 = vtanh.pop %v948
        %v1013 = vtanh.pop %v949
        %v1014 = vtanh.pop %v950
        %v1015 = vtanh.pop %v951
        %v1016 = vtanh.pop %v952
        %v1017 = vtanh.pop %v953
        %v1018 = vtanh.pop %v954
        %v1019 = vtanh.pop %v955
        %v1020 = vtanh.pop %v956
        %v1021 = vtanh.pop %v957
        %v1022 = vtanh.pop %v958
        %v1023 = vtanh.pop %v959
        %v1024 = vtanh.pop %v960
        %v1025 = vtanh.pop %v961
        %v1026 = vtanh.pop %v962
        %v1027 = vtanh.pop %v963
        %v1028 = vtanh.pop %v964
        %v1029 = vtanh.pop %v965
        %v1030 = vtanh.pop %v966
        %v1031 = vtanh.pop %v967
        %v1032 = vtanh.pop %v968
        %v1033 = vtanh.pop %v969
        %v1034 = vtanh.pop %v970
        %v1035 = vtanh.pop %v971
        %v1036 = vtanh.pop %v972
        %v1037 = vtanh.pop %v973
        %v1038 = vtanh.pop %v974
        %v1039 = vtanh.pop %v975
        %v1040 = vtanh.pop %v976
        %v1041 = vtanh.pop %v977
        %v1042 = vtanh.pop %v978
        %v1043 = vtanh.pop %v979
        %v1044 = vtanh.pop %v980
        %v1045 = vtanh.pop %v981
        %v1046 = vtanh.pop %v982
        %v1047 = vtanh.pop %v983
        %v1048 = vtanh.pop %v984
        %v1049 = vtanh.pop %v985
        %v1050 = vtanh.pop %v986
        %v1051 = vtanh.pop %v987
        %v1052 = vtanh.pop %v988
        %v1053 = vtanh.pop %v989
        %v1054 = vtanh.pop %v990
        %v1055 = vadd.f32 %v991, 1.0
        %v1056 = vadd.f32 %v992, 1.0
        %v1057 = vadd.f32 %v993, 1.0
        %v1058 = vadd.f32 %v994, 1.0
        %v1059 = vadd.f32 %v995, 1.0
        %v1060 = vadd.f32 %v996, 1.0
        %v1061 = vadd.f32 %v997, 1.0
        %v1062 = vadd.f32 %v998, 1.0
        %v1063 = vadd.f32 %v999, 1.0
        %v1064 = vadd.f32 %v1000, 1.0
        %v1065 = vadd.f32 %v1001, 1.0
        %v1066 = vadd.f32 %v1002, 1.0
        %v1067 = vadd.f32 %v1003, 1.0
        %v1068 = vadd.f32 %v1004, 1.0
        %v1069 = vadd.f32 %v1005, 1.0
        %v1070 = vadd.f32 %v1006, 1.0
        %v1071 = vadd.f32 %v1007, 1.0
        %v1072 = vadd.f32 %v1008, 1.0
        %v1073 = vadd.f32 %v1009, 1.0
        %v1074 = vadd.f32 %v1010, 1.0
        %v1075 = vadd.f32 %v1011, 1.0
        %v1076 = vadd.f32 %v1012, 1.0
        %v1077 = vadd.f32 %v1013, 1.0
        %v1078 = vadd.f32 %v1014, 1.0
        %v1079 = vadd.f32 %v1015, 1.0
        %v1080 = vadd.f32 %v1016, 1.0
        %v1081 = vadd.f32 %v1017, 1.0
        %v1082 = vadd.f32 %v1018, 1.0
        %v1083 = vadd.f32 %v1019, 1.0
        %v1084 = vadd.f32 %v1020, 1.0
        %v1085 = vadd.f32 %v1021, 1.0
        %v1086 = vadd.f32 %v1022, 1.0
        %v1087 = vadd.f32 %v1023, 1.0
        %v1088 = vadd.f32 %v1024, 1.0
        %v1089 = vadd.f32 %v1025, 1.0
        %v1090 = vadd.f32 %v1026, 1.0
        %v1091 = vadd.f32 %v1027, 1.0
        %v1092 = vadd.f32 %v1028, 1.0
        %v1093 = vadd.f32 %v1029, 1.0
        %v1094 = vadd.f32 %v1030, 1.0
        %v1095 = vadd.f32 %v1031, 1.0
        %v1096 = vadd.f32 %v1032, 1.0
        %v1097 = vadd.f32 %v1033, 1.0
        %v1098 = vadd.f32 %v1034, 1.0
        %v1099 = vadd.f32 %v1035, 1.0
        %v1100 = vadd.f32 %v1036, 1.0
        %v1101 = vadd.f32 %v1037, 1.0
        %v1102 = vadd.f32 %v1038, 1.0
        %v1103 = vadd.f32 %v1039, 1.0
        %v1104 = vadd.f32 %v1040, 1.0
        %v1105 = vadd.f32 %v1041, 1.0
        %v1106 = vadd.f32 %v1042, 1.0
        %v1107 = vadd.f32 %v1043, 1.0
        %v1108 = vadd.f32 %v1044, 1.0
        %v1109 = vadd.f32 %v1045, 1.0
        %v1110 = vadd.f32 %v1046, 1.0
        %v1111 = vadd.f32 %v1047, 1.0
        %v1112 = vadd.f32 %v1048, 1.0
        %v1113 = vadd.f32 %v1049, 1.0
        %v1114 = vadd.f32 %v1050, 1.0
        %v1115 = vadd.f32 %v1051, 1.0
        %v1116 = vadd.f32 %v1052, 1.0
        %v1117 = vadd.f32 %v1053, 1.0
        %v1118 = vadd.f32 %v1054, 1.0
        %v1119 = vmul.f32 %v607, %v1055
        %v1120 = vmul.f32 %v608, %v1056
        %v1121 = vmul.f32 %v609, %v1057
        %v1122 = vmul.f32 %v610, %v1058
        %v1123 = vmul.f32 %v611, %v1059
        %v1124 = vmul.f32 %v612, %v1060
        %v1125 = vmul.f32 %v613, %v1061
        %v1126 = vmul.f32 %v614, %v1062
        %v1127 = vmul.f32 %v615, %v1063
        %v1128 = vmul.f32 %v616, %v1064
        %v1129 = vmul.f32 %v617, %v1065
        %v1130 = vmul.f32 %v618, %v1066
        %v1131 = vmul.f32 %v619, %v1067
        %v1132 = vmul.f32 %v620, %v1068
        %v1133 = vmul.f32 %v621, %v1069
        %v1134 = vmul.f32 %v622, %v1070
        %v1135 = vmul.f32 %v623, %v1071
        %v1136 = vmul.f32 %v624, %v1072
        %v1137 = vmul.f32 %v625, %v1073
        %v1138 = vmul.f32 %v626, %v1074
        %v1139 = vmul.f32 %v627, %v1075
        %v1140 = vmul.f32 %v628, %v1076
        %v1141 = vmul.f32 %v629, %v1077
        %v1142 = vmul.f32 %v630, %v1078
        %v1143 = vmul.f32 %v631, %v1079
        %v1144 = vmul.f32 %v632, %v1080
        %v1145 = vmul.f32 %v633, %v1081
        %v1146 = vmul.f32 %v634, %v1082
        %v1147 = vmul.f32 %v635, %v1083
        %v1148 = vmul.f32 %v636, %v1084
        %v1149 = vmul.f32 %v637, %v1085
        %v1150 = vmul.f32 %v638, %v1086
        %v1151 = vmul.f32 %v639, %v1087
        %v1152 = vmul.f32 %v640, %v1088
        %v1153 = vmul.f32 %v641, %v1089
        %v1154 = vmul.f32 %v642, %v1090
        %v1155 = vmul.f32 %v643, %v1091
        %v1156 = vmul.f32 %v644, %v1092
        %v1157 = vmul.f32 %v645, %v1093
        %v1158 = vmul.f32 %v646, %v1094
        %v1159 = vmul.f32 %v647, %v1095
        %v1160 = vmul.f32 %v648, %v1096
        %v1161 = vmul.f32 %v649, %v1097
        %v1162 = vmul.f32 %v650, %v1098
        %v1163 = vmul.f32 %v651, %v1099
        %v1164 = vmul.f32 %v652, %v1100
        %v1165 = vmul.f32 %v653, %v1101
        %v1166 = vmul.f32 %v654, %v1102
        %v1167 = vmul.f32 %v655, %v1103
        %v1168 = vmul.f32 %v656, %v1104
        %v1169 = vmul.f32 %v657, %v1105
        %v1170 = vmul.f32 %v658, %v1106
        %v1171 = vmul.f32 %v659, %v1107
        %v1172 = vmul.f32 %v660, %v1108
        %v1173 = vmul.f32 %v661, %v1109
        %v1174 = vmul.f32 %v662, %v1110
        %v1175 = vmul.f32 %v663, %v1111
        %v1176 = vmul.f32 %v664, %v1112
        %v1177 = vmul.f32 %v665, %v1113
        %v1178 = vmul.f32 %v666, %v1114
        %v1179 = vmul.f32 %v667, %v1115
        %v1180 = vmul.f32 %v668, %v1116
        %v1181 = vmul.f32 %v669, %v1117
        %v1182 = vmul.f32 %v670, %v1118
        %v1183 = vld [vmem:[#allocation7] sm:$0xff]
        %v1184 = vld [vmem:[#allocation7 + $0x8] sm:$0xff]
        %v1185 = vld [vmem:[#allocation7 + $0x10] sm:$0xff]
        %v1186 = vld [vmem:[#allocation7 + $0x18] sm:$0xff]
        %v1187 = vld [vmem:[#allocation7 + $0x20] sm:$0xff]
        %v1188 = vld [vmem:[#allocation7 + $0x28] sm:$0xff]
        %v1189 = vld [vmem:[#allocation7 + $0x30] sm:$0xff]
        %v1190 = vld [vmem:[#allocation7 + $0x38] sm:$0xff]
        %v1191 = vld [vmem:[#allocation7 + $0x40] sm:$0xff]
        %v1192 = vld [vmem:[#allocation7 + $0x48] sm:$0xff]
        %v1193 = vld [vmem:[#allocation7 + $0x50] sm:$0xff]
        %v1194 = vld [vmem:[#allocation7 + $0x58] sm:$0xff]
        %v1195 = vld [vmem:[#allocation7 + $0x60] sm:$0xff]
        %v1196 = vld [vmem:[#allocation7 + $0x68] sm:$0xff]
        %v1197 = vld [vmem:[#allocation7 + $0x70] sm:$0xff]
        %v1198 = vld [vmem:[#allocation7 + $0x78] sm:$0xff]
        %v1199 = vld [vmem:[#allocation7 + $0x80] sm:$0xff]
        %v1200 = vld [vmem:[#allocation7 + $0x88] sm:$0xff]
        %v1201 = vld [vmem:[#allocation7 + $0x90] sm:$0xff]
        %v1202 = vld [vmem:[#allocation7 + $0x98] sm:$0xff]
        %v1203 = vld [vmem:[#allocation7 + $0xa0] sm:$0xff]
        %v1204 = vld [vmem:[#allocation7 + $0xa8] sm:$0xff]
        %v1205 = vld [vmem:[#allocation7 + $0xb0] sm:$0xff]
        %v1206 = vld [vmem:[#allocation7 + $0xb8] sm:$0xff]
        %v1207 = vld [vmem:[#allocation7 + $0xc0] sm:$0xff]
        %v1208 = vld [vmem:[#allocation7 + $0xc8] sm:$0xff]
        %v1209 = vld [vmem:[#allocation7 + $0xd0] sm:$0xff]
        %v1210 = vld [vmem:[#allocation7 + $0xd8] sm:$0xff]
        %v1211 = vld [vmem:[#allocation7 + $0xe0] sm:$0xff]
        %v1212 = vld [vmem:[#allocation7 + $0xe8] sm:$0xff]
        %v1213 = vld [vmem:[#allocation7 + $0xf0] sm:$0xff]
        %v1214 = vld [vmem:[#allocation7 + $0xf8] sm:$0xff]
        %v1215 = vld [vmem:[%s4] sm:$0x1]
        %v1217 = vlaneseq
        %v1218 = vshrl.u32 %v1217, 7
        %v1219 = vsub.s32 0, %v1218
        %v1220 = vrot.slane %v1215, %v1219
        %1222 = vmatprep.subr.mxu0 0.0
        %1223 = vmatpush1.msra.mxu0 %v1183
        %1224 = vmatprep.subr.mxu0 0.0
        %1225 = vmatpush1.msra.mxu0 %v1184
        %1226 = vmatprep.subr.mxu0 0.0
        %1227 = vmatpush1.msra.mxu0 %v1185
        %1228 = vmatprep.subr.mxu0 0.0
        %1229 = vmatpush1.msra.mxu0 %v1186
        %1230 = vmatprep.subr.mxu0 0.0
        %1231 = vmatpush1.msra.mxu0 %v1187
        %1232 = vmatprep.subr.mxu0 0.0
        %1233 = vmatpush1.msra.mxu0 %v1188
        %1234 = vmatprep.subr.mxu0 0.0
        %1235 = vmatpush1.msra.mxu0 %v1189
        %1236 = vmatprep.subr.mxu0 0.0
        %1237 = vmatpush1.msra.mxu0 %v1190
        %1238 = vmatprep.subr.mxu0 0.0
        %1239 = vmatpush1.msra.mxu0 %v1191
        %1240 = vmatprep.subr.mxu0 0.0
        %1241 = vmatpush1.msra.mxu0 %v1192
        %1242 = vmatprep.subr.mxu0 0.0
        %1243 = vmatpush1.msra.mxu0 %v1193
        %1244 = vmatprep.subr.mxu0 0.0
        %1245 = vmatpush1.msra.mxu0 %v1194
        %1246 = vmatprep.subr.mxu0 0.0
        %1247 = vmatpush1.msra.mxu0 %v1195
        %1248 = vmatprep.subr.mxu0 0.0
        %1249 = vmatpush1.msra.mxu0 %v1196
        %1250 = vmatprep.subr.mxu0 0.0
        %1251 = vmatpush1.msra.mxu0 %v1197
        %1252 = vmatprep.subr.mxu0 0.0
        %1253 = vmatpush1.msra.mxu0 %v1198
        %1254 = vmatprep.subr.mxu0 0.0
        %1255 = vmatpush1.msra.mxu0 %v1199
        %1256 = vmatprep.subr.mxu0 0.0
        %1257 = vmatpush1.msra.mxu0 %v1200
        %1258 = vmatprep.subr.mxu0 0.0
        %1259 = vmatpush1.msra.mxu0 %v1201
        %1260 = vmatprep.subr.mxu0 0.0
        %1261 = vmatpush1.msra.mxu0 %v1202
        %1262 = vmatprep.subr.mxu0 0.0
        %1263 = vmatpush1.msra.mxu0 %v1203
        %1264 = vmatprep.subr.mxu0 0.0
        %1265 = vmatpush1.msra.mxu0 %v1204
        %1266 = vmatprep.subr.mxu0 0.0
        %1267 = vmatpush1.msra.mxu0 %v1205
        %1268 = vmatprep.subr.mxu0 0.0
        %1269 = vmatpush1.msra.mxu0 %v1206
        %1270 = vmatprep.subr.mxu0 0.0
        %1271 = vmatpush1.msra.mxu0 %v1207
        %1272 = vmatprep.subr.mxu0 0.0
        %1273 = vmatpush1.msra.mxu0 %v1208
        %1274 = vmatprep.subr.mxu0 0.0
        %1275 = vmatpush1.msra.mxu0 %v1209
        %1276 = vmatprep.subr.mxu0 0.0
        %1277 = vmatpush1.msra.mxu0 %v1210
        %1278 = vmatprep.subr.mxu0 0.0
        %1279 = vmatpush1.msra.mxu0 %v1211
        %1280 = vmatprep.subr.mxu0 0.0
        %1281 = vmatpush1.msra.mxu0 %v1212
        %1282 = vmatprep.subr.mxu0 0.0
        %1283 = vmatpush1.msra.mxu0 %v1213
        %1284 = vmatprep.subr.mxu0 0.0
        %1285 = vmatpush1.msra.mxu0 %v1214
        %1286 = vmatprep.mubr.f32.mxu0 %v1120
        %1287 = vmatmul.mubr.f32.gmra.mrb[0].mxu0 %v1119
        %v1288 = vpop.f32.mrb[0].mxu0
        %v1289 = vadd.f32 %v1220, %v1288
        %v1290 = vpop.f32.mrb[0].mxu0
        %1291 = vmatprep.mubr.f32.mxu0 %v1122
        %1292 = vmatmul.mubr.f32.gmra.mrb[0].mxu0 %v1121
        %v1293 = vpop.f32.mrb[0].mxu0
        %v1294 = vadd.f32 %v1220, %v1293
        %v1295 = vpop.f32.mrb[0].mxu0
        %1296 = vmatprep.mubr.f32.mxu0 %v1124
        %1297 = vmatmul.mubr.f32.gmra.mrb[0].mxu0 %v1123
        %v1298 = vpop.f32.mrb[0].mxu0
        %v1299 = vadd.f32 %v1220, %v1298
        %v1300 = vpop.f32.mrb[0].mxu0
        %1301 = vmatprep.mubr.f32.mxu0 %v1126
        %1302 = vmatmul.mubr.f32.gmra.mrb[0].mxu0 %v1125
        %v1303 = vpop.f32.mrb[0].mxu0
        %v1304 = vadd.f32 %v1220, %v1303
        %v1305 = vpop.f32.mrb[0].mxu0
        %1306 = vmatprep.mubr.f32.mxu0 %v1128
        %1307 = vmatmul.mubr.f32.gmra.mrb[0].mxu0 %v1127
        %v1308 = vpop.f32.mrb[0].mxu0
        %v1309 = vadd.f32 %v1220, %v1308
        %v1310 = vpop.f32.mrb[0].mxu0
        %1311 = vmatprep.mubr.f32.mxu0 %v1130
        %1312 = vmatmul.mubr.f32.gmra.mrb[0].mxu0 %v1129
        %v1313 = vpop.f32.mrb[0].mxu0
        %v1314 = vadd.f32 %v1220, %v1313
        %v1315 = vpop.f32.mrb[0].mxu0
        %1316 = vmatprep.mubr.f32.mxu0 %v1132
        %1317 = vmatmul.mubr.f32.gmra.mrb[0].mxu0 %v1131
        %v1318 = vpop.f32.mrb[0].mxu0
        %v1319 = vadd.f32 %v1220, %v1318
        %v1320 = vpop.f32.mrb[0].mxu0
        %1321 = vmatprep.mubr.f32.mxu0 %v1134
        %1322 = vmatmul.mubr.f32.gmra.mrb[0].mxu0 %v1133
        %v1323 = vpop.f32.mrb[0].mxu0
        %v1324 = vadd.f32 %v1220, %v1323
        %v1325 = vpop.f32.mrb[0].mxu0
        %1326 = vmatprep.mubr.f32.mxu0 %v1136
        %1327 = vmatmul.mubr.f32.gmra.mrb[0].mxu0 %v1135
        %v1328 = vpop.f32.mrb[0].mxu0
        %v1329 = vadd.f32 %v1220, %v1328
        %v1330 = vpop.f32.mrb[0].mxu0
        %1331 = vmatprep.mubr.f32.mxu0 %v1138
        %1332 = vmatmul.mubr.f32.gmra.mrb[0].mxu0 %v1137
        %v1333 = vpop.f32.mrb[0].mxu0
        %v1334 = vadd.f32 %v1220, %v1333
        %v1335 = vpop.f32.mrb[0].mxu0
        %1336 = vmatprep.mubr.f32.mxu0 %v1140
        %1337 = vmatmul.mubr.f32.gmra.mrb[0].mxu0 %v1139
        %v1338 = vpop.f32.mrb[0].mxu0
        %v1339 = vadd.f32 %v1220, %v1338
        %v1340 = vpop.f32.mrb[0].mxu0
        %1341 = vmatprep.mubr.f32.mxu0 %v1142
        %1342 = vmatmul.mubr.f32.gmra.mrb[0].mxu0 %v1141
        %v1343 = vpop.f32.mrb[0].mxu0
        %v1344 = vadd.f32 %v1220, %v1343
        %v1345 = vpop.f32.mrb[0].mxu0
        %1346 = vmatprep.mubr.f32.mxu0 %v1144
        %1347 = vmatmul.mubr.f32.gmra.mrb[0].mxu0 %v1143
        %v1348 = vpop.f32.mrb[0].mxu0
        %v1349 = vadd.f32 %v1220, %v1348
        %v1350 = vpop.f32.mrb[0].mxu0
        %1351 = vmatprep.mubr.f32.mxu0 %v1146
        %1352 = vmatmul.mubr.f32.gmra.mrb[0].mxu0 %v1145
        %v1353 = vpop.f32.mrb[0].mxu0
        %v1354 = vadd.f32 %v1220, %v1353
        %v1355 = vpop.f32.mrb[0].mxu0
        %1356 = vmatprep.mubr.f32.mxu0 %v1148
        %1357 = vmatmul.mubr.f32.gmra.mrb[0].mxu0 %v1147
        %v1358 = vpop.f32.mrb[0].mxu0
        %v1359 = vadd.f32 %v1220, %v1358
        %v1360 = vpop.f32.mrb[0].mxu0
        %1361 = vmatprep.mubr.f32.mxu0 %v1150
        %1362 = vmatmul.mubr.f32.gmra.mrb[0].mxu0 %v1149
        %v1363 = vpop.f32.mrb[0].mxu0
        %v1364 = vadd.f32 %v1220, %v1363
        %v1365 = vpop.f32.mrb[0].mxu0
        %1366 = vmatprep.mubr.f32.mxu0 %v1152
        %1367 = vmatmul.mubr.f32.gmra.mrb[0].mxu0 %v1151
        %v1368 = vpop.f32.mrb[0].mxu0
        %v1369 = vadd.f32 %v1220, %v1368
        %v1370 = vpop.f32.mrb[0].mxu0
        %1371 = vmatprep.mubr.f32.mxu0 %v1154
        %1372 = vmatmul.mubr.f32.gmra.mrb[0].mxu0 %v1153
        %v1373 = vpop.f32.mrb[0].mxu0
        %v1374 = vadd.f32 %v1220, %v1373
        %v1375 = vpop.f32.mrb[0].mxu0
        %1376 = vmatprep.mubr.f32.mxu0 %v1156
        %1377 = vmatmul.mubr.f32.gmra.mrb[0].mxu0 %v1155
        %v1378 = vpop.f32.mrb[0].mxu0
        %v1379 = vadd.f32 %v1220, %v1378
        %v1380 = vpop.f32.mrb[0].mxu0
        %1381 = vmatprep.mubr.f32.mxu0 %v1158
        %1382 = vmatmul.mubr.f32.gmra.mrb[0].mxu0 %v1157
        %v1383 = vpop.f32.mrb[0].mxu0
        %v1384 = vadd.f32 %v1220, %v1383
        %v1385 = vpop.f32.mrb[0].mxu0
        %1386 = vmatprep.mubr.f32.mxu0 %v1160
        %1387 = vmatmul.mubr.f32.gmra.mrb[0].mxu0 %v1159
        %v1388 = vpop.f32.mrb[0].mxu0
        %v1389 = vadd.f32 %v1220, %v1388
        %v1390 = vpop.f32.mrb[0].mxu0
        %1391 = vmatprep.mubr.f32.mxu0 %v1162
        %1392 = vmatmul.mubr.f32.gmra.mrb[0].mxu0 %v1161
        %v1393 = vpop.f32.mrb[0].mxu0
        %v1394 = vadd.f32 %v1220, %v1393
        %v1395 = vpop.f32.mrb[0].mxu0
        %1396 = vmatprep.mubr.f32.mxu0 %v1164
        %1397 = vmatmul.mubr.f32.gmra.mrb[0].mxu0 %v1163
        %v1398 = vpop.f32.mrb[0].mxu0
        %v1399 = vadd.f32 %v1220, %v1398
        %v1400 = vpop.f32.mrb[0].mxu0
        %1401 = vmatprep.mubr.f32.mxu0 %v1166
        %1402 = vmatmul.mubr.f32.gmra.mrb[0].mxu0 %v1165
        %v1403 = vpop.f32.mrb[0].mxu0
        %v1404 = vadd.f32 %v1220, %v1403
        %v1405 = vpop.f32.mrb[0].mxu0
        %1406 = vmatprep.mubr.f32.mxu0 %v1168
        %1407 = vmatmul.mubr.f32.gmra.mrb[0].mxu0 %v1167
        %v1408 = vpop.f32.mrb[0].mxu0
        %v1409 = vadd.f32 %v1220, %v1408
        %v1410 = vpop.f32.mrb[0].mxu0
        %1411 = vmatprep.mubr.f32.mxu0 %v1170
        %1412 = vmatmul.mubr.f32.gmra.mrb[0].mxu0 %v1169
        %v1413 = vpop.f32.mrb[0].mxu0
        %v1414 = vadd.f32 %v1220, %v1413
        %v1415 = vpop.f32.mrb[0].mxu0
        %1416 = vmatprep.mubr.f32.mxu0 %v1172
        %1417 = vmatmul.mubr.f32.gmra.mrb[0].mxu0 %v1171
        %v1418 = vpop.f32.mrb[0].mxu0
        %v1419 = vadd.f32 %v1220, %v1418
        %v1420 = vpop.f32.mrb[0].mxu0
        %1421 = vmatprep.mubr.f32.mxu0 %v1174
        %1422 = vmatmul.mubr.f32.gmra.mrb[0].mxu0 %v1173
        %v1423 = vpop.f32.mrb[0].mxu0
        %v1424 = vadd.f32 %v1220, %v1423
        %v1425 = vpop.f32.mrb[0].mxu0
        %1426 = vmatprep.mubr.f32.mxu0 %v1176
        %1427 = vmatmul.mubr.f32.gmra.mrb[0].mxu0 %v1175
        %v1428 = vpop.f32.mrb[0].mxu0
        %v1429 = vadd.f32 %v1220, %v1428
        %v1430 = vpop.f32.mrb[0].mxu0
        %1431 = vmatprep.mubr.f32.mxu0 %v1178
        %1432 = vmatmul.mubr.f32.gmra.mrb[0].mxu0 %v1177
        %v1433 = vpop.f32.mrb[0].mxu0
        %v1434 = vadd.f32 %v1220, %v1433
        %v1435 = vpop.f32.mrb[0].mxu0
        %1436 = vmatprep.mubr.f32.mxu0 %v1180
        %1437 = vmatmul.mubr.f32.gmra.mrb[0].mxu0 %v1179
        %v1438 = vpop.f32.mrb[0].mxu0
        %v1439 = vadd.f32 %v1220, %v1438
        %v1440 = vpop.f32.mrb[0].mxu0
        %1441 = vmatprep.mubr.f32.mxu0 %v1182
        %1442 = vmatmul.mubr.f32.gmra.mrb[0].mxu0 %v1181
        %v1443 = vpop.f32.mrb[0].mxu0
        %v1444 = vadd.f32 %v1220, %v1443
        %v1445 = vpop.f32.mrb[0].mxu0
        %1446 = vdwg.mxu0
        %1447 = vst [vmem:[%s271] sm:$0xff] %v1289
        %1448 = vst [vmem:[%s271 + $0x8] sm:$0xff] %v1294
        %1449 = vst [vmem:[%s271 + $0x10] sm:$0xff] %v1299
        %1450 = vst [vmem:[%s271 + $0x18] sm:$0xff] %v1304
        %1451 = vst [vmem:[%s271 + $0x20] sm:$0xff] %v1309
        %1452 = vst [vmem:[%s271 + $0x28] sm:$0xff] %v1314
        %1453 = vst [vmem:[%s271 + $0x30] sm:$0xff] %v1319
        %1454 = vst [vmem:[%s271 + $0x38] sm:$0xff] %v1324
        %1455 = vst [vmem:[%s271 + $0x40] sm:$0xff] %v1329
        %1456 = vst [vmem:[%s271 + $0x48] sm:$0xff] %v1334
        %1457 = vst [vmem:[%s271 + $0x50] sm:$0xff] %v1339
        %1458 = vst [vmem:[%s271 + $0x58] sm:$0xff] %v1344
        %1459 = vst [vmem:[%s271 + $0x60] sm:$0xff] %v1349
        %1460 = vst [vmem:[%s271 + $0x68] sm:$0xff] %v1354
        %1461 = vst [vmem:[%s271 + $0x70] sm:$0xff] %v1359
        %1462 = vst [vmem:[%s271 + $0x78] sm:$0xff] %v1364
        %1463 = vst [vmem:[%s271 + $0x80] sm:$0xff] %v1369
        %1464 = vst [vmem:[%s271 + $0x88] sm:$0xff] %v1374
        %1465 = vst [vmem:[%s271 + $0x90] sm:$0xff] %v1379
        %1466 = vst [vmem:[%s271 + $0x98] sm:$0xff] %v1384
        %1467 = vst [vmem:[%s271 + $0xa0] sm:$0xff] %v1389
        %1468 = vst [vmem:[%s271 + $0xa8] sm:$0xff] %v1394
        %1469 = vst [vmem:[%s271 + $0xb0] sm:$0xff] %v1399
        %1470 = vst [vmem:[%s271 + $0xb8] sm:$0xff] %v1404
        %1471 = vst [vmem:[%s271 + $0xc0] sm:$0xff] %v1409
        %1472 = vst [vmem:[%s271 + $0xc8] sm:$0xff] %v1414
        %1473 = vst [vmem:[%s271 + $0xd0] sm:$0xff] %v1419
        %1474 = vst [vmem:[%s271 + $0xd8] sm:$0xff] %v1424
        %1475 = vst [vmem:[%s271 + $0xe0] sm:$0xff] %v1429
        %1476 = vst [vmem:[%s271 + $0xe8] sm:$0xff] %v1434
        %1477 = vst [vmem:[%s271 + $0xf0] sm:$0xff] %v1439
        %1478 = vst [vmem:[%s271 + $0xf8] sm:$0xff] %v1444
        %s1479 = sand.u32 %s141, 1
        %s1480 = scalar_lea.sflag [#allocation4], %s1479
        %s1481 = sand.u32 %s141, 1
        %s1482 = smul.addr %s1481, 256
        %s1483 = scalar_lea.vmem [#allocation8], %s1482
        // Predicated region
        $region53: #{tpu_custom_call.1} parent=39 // pred_check
          %p1484 = pneg %p151
        $region54: #{tpu_custom_call.1} parent=39 // pred_check_branch
          %1486 = sbr.rel (%p1484) target = $region56
        $region55: #{tpu_custom_call.1} parent=39 // pred_region
          %s1487 = smul.u32 32, %s23
          %s1489 = ssub.s32 4096, 4096
          %1490 = vsyncadd %s1480, %s1489
          %s1491 = smul.addr %s1487, 128
          %s1492 = scalar_lea.hbm %s5, %s1491
          %s1493 = sshll.u32 %s1483, 4
          %s1494 = int_to_ptr.vmem [resolvable:$true] %s1493
          %1499 = dma.vmem_to_hbm [thread:$0]  %s1494, 4096, %s1492, %s1480, 128, 128, 8
        $region56: #{tpu_custom_call.1} parent=39 // pred_fallthru
          _
      $region40: #{tpu_custom_call.1} parent=5 // pred_fallthru
        _
      %p1500 = scmp.le.s32.totalorder 2, %s18
      // Predicated region
      $region57: #{tpu_custom_call.1} parent=5 // pred_check
        %p1501 = pneg %p1500
      $region58: #{tpu_custom_call.1} parent=5 // pred_check_branch
        %1503 = sbr.rel (%p1501) target = $region60
      $region59: #{tpu_custom_call.1} parent=5 // pred_region
        %s1504 = ssub.s32 %s18, 2
        // Predicated region
        $region61: #{tpu_custom_call.1} parent=59 // pred_check
          %p1505 = pneg %p157
        $region62: #{tpu_custom_call.1} parent=59 // pred_check_branch
          %1507 = sbr.rel (%p1505) target = $region64
        $region63: #{tpu_custom_call.1} parent=59 // pred_region
          %s1508 = sand.u32 %s142, 1
          %s1509 = scalar_lea.sflag [#allocation4], %s1508
          %s1510 = sand.u32 %s142, 1
          %s1511 = smul.addr %s1510, 256
          %s1512 = scalar_lea.vmem [#allocation8], %s1511
          %1513 = dma.done %s1509, 4096
        $region64: #{tpu_custom_call.1} parent=59 // pred_fallthru
          _
      $region60: #{tpu_custom_call.1} parent=5 // pred_fallthru
        _
    $region6: #{tpu_custom_call.1} parent=1 // loop_footer
      %s22 = sadd.s32 1, %s18
    $region7: #{tpu_custom_call.1} parent=1 // loop_footer_branch
      %17 = sbr.rel target = $region3
    $region8: #{tpu_custom_call.1} parent=1 // loop_exit
      _
    %1514 = vsyncpa [#allocation3], 1
    %s1515 = scalar_lea.sflag [#allocation3], 1
    %1516 = vsyncpa %s1515, 1
    %1517 = vsyncpa [#allocation6], 1
    %1518 = vsyncpa [#allocation4], 1
    %s1519 = scalar_lea.sflag [#allocation4], 1
    %1520 = vsyncpa %s1519, 1

</llo_original>
